<compile_context>
chip_gen: v5e
topology: v5e:2x2
jax: 0.10.0
libtpu: 0.0.40
codegen_flags: <defaults>
</compile_context>

<pallas_src>
import functools

import jax
import jax.numpy as jnp
from jax.experimental import pallas as pl
from jax.experimental.pallas import tpu as pltpu

_VMEM_LIMIT = 32 * 1024 * 1024


def _round_up(x, m):
    return (x + m - 1) // m * m


def _multi_tensorcore():
    try:
        return "v7" in jax.devices()[0].device_kind.lower()
    except Exception:
        return False


_MULTI_TC = _multi_tensorcore()


def _cparams(sem):
    return pltpu.CompilerParams(dimension_semantics=sem,
                                vmem_limit_bytes=_VMEM_LIMIT)


def _full_spec(arr):
    nd = arr.ndim
    return pl.BlockSpec(arr.shape, lambda i, _nd=nd: (0,) * _nd)


# ----------------------------------------------------------------------------
# Kernel 1: fused ASPP head.
#   branches: 4 x (taps, 512, 256) weights + scale/bias; projection (4,256,256)
#   out = relu( (sum_i relu(branch_i) @ Wp_i) * sproj + bias_eff )
# ----------------------------------------------------------------------------
def _aspp_kernel(xp_ref,
                 w0, s0, b0, w1, s1, b1, w2, s2, b2, w3, s3, b3,
                 wproj, sproj, bproj, o_ref, *, H, W, P, taps, dils):
    B = xp_ref.shape[0]
    Cin = xp_ref.shape[3]
    M = B * H * W
    HW = H * W

    cache = {}

    def window(r0, c0):
        if (r0, c0) not in cache:
            cache[(r0, c0)] = xp_ref[:, r0:r0 + H, c0:c0 + W, :].reshape(M, Cin)
        return cache[(r0, c0)]

    branch_w = (w0, w1, w2, w3)
    branch_s = (s0, s1, s2, s3)
    branch_b = (b0, b1, b2, b3)

    acc = None
    for bi in range(4):
        bacc = None
        for t, (kh, kw) in enumerate(taps[bi]):
            r0 = P + (kh - 1) * dils[bi]
            c0 = P + (kw - 1) * dils[bi]
            part = jnp.dot(window(r0, c0), branch_w[bi][t],
                           preferred_element_type=jnp.float32)
            bacc = part if bacc is None else bacc + part
        br = jnp.maximum(bacc * branch_s[bi][...] + branch_b[bi][...], 0.0)
        proj = jnp.dot(br.astype(jnp.bfloat16), wproj[bi],
                       preferred_element_type=jnp.float32)
        acc = proj if acc is None else acc + proj

    acc = acc * sproj[...]
    if B == 1:
        o_ref[...] = jnp.maximum(acc + bproj[...], 0.0).astype(o_ref.dtype)
    else:  # per-batch bias rows without materializing an (M,256) bias in HBM
        for nb in range(B):
            y = acc[nb * HW:(nb + 1) * HW, :] + bproj[nb:nb + 1, :]
            o_ref[nb * HW:(nb + 1) * HW, :] = (
                jnp.maximum(y, 0.0).astype(o_ref.dtype))


def aspp_fused(xpad, branches, wproj, sproj, bias_eff, *, H, W, P, taps, dils):
    B = xpad.shape[0]
    M = B * H * W
    args = [xpad]
    for (w, s, b) in branches:
        args += [w, s, b]
    args += [wproj, sproj, bias_eff]
    out = pl.pallas_call(
        functools.partial(_aspp_kernel, H=H, W=W, P=P, taps=taps, dils=dils),
        out_shape=jax.ShapeDtypeStruct((M, 256), jnp.bfloat16),
        grid_spec=pltpu.PrefetchScalarGridSpec(
            num_scalar_prefetch=0,
            grid=(1,),
            in_specs=[_full_spec(a) for a in args],
            out_specs=pl.BlockSpec((M, 256), lambda i: (0, 0)),
        ),
        compiler_params=_cparams(("arbitrary",)),
    )(*args)
    return out.reshape(B, H, W, 256)


# ----------------------------------------------------------------------------
# Kernel 2: ConvTranspose2d(k=3, s=2, p=1, output_padding=1) via 4 sub-pixel
# phases.  With z = zero-stuffed(x) padded (1 top/left, 2 bottom/right) and
# y[i,j] = sum_{kh,kw} w[kh,kw] * z[i+kh, j+kw]:
#   y[2a,  2b ] = w11·x[a,b]
#   y[2a,  2b+1]= w10·x[a,b] + w12·x[a,b+1]
#   y[2a+1,2b ] = w01·x[a,b] + w21·x[a+1,b]
#   y[2a+1,2b+1]= w00·x[a,b] + w02·x[a,b+1] + w20·x[a+1,b] + w22·x[a+1,b+1]
# (x padded with one zero row/col on the bottom/right).
# ----------------------------------------------------------------------------
def _deconv4_kernel(x_ref, w_ref, s_ref, b_ref, o_ref, *, H, W):
    B = x_ref.shape[0]
    Cin = x_ref.shape[3]
    Cout = w_ref.shape[2]
    M = B * H * W
    s = s_ref[...]
    b = b_ref[...]

    def tap(dh, dw):
        return x_ref[:, dh:dh + H, dw:dw + W, :].reshape(M, Cin)

    def wm(kh, kw):
        return w_ref[kh * 3 + kw]

    def mm(a, w):
        return jnp.dot(a, w, preferred_element_type=jnp.float32)

    x00, x01, x10, x11 = tap(0, 0), tap(0, 1), tap(1, 0), tap(1, 1)

    def emit(p, acc):
        y = jnp.maximum(acc * s + b, 0.0)
        o_ref[:, p * Cout:(p + 1) * Cout] = y.astype(o_ref.dtype)

    emit(0, mm(x00, wm(1, 1)))
    emit(1, mm(x00, wm(1, 0)) + mm(x01, wm(1, 2)))
    emit(2, mm(x00, wm(0, 1)) + mm(x10, wm(2, 1)))
    emit(3, mm(x00, wm(0, 0)) + mm(x01, wm(0, 2))
          + mm(x10, wm(2, 0)) + mm(x11, wm(2, 2)))


def conv_transpose3x3_s2(x, w, s, b):
    """x: (B,H,W,C) bf16 -> (B,2H,2W,Cout) bf16, BN scale/bias + ReLU fused."""
    B, H, W, C = x.shape
    Cout = w.shape[2]
    Wq = _round_up(W + 1, 8)
    xp = jnp.pad(x, ((0, 0), (0, 1), (0, Wq - W), (0, 0)))
    M = B * H * W
    y4 = pl.pallas_call(
        functools.partial(_deconv4_kernel, H=H, W=W),
        out_shape=jax.ShapeDtypeStruct((M, 4 * Cout), jnp.bfloat16),
        grid_spec=pltpu.PrefetchScalarGridSpec(
            num_scalar_prefetch=0,
            grid=(1,),
            in_specs=[_full_spec(a) for a in (xp, w, s, b)],
            out_specs=pl.BlockSpec((M, 4 * Cout), lambda i: (0, 0)),
        ),
        compiler_params=_cparams(("arbitrary",)),
    )(xp, w, s, b)
    # interleave phases: (M,4C) -> (B,H,W,2,2,C) -> (B,2H,2W,C)
    y = y4.reshape(B, H, W, 2, 2, Cout)
    y = jnp.transpose(y, (0, 1, 3, 2, 4, 5)).reshape(B, 2 * H, 2 * W, Cout)
    return y


# ----------------------------------------------------------------------------
# Kernel 3: two chained 3x3 convs (pad=1) + BN/ReLU, intermediate kept in a
# halo-padded VMEM scratch (never written to HBM).
# ----------------------------------------------------------------------------
def _conv3x3_x2_kernel(xp_ref, wa, sa, ba, wb, sb, bb, o_ref, buf, *, H, W):
    B = xp_ref.shape[0]
    Cin = xp_ref.shape[3]
    Cmid = wa.shape[2]
    M = B * H * W

    acc = None
    for kh in range(3):
        for kw in range(3):
            xt = xp_ref[:, kh:kh + H, kw:kw + W, :].reshape(M, Cin)
            p = jnp.dot(xt, wa[kh * 3 + kw], preferred_element_type=jnp.float32)
            acc = p if acc is None else acc + p
    y1 = jnp.maximum(acc * sa[...] + ba[...], 0.0).astype(jnp.bfloat16)

    buf[...] = jnp.zeros_like(buf)               # zero halo border for conv2
    buf[:, 1:1 + H, 1:1 + W, :] = y1.reshape(B, H, W, Cmid)

    acc2 = None
    for kh in range(3):
        for kw in range(3):
            xt = buf[:, kh:kh + H, kw:kw + W, :].reshape(M, Cmid)
            p = jnp.dot(xt, wb[kh * 3 + kw], preferred_element_type=jnp.float32)
            acc2 = p if acc2 is None else acc2 + p
    y2 = jnp.maximum(acc2 * sb[...] + bb[...], 0.0)
    o_ref[...] = y2.astype(o_ref.dtype)


def conv3x3_x2_fused(x, p1, p2):
    B, H, W, _ = x.shape
    wa, sa, ba = p1
    wb, sb, bb = p2
    Cmid = wa.shape[2]
    Cout = wb.shape[2]
    Wp = _round_up(W + 2, 8)
    xpad = jnp.pad(x, ((0, 0), (1, 1), (1, Wp - W - 1), (0, 0)))
    M = B * H * W
    args = (xpad, wa, sa, ba, wb, sb, bb)
    out = pl.pallas_call(
        functools.partial(_conv3x3_x2_kernel, H=H, W=W),
        out_shape=jax.ShapeDtypeStruct((M, Cout), jnp.bfloat16),
        grid_spec=pltpu.PrefetchScalarGridSpec(
            num_scalar_prefetch=0,
            grid=(1,),
            in_specs=[_full_spec(a) for a in args],
            out_specs=pl.BlockSpec((M, Cout), lambda i: (0, 0)),
            scratch_shapes=[pltpu.VMEM((B, H + 2, Wp, Cmid), jnp.bfloat16)],
        ),
        compiler_params=_cparams(("arbitrary",)),
    )(*args)
    return out.reshape(B, H, W, Cout)


def upsample_stage(x, dec_p, c1_p, c2_p):
    y = conv_transpose3x3_s2(x, *dec_p)
    return conv3x3_x2_fused(y, c1_p, c2_p)


# ----------------------------------------------------------------------------
# Kernel 4: final 1x1 conv over [x, x_128] without materializing the concat.
# ----------------------------------------------------------------------------
def _final_1x1_kernel(x_ref, r_ref, wa_ref, wb_ref, b_ref, o_ref):
    acc = jnp.dot(x_ref[...], wa_ref[...], preferred_element_type=jnp.float32)
    acc = acc + jnp.dot(r_ref[...], wb_ref[...],
                        preferred_element_type=jnp.float32)
    o_ref[...] = (acc + b_ref[...]).astype(o_ref.dtype)


def final_1x1(x, x128, wa, wb, bias):
    M, K1 = x.shape
    K2 = x128.shape[1]
    Np = wa.shape[1]
    nm = 2 if (_MULTI_TC and M >= 512 and (M // 2) % 8 == 0) else 1
    tm = M // nm
    return pl.pallas_call(
        _final_1x1_kernel,
        out_shape=jax.ShapeDtypeStruct((M, Np), jnp.float32),
        grid_spec=pltpu.PrefetchScalarGridSpec(
            num_scalar_prefetch=0,
            grid=(nm,),
            in_specs=[pl.BlockSpec((tm, K1), lambda i: (i, 0)),
                      pl.BlockSpec((tm, K2), lambda i: (i, 0)),
                      pl.BlockSpec(wa.shape, lambda i: (0, 0)),
                      pl.BlockSpec(wb.shape, lambda i: (0, 0)),
                      pl.BlockSpec(bias.shape, lambda i: (0, 0))],
            out_specs=pl.BlockSpec((tm, Np), lambda i: (i, 0)),
        ),
        compiler_params=_cparams(("parallel",)),
    )(x, x128, wa, wb, bias)


# ----------------------------------------------------------------------------
# Deterministic synthetic parameters, pre-laid-out in kernel dtype/shape.
# ----------------------------------------------------------------------------
def _fold_bn(key, cout, conv_bias):
    kg, kb, km, kv = jax.random.split(key, 4)
    gamma = 1.0 + 0.1 * jax.random.normal(kg, (cout,), jnp.float32)
    beta = 0.05 * jax.random.normal(kb, (cout,), jnp.float32)
    mean = 0.05 * jax.random.normal(km, (cout,), jnp.float32)
    var = 1.0 + 0.1 * jax.random.uniform(kv, (cout,), jnp.float32)
    s = gamma / jnp.sqrt(var + 1e-5)
    b = (conv_bias - mean) * s + beta
    return s.reshape(1, -1), b.reshape(1, -1)


def _mk_conv(key, taps, cin, cout, *, bias=True, dtype=jnp.bfloat16):
    kw_, kb_, kbn = jax.random.split(key, 3)
    fan = taps * cin
    w = jax.random.normal(kw_, (taps, cin, cout), jnp.float32) / jnp.sqrt(float(fan))
    cb = (0.02 * jax.random.normal(kb_, (cout,), jnp.float32) if bias
          else jnp.zeros((cout,), jnp.float32))
    s, b = _fold_bn(kbn, cout, cb)
    return w.astype(dtype), s, b


def make_params(key, num_classes):
    ks = jax.random.split(key, 14)
    p = {}
    p["c1x1_1"] = _mk_conv(ks[0], 1, 512, 256)
    p["c3x3_1"] = _mk_conv(ks[1], 9, 512, 256)
    p["c3x3_2"] = _mk_conv(ks[2], 9, 512, 256)
    p["c3x3_3"] = _mk_conv(ks[3], 9, 512, 256)
    # pooled-branch 1x1 conv: tiny (B,512) GEMV in plain jnp -> keep f32 2-D.
    w2, s2, b2 = _mk_conv(ks[4], 1, 512, 256, dtype=jnp.float32)
    p["c1x1_2"] = (w2[0], s2, b2)
    # conv_1x1_3 (1280 -> 256): 4 branch slices (bf16) + pooled slice (f32).
    kw_, kb_, kbn = jax.random.split(ks[5], 3)
    w3 = jax.random.normal(kw_, (1280, 256), jnp.float32) / jnp.sqrt(1280.0)
    cb3 = 0.02 * jax.random.normal(kb_, (256,), jnp.float32)
    s3, b3 = _fold_bn(kbn, 256, cb3)
    p["c1x1_3"] = (w3[:1024].reshape(4, 256, 256).astype(jnp.bfloat16),
                   w3[1024:], s3, b3)
    # upsample_1 / upsample_2 (concat=False => both take 256 channels).
    p["up1_deconv"] = _mk_conv(ks[6], 9, 256, 256, bias=False)
    p["up1_conv1"] = _mk_conv(ks[7], 9, 256, 256, bias=False)
    p["up1_conv2"] = _mk_conv(ks[8], 9, 256, 256, bias=False)
    p["up2_deconv"] = _mk_conv(ks[9], 9, 256, 256, bias=False)
    p["up2_conv1"] = _mk_conv(ks[10], 9, 256, 256, bias=False)
    p["up2_conv2"] = _mk_conv(ks[11], 9, 256, 256, bias=False)
    # conv_1x1_4: (256+64) -> num_classes, bias, no BN/ReLU.  Classes padded
    # to 128 lanes once here; padded channels are never read.
    ncp = max(128, _round_up(num_classes, 128))
    kw_, kb_ = jax.random.split(ks[12], 2)
    w4 = jax.random.normal(kw_, (320, num_classes), jnp.float32) / jnp.sqrt(320.0)
    b4 = 0.02 * jax.random.normal(kb_, (num_classes,), jnp.float32)
    w4p = jnp.pad(w4, ((0, 0), (0, ncp - num_classes)))
    p["c1x1_4"] = (w4p[:256].astype(jnp.bfloat16),
                   w4p[256:].astype(jnp.bfloat16),
                   jnp.pad(b4, (0, ncp - num_classes)).reshape(1, -1))
    return p


# ----------------------------------------------------------------------------
# Forward pass (DeepLabV3.forward + ASPP.forward + split), concat=False.
# ----------------------------------------------------------------------------
def binarycode_deeplab_forward(params, x_high_nchw, x_128_nchw, num_classes):
    xh = jnp.transpose(x_high_nchw, (0, 2, 3, 1)).astype(jnp.bfloat16)
    x128 = jnp.transpose(x_128_nchw, (0, 2, 3, 1)).astype(jnp.bfloat16)
    B, H, W, _ = xh.shape

    # ---- fused ASPP head ----
    dils = (1, 6, 12, 18)        # branch 0 is the 1x1 conv (center tap only)

    def surviving(d):
        return tuple((kh, kw) for kh in range(3) for kw in range(3)
                     if (kh == 1 or d < H) and (kw == 1 or d < W))

    taps = (((1, 1),),) + tuple(surviving(d) for d in dils[1:])
    live = [dils[i] for i in range(1, 4) if len(taps[i]) > 1]
    P = max(live) if live else 0
    for i in range(1, 4):        # halo must cover every surviving tap offset
        assert len(taps[i]) == 1 or P >= dils[i]
    Wp = _round_up(W + 2 * P, 8)
    xpad = jnp.pad(xh, ((0, 0), (P, P), (P, Wp - W - P), (0, 0)))

    def select_taps(w9, tlist):
        if len(tlist) == 9:
            return w9
        return jnp.stack([w9[kh * 3 + kw] for kh, kw in tlist], axis=0)

    branches = [params["c1x1_1"]]
    for name, i in (("c3x3_1", 1), ("c3x3_2", 2), ("c3x3_3", 3)):
        w9, s, b = params[name]
        branches.append((select_taps(w9, taps[i]), s, b))

    # global-average-pool branch (tiny GEMV) folded into the projection bias.
    w2, s2, b2 = params["c1x1_2"]
    pooled = jnp.mean(xh.astype(jnp.float32), axis=(1, 2))           # (B,512)
    img = jnp.maximum(pooled @ w2 * s2 + b2, 0.0)                    # (B,256)
    wproj, wpool, sproj, bproj = params["c1x1_3"]
    bias_eff = (bproj + (img @ wpool) * sproj).astype(jnp.float32)   # (B,256)

    out = aspp_fused(xpad, branches, wproj, sproj, bias_eff,
                     H=H, W=W, P=P, taps=taps, dils=dils)            # (B,H,W,256)

    # ---- upsample_1 : H/8 -> H/4 ;  upsample_2 : H/4 -> H/2 (concat=False) --
    x = upsample_stage(out, params["up1_deconv"],
                       params["up1_conv1"], params["up1_conv2"])
    x = upsample_stage(x, params["up2_deconv"],
                       params["up2_conv1"], params["up2_conv2"])

    # ---- final 1x1 conv over cat([x, x_128]) without materializing the concat
    B2, Hb, Wb, _ = x.shape
    wa, wb, b4 = params["c1x1_4"]
    logits = final_1x1(x.reshape(B2 * Hb * Wb, 256),
                       x128.reshape(B2 * Hb * Wb, 64), wa, wb, b4)
    logits = logits.reshape(B, Hb, Wb, -1)

    out_nchw = jnp.transpose(logits, (0, 3, 1, 2))          # NHWC -> NCHW
    mask = out_nchw[:, 0:1]
    entire_mask = out_nchw[:, 1:2]
    binary_code = out_nchw[:, 2:num_classes]
    return mask, entire_mask, binary_code


# ----------------------------------------------------------------------------
# Numerical check of the ConvTranspose2d 4-phase decomposition (reviewer ask).
# ----------------------------------------------------------------------------
def _check_deconv_decomposition(params):
    w, s, b = params["up1_deconv"]
    key = jax.random.PRNGKey(42)
    x = jax.random.normal(key, (1, 8, 8, 256), jnp.float32).astype(jnp.bfloat16)
    got = conv_transpose3x3_s2(x, w, s, b).astype(jnp.float32)
    ref = jax.lax.conv_general_dilated(
        x.astype(jnp.float32),
        w.astype(jnp.float32).reshape(3, 3, 256, 256),
        window_strides=(1, 1),
        padding=((1, 2), (1, 2)),
        lhs_dilation=(2, 2),
        rhs_dilation=(1, 1),
        dimension_numbers=("NHWC", "HWIO", "NHWC"),
        precision=jax.lax.Precision.HIGHEST)
    ref = jnp.maximum(ref * s.reshape(1, 1, 1, -1) + b.reshape(1, 1, 1, -1), 0.0)
    err = float(jnp.max(jnp.abs(got - ref)))
    assert err < 0.05, f"deconv phase decomposition mismatch: max|err|={err}"


if __name__ == "__main__":
    binary_code_length = 16
    num_classes = binary_code_length + 1     # divided_number_each_iteration=2

    B = 1
    H8, W8 = 8, 8                             # backbone output stride 8
    Hf, Wf = 4 * H8, 4 * W8                   # final resolution (H/2 of image)

    key = jax.random.PRNGKey(0)
    k_xh, k_x128, k_p = jax.random.split(key, 3)
    x_high_feature = jax.random.normal(k_xh, (B, 512, H8, W8), jnp.float32)
    x_128 = jax.random.normal(k_x128, (B, 64, Hf, Wf), jnp.float32)
    params = make_params(k_p, num_classes)

    _check_deconv_decomposition(params)

    fwd = jax.jit(functools.partial(binarycode_deeplab_forward,
                                    num_classes=num_classes))
    mask, entire_mask, binary_code = fwd(params, x_high_feature, x_128)
    jax.block_until_ready((mask, entire_mask, binary_code))

    assert mask.shape == (B, 1, Hf, Wf)
    assert entire_mask.shape == (B, 1, Hf, Wf)
    assert binary_code.shape == (B, num_classes - 2, Hf, Wf)
    assert bool(jnp.all(jnp.isfinite(mask)))
    assert bool(jnp.all(jnp.isfinite(entire_mask)))
    assert bool(jnp.all(jnp.isfinite(binary_code)))
    print("KERNEL_OK")
</pallas_src>

<mosaic_0001>
module attributes {stable_mosaic.version = 11 : i64} {
  func.func @_deconv4_kernel(%arg0: i32, %arg1: memref<1x9x16x256xbf16, #tpu.memory_space<vmem>>, %arg2: memref<9x256x256xbf16, #tpu.memory_space<vmem>>, %arg3: memref<1x256xf32, #tpu.memory_space<vmem>>, %arg4: memref<1x256xf32, #tpu.memory_space<vmem>>, %arg5: memref<64x1024xbf16, #tpu.memory_space<vmem>>) attributes {dimension_semantics = [#tpu.dimension_semantics<arbitrary>], iteration_bounds = array<i64: 1>, scalar_prefetch = 0 : i64, scratch_operands = 0 : i64, tpu.core_type = #tpu.core_type<tc>, window_params = [{pipeline_mode = #tpu.pipeline_mode<synchronous>, transform_indices = @transform_0, window_bounds = array<i64: 1, 9, 16, 256>}, {pipeline_mode = #tpu.pipeline_mode<synchronous>, transform_indices = @transform_1, window_bounds = array<i64: 9, 256, 256>}, {pipeline_mode = #tpu.pipeline_mode<synchronous>, transform_indices = @transform_2, window_bounds = array<i64: 1, 256>}, {pipeline_mode = #tpu.pipeline_mode<synchronous>, transform_indices = @transform_3, window_bounds = array<i64: 1, 256>}, {pipeline_mode = #tpu.pipeline_mode<synchronous>, transform_indices = @transform_4, window_bounds = array<i64: 64, 1024>}]} {
    %c0 = arith.constant 0 : index
    %c0_0 = arith.constant 0 : index
    %0 = vector.load %arg3[%c0, %c0_0] : memref<1x256xf32, #tpu.memory_space<vmem>>, vector<1x256xf32>
    %c0_1 = arith.constant 0 : index
    %c0_2 = arith.constant 0 : index
    %1 = vector.load %arg4[%c0_1, %c0_2] : memref<1x256xf32, #tpu.memory_space<vmem>>, vector<1x256xf32>
    %c0_3 = arith.constant 0 : index
    %c0_4 = arith.constant 0 : index
    %c0_5 = arith.constant 0 : index
    %c0_6 = arith.constant 0 : index
    %2 = vector.load %arg1[%c0_3, %c0_4, %c0_5, %c0_6] : memref<1x9x16x256xbf16, #tpu.memory_space<vmem>>, vector<1x8x8x256xbf16>
    %3 = vector.shape_cast %2 : vector<1x8x8x256xbf16> to vector<64x256xbf16>
    %c0_7 = arith.constant 0 : index
    %c0_8 = arith.constant 0 : index
    %c1 = arith.constant 1 : index
    %c0_9 = arith.constant 0 : index
    %4 = vector.load %arg1[%c0_7, %c0_8, %c1, %c0_9] : memref<1x9x16x256xbf16, #tpu.memory_space<vmem>>, vector<1x8x8x256xbf16>
    %5 = vector.shape_cast %4 : vector<1x8x8x256xbf16> to vector<64x256xbf16>
    %c0_10 = arith.constant 0 : index
    %c1_11 = arith.constant 1 : index
    %c0_12 = arith.constant 0 : index
    %c0_13 = arith.constant 0 : index
    %6 = vector.load %arg1[%c0_10, %c1_11, %c0_12, %c0_13] : memref<1x9x16x256xbf16, #tpu.memory_space<vmem>>, vector<1x8x8x256xbf16>
    %7 = vector.shape_cast %6 : vector<1x8x8x256xbf16> to vector<64x256xbf16>
    %c0_14 = arith.constant 0 : index
    %c1_15 = arith.constant 1 : index
    %c1_16 = arith.constant 1 : index
    %c0_17 = arith.constant 0 : index
    %8 = vector.load %arg1[%c0_14, %c1_15, %c1_16, %c0_17] : memref<1x9x16x256xbf16, #tpu.memory_space<vmem>>, vector<1x8x8x256xbf16>
    %9 = vector.shape_cast %8 : vector<1x8x8x256xbf16> to vector<64x256xbf16>
    %c4 = arith.constant 4 : index
    %c0_18 = arith.constant 0 : index
    %c0_19 = arith.constant 0 : index
    %10 = vector.load %arg2[%c4, %c0_18, %c0_19] : memref<9x256x256xbf16, #tpu.memory_space<vmem>>, vector<1x256x256xbf16>
    %11 = vector.shape_cast %10 : vector<1x256x256xbf16> to vector<256x256xbf16>
    %cst = arith.constant dense<0.000000e+00> : vector<64x256xf32>
    %12 = tpu.matmul %3, %11, %cst {dimension_numbers = #tpu.dot_dimension_numbers<[1], [0], [0], [1], [0, 0, 1, 1], [], []>} : vector<64x256xbf16>, vector<256x256xbf16>, vector<64x256xf32> -> vector<64x256xf32>
    %13 = vector.broadcast %0 : vector<1x256xf32> to vector<64x256xf32>
    %14 = arith.mulf %12, %13 : vector<64x256xf32>
    %15 = vector.broadcast %1 : vector<1x256xf32> to vector<64x256xf32>
    %16 = arith.addf %14, %15 : vector<64x256xf32>
    %cst_20 = arith.constant 0.000000e+00 : f32
    %17 = vector.broadcast %cst_20 : f32 to vector<64x256xf32>
    %18 = arith.maximumf %16, %17 : vector<64x256xf32>
    %19 = arith.truncf %18 : vector<64x256xf32> to vector<64x256xbf16>
    %c0_21 = arith.constant 0 : index
    %c0_22 = arith.constant 0 : index
    %20 = vector.load %arg5[%c0_21, %c0_22] : memref<64x1024xbf16, #tpu.memory_space<vmem>>, vector<64x256xbf16>
    tpu.vector_store %arg5[%c0_21, %c0_22], %19 {strides = array<i32>} : memref<64x1024xbf16, #tpu.memory_space<vmem>>, vector<64x256xbf16>,
    %c3 = arith.constant 3 : index
    %c0_23 = arith.constant 0 : index
    %c0_24 = arith.constant 0 : index
    %21 = vector.load %arg2[%c3, %c0_23, %c0_24] : memref<9x256x256xbf16, #tpu.memory_space<vmem>>, vector<1x256x256xbf16>
    %22 = vector.shape_cast %21 : vector<1x256x256xbf16> to vector<256x256xbf16>
    %cst_25 = arith.constant dense<0.000000e+00> : vector<64x256xf32>
    %23 = tpu.matmul %3, %22, %cst_25 {dimension_numbers = #tpu.dot_dimension_numbers<[1], [0], [0], [1], [0, 0, 1, 1], [], []>} : vector<64x256xbf16>, vector<256x256xbf16>, vector<64x256xf32> -> vector<64x256xf32>
    %c5 = arith.constant 5 : index
    %c0_26 = arith.constant 0 : index
    %c0_27 = arith.constant 0 : index
    %24 = vector.load %arg2[%c5, %c0_26, %c0_27] : memref<9x256x256xbf16, #tpu.memory_space<vmem>>, vector<1x256x256xbf16>
    %25 = vector.shape_cast %24 : vector<1x256x256xbf16> to vector<256x256xbf16>
    %cst_28 = arith.constant dense<0.000000e+00> : vector<64x256xf32>
    %26 = tpu.matmul %5, %25, %cst_28 {dimension_numbers = #tpu.dot_dimension_numbers<[1], [0], [0], [1], [0, 0, 1, 1], [], []>} : vector<64x256xbf16>, vector<256x256xbf16>, vector<64x256xf32> -> vector<64x256xf32>
    %27 = arith.addf %23, %26 : vector<64x256xf32>
    %28 = vector.broadcast %0 : vector<1x256xf32> to vector<64x256xf32>
    %29 = arith.mulf %27, %28 : vector<64x256xf32>
    %30 = vector.broadcast %1 : vector<1x256xf32> to vector<64x256xf32>
    %31 = arith.addf %29, %30 : vector<64x256xf32>
    %cst_29 = arith.constant 0.000000e+00 : f32
    %32 = vector.broadcast %cst_29 : f32 to vector<64x256xf32>
    %33 = arith.maximumf %31, %32 : vector<64x256xf32>
    %34 = arith.truncf %33 : vector<64x256xf32> to vector<64x256xbf16>
    %c0_30 = arith.constant 0 : index
    %c256 = arith.constant 256 : index
    %35 = vector.load %arg5[%c0_30, %c256] : memref<64x1024xbf16, #tpu.memory_space<vmem>>, vector<64x256xbf16>
    tpu.vector_store %arg5[%c0_30, %c256], %34 {strides = array<i32>} : memref<64x1024xbf16, #tpu.memory_space<vmem>>, vector<64x256xbf16>,
    %c1_31 = arith.constant 1 : index
    %c0_32 = arith.constant 0 : index
    %c0_33 = arith.constant 0 : index
    %36 = vector.load %arg2[%c1_31, %c0_32, %c0_33] : memref<9x256x256xbf16, #tpu.memory_space<vmem>>, vector<1x256x256xbf16>
    %37 = vector.shape_cast %36 : vector<1x256x256xbf16> to vector<256x256xbf16>
    %cst_34 = arith.constant dense<0.000000e+00> : vector<64x256xf32>
    %38 = tpu.matmul %3, %37, %cst_34 {dimension_numbers = #tpu.dot_dimension_numbers<[1], [0], [0], [1], [0, 0, 1, 1], [], []>} : vector<64x256xbf16>, vector<256x256xbf16>, vector<64x256xf32> -> vector<64x256xf32>
    %c7 = arith.constant 7 : index
    %c0_35 = arith.constant 0 : index
    %c0_36 = arith.constant 0 : index
    %39 = vector.load %arg2[%c7, %c0_35, %c0_36] : memref<9x256x256xbf16, #tpu.memory_space<vmem>>, vector<1x256x256xbf16>
    %40 = vector.shape_cast %39 : vector<1x256x256xbf16> to vector<256x256xbf16>
    %cst_37 = arith.constant dense<0.000000e+00> : vector<64x256xf32>
    %41 = tpu.matmul %7, %40, %cst_37 {dimension_numbers = #tpu.dot_dimension_numbers<[1], [0], [0], [1], [0, 0, 1, 1], [], []>} : vector<64x256xbf16>, vector<256x256xbf16>, vector<64x256xf32> -> vector<64x256xf32>
    %42 = arith.addf %38, %41 : vector<64x256xf32>
    %43 = vector.broadcast %0 : vector<1x256xf32> to vector<64x256xf32>
    %44 = arith.mulf %42, %43 : vector<64x256xf32>
    %45 = vector.broadcast %1 : vector<1x256xf32> to vector<64x256xf32>
    %46 = arith.addf %44, %45 : vector<64x256xf32>
    %cst_38 = arith.constant 0.000000e+00 : f32
    %47 = vector.broadcast %cst_38 : f32 to vector<64x256xf32>
    %48 = arith.maximumf %46, %47 : vector<64x256xf32>
    %49 = arith.truncf %48 : vector<64x256xf32> to vector<64x256xbf16>
    %c0_39 = arith.constant 0 : index
    %c512 = arith.constant 512 : index
    %50 = vector.load %arg5[%c0_39, %c512] : memref<64x1024xbf16, #tpu.memory_space<vmem>>, vector<64x256xbf16>
    tpu.vector_store %arg5[%c0_39, %c512], %49 {strides = array<i32>} : memref<64x1024xbf16, #tpu.memory_space<vmem>>, vector<64x256xbf16>,
    %c0_40 = arith.constant 0 : index
    %c0_41 = arith.constant 0 : index
    %c0_42 = arith.constant 0 : index
    %51 = vector.load %arg2[%c0_40, %c0_41, %c0_42] : memref<9x256x256xbf16, #tpu.memory_space<vmem>>, vector<1x256x256xbf16>
    %52 = vector.shape_cast %51 : vector<1x256x256xbf16> to vector<256x256xbf16>
    %cst_43 = arith.constant dense<0.000000e+00> : vector<64x256xf32>
    %53 = tpu.matmul %3, %52, %cst_43 {dimension_numbers = #tpu.dot_dimension_numbers<[1], [0], [0], [1], [0, 0, 1, 1], [], []>} : vector<64x256xbf16>, vector<256x256xbf16>, vector<64x256xf32> -> vector<64x256xf32>
    %c2 = arith.constant 2 : index
    %c0_44 = arith.constant 0 : index
    %c0_45 = arith.constant 0 : index
    %54 = vector.load %arg2[%c2, %c0_44, %c0_45] : memref<9x256x256xbf16, #tpu.memory_space<vmem>>, vector<1x256x256xbf16>
    %55 = vector.shape_cast %54 : vector<1x256x256xbf16> to vector<256x256xbf16>
    %cst_46 = arith.constant dense<0.000000e+00> : vector<64x256xf32>
    %56 = tpu.matmul %5, %55, %cst_46 {dimension_numbers = #tpu.dot_dimension_numbers<[1], [0], [0], [1], [0, 0, 1, 1], [], []>} : vector<64x256xbf16>, vector<256x256xbf16>, vector<64x256xf32> -> vector<64x256xf32>
    %57 = arith.addf %53, %56 : vector<64x256xf32>
    %c6 = arith.constant 6 : index
    %c0_47 = arith.constant 0 : index
    %c0_48 = arith.constant 0 : index
    %58 = vector.load %arg2[%c6, %c0_47, %c0_48] : memref<9x256x256xbf16, #tpu.memory_space<vmem>>, vector<1x256x256xbf16>
    %59 = vector.shape_cast %58 : vector<1x256x256xbf16> to vector<256x256xbf16>
    %cst_49 = arith.constant dense<0.000000e+00> : vector<64x256xf32>
    %60 = tpu.matmul %7, %59, %cst_49 {dimension_numbers = #tpu.dot_dimension_numbers<[1], [0], [0], [1], [0, 0, 1, 1], [], []>} : vector<64x256xbf16>, vector<256x256xbf16>, vector<64x256xf32> -> vector<64x256xf32>
    %61 = arith.addf %57, %60 : vector<64x256xf32>
    %c8 = arith.constant 8 : index
    %c0_50 = arith.constant 0 : index
    %c0_51 = arith.constant 0 : index
    %62 = vector.load %arg2[%c8, %c0_50, %c0_51] : memref<9x256x256xbf16, #tpu.memory_space<vmem>>, vector<1x256x256xbf16>
    %63 = vector.shape_cast %62 : vector<1x256x256xbf16> to vector<256x256xbf16>
    %cst_52 = arith.constant dense<0.000000e+00> : vector<64x256xf32>
    %64 = tpu.matmul %9, %63, %cst_52 {dimension_numbers = #tpu.dot_dimension_numbers<[1], [0], [0], [1], [0, 0, 1, 1], [], []>} : vector<64x256xbf16>, vector<256x256xbf16>, vector<64x256xf32> -> vector<64x256xf32>
    %65 = arith.addf %61, %64 : vector<64x256xf32>
    %66 = vector.broadcast %0 : vector<1x256xf32> to vector<64x256xf32>
    %67 = arith.mulf %65, %66 : vector<64x256xf32>
    %68 = vector.broadcast %1 : vector<1x256xf32> to vector<64x256xf32>
    %69 = arith.addf %67, %68 : vector<64x256xf32>
    %cst_53 = arith.constant 0.000000e+00 : f32
    %70 = vector.broadcast %cst_53 : f32 to vector<64x256xf32>
    %71 = arith.maximumf %69, %70 : vector<64x256xf32>
    %72 = arith.truncf %71 : vector<64x256xf32> to vector<64x256xbf16>
    %c0_54 = arith.constant 0 : index
    %c768 = arith.constant 768 : index
    %73 = vector.load %arg5[%c0_54, %c768] : memref<64x1024xbf16, #tpu.memory_space<vmem>>, vector<64x256xbf16>
    tpu.vector_store %arg5[%c0_54, %c768], %72 {strides = array<i32>} : memref<64x1024xbf16, #tpu.memory_space<vmem>>, vector<64x256xbf16>,
    return
  }
  func.func @transform_0(%arg0: i32) -> (i32, i32, i32, i32) {
    %c0_i32 = arith.constant 0 : i32
    %c0_i32_0 = arith.constant 0 : i32
    %c0_i32_1 = arith.constant 0 : i32
    %c0_i32_2 = arith.constant 0 : i32
    %c0_i32_3 = arith.constant 0 : i32
    return %c0_i32, %c0_i32_0, %c0_i32_1, %c0_i32_2 : i32, i32, i32, i32
  }
  func.func @transform_1(%arg0: i32) -> (i32, i32, i32) {
    %c0_i32 = arith.constant 0 : i32
    %c0_i32_0 = arith.constant 0 : i32
    %c0_i32_1 = arith.constant 0 : i32
    %c0_i32_2 = arith.constant 0 : i32
    return %c0_i32, %c0_i32_0, %c0_i32_1 : i32, i32, i32
  }
  func.func @transform_2(%arg0: i32) -> (i32, i32) {
    %c0_i32 = arith.constant 0 : i32
    %c0_i32_0 = arith.constant 0 : i32
    %c0_i32_1 = arith.constant 0 : i32
    return %c0_i32, %c0_i32_0 : i32, i32
  }
  func.func @transform_3(%arg0: i32) -> (i32, i32) {
    %c0_i32 = arith.constant 0 : i32
    %c0_i32_0 = arith.constant 0 : i32
    %c0_i32_1 = arith.constant 0 : i32
    return %c0_i32, %c0_i32_0 : i32, i32
  }
  func.func @transform_4(%arg0: i32) -> (i32, i32) {
    %c0_i32 = arith.constant 0 : i32
    %c0_i32_0 = arith.constant 0 : i32
    %c0_i32_1 = arith.constant 0 : i32
    return %c0_i32, %c0_i32_0 : i32, i32
  }
}

</mosaic_0001>

<llo_original>
// kernel: tpu_custom_call.1
$region0: #{tpu_custom_call.1}
  #allocation0 [shape = 'u32[]', space=smem, size = 0x4, offset = 0x4, fixed_abs, tag = 'smem constant byte address 0x4 - core index']
  #allocation1 [shape = 'u32[72,128]{1,0:T(1,128)}', space=vmem, size = 0x9000, scoped, tag = 'internal scratch']
  %s0 = inlined_call_operand.hbm [shape: bf16[1,9,16,256], index: 0, kind: input, shape index: {}]
  %s1 = inlined_call_operand.hbm [shape: bf16[9,256,256], index: 1, kind: input, shape index: {}]
  %s2 = inlined_call_operand.hbm [shape: f32[1,256], index: 2, kind: input, shape index: {}]
  %s3 = inlined_call_operand.hbm [shape: f32[1,256], index: 3, kind: input, shape index: {}]
  %s4 = inlined_call_operand.hbm [shape: bf16[64,1024], index: 4, kind: output, shape index: {}]
  %s5 = sld [smem:[#allocation0]]
  $region42: #{tpu_custom_call.1} parent=0
    _
  %s7 = ssub.s32 1, %s5
  %s8 = scalar_select 0, %s7, %s5
  $region1: #{tpu_custom_call.1} parent=0
    #allocation2 [shape = 'u8[73728]{0}', space=vmem, size = 0x12000, scoped, tag = 'input window, operand 0, single buffered']
    #allocation3 [shape = 's32[1]{0}', space=sflag, size = 0x4, scoped, tag = 'scoped memory for tpu_custom_call.1']
    #allocation4 [shape = 's32[1]{0}', space=sflag, size = 0x4, scoped, tag = 'scoped memory for tpu_custom_call.1']
    #allocation5 [shape = 'u8[1179648]{0}', space=vmem, size = 0x120000, scoped, tag = 'input window, operand 1, single buffered']
    #allocation6 [shape = 's32[1]{0}', space=sflag, size = 0x4, scoped, tag = 'scoped memory for tpu_custom_call.1']
    #allocation7 [shape = 'u8[1024]{0}', space=vmem, size = 0x400, scoped, tag = 'input window, operand 2, single buffered']
    #allocation8 [shape = 'u8[1024]{0}', space=vmem, size = 0x400, scoped, tag = 'input window, operand 3, single buffered']
    #allocation9 [shape = 's32[1]{0}', space=sflag, size = 0x4, scoped, tag = 'scoped memory for tpu_custom_call.1']
    #allocation10 [shape = 'u8[131072]{0}', space=vmem, size = 0x20000, scoped, tag = 'output window, operand 0, single buffered']
    %9 = vsyncpa [#allocation3], 0
    %10 = vsyncpa [#allocation6], 0
    %11 = vsyncpa [#allocation9], 0
    %12 = vsyncpa [#allocation4], 0
    // Predicated region
    $region2: #{tpu_custom_call.1} parent=1 // pred_check
      _
    $region3: #{tpu_custom_call.1} parent=1 // pred_check_branch
      %14 = sbr.rel (0) target = $region5
    $region4: #{tpu_custom_call.1} parent=1 // pred_region
      %16 = vsyncadd [#allocation3], 0
      %s17 = sshll.u32 %s0, 4
      %s18 = int_to_ptr.hbm [resolvable:$true] %s17
      %s19 = sshll.u32 [#allocation2], 4
      %s20 = int_to_ptr.vmem [resolvable:$true] %s19
      %25 = dma.hbm_to_vmem [thread:$0]  %s18, 2304, %s20, [#allocation3], 128, 128, 8
    $region5: #{tpu_custom_call.1} parent=1 // pred_fallthru
      _
    // Predicated region
    $region6: #{tpu_custom_call.1} parent=1 // pred_check
      _
    $region7: #{tpu_custom_call.1} parent=1 // pred_check_branch
      %27 = sbr.rel (0) target = $region9
    $region8: #{tpu_custom_call.1} parent=1 // pred_region
      %29 = vsyncadd [#allocation6], 0
      %s30 = sshll.u32 %s1, 4
      %s31 = int_to_ptr.hbm [resolvable:$true] %s30
      %s32 = sshll.u32 [#allocation5], 4
      %s33 = int_to_ptr.vmem [resolvable:$true] %s32
      %38 = dma.hbm_to_vmem [thread:$0]  %s31, 36864, %s33, [#allocation6], 128, 128, 8
    $region9: #{tpu_custom_call.1} parent=1 // pred_fallthru
      _
    // Predicated region
    $region10: #{tpu_custom_call.1} parent=1 // pred_check
      _
    $region11: #{tpu_custom_call.1} parent=1 // pred_check_branch
      %40 = sbr.rel (0) target = $region13
    $region12: #{tpu_custom_call.1} parent=1 // pred_region
      %42 = vsyncadd [#allocation6], 0
      %s44 = sshll.u32 %s2, 4
      %s45 = int_to_ptr.hbm [resolvable:$true] %s44
      %s46 = sshll.u32 [#allocation7], 4
      %s47 = int_to_ptr.vmem [resolvable:$true] %s46
      %49 = dma.hbm_to_vmem [thread:$0]  %s45, 32, %s47, [#allocation6]
    $region13: #{tpu_custom_call.1} parent=1 // pred_fallthru
      _
    // Predicated region
    $region14: #{tpu_custom_call.1} parent=1 // pred_check
      _
    $region15: #{tpu_custom_call.1} parent=1 // pred_check_branch
      %51 = sbr.rel (0) target = $region17
    $region16: #{tpu_custom_call.1} parent=1 // pred_region
      %53 = vsyncadd [#allocation9], 0
      %s55 = sshll.u32 %s3, 4
      %s56 = int_to_ptr.hbm [resolvable:$true] %s55
      %s57 = sshll.u32 [#allocation8], 4
      %s58 = int_to_ptr.vmem [resolvable:$true] %s57
      %60 = dma.hbm_to_vmem [thread:$0]  %s56, 32, %s58, [#allocation9]
    $region17: #{tpu_custom_call.1} parent=1 // pred_fallthru
      _
    // Predicated region
    $region18: #{tpu_custom_call.1} parent=1 // pred_check
      _
    $region19: #{tpu_custom_call.1} parent=1 // pred_check_branch
      %62 = sbr.rel (0) target = $region21
    $region20: #{tpu_custom_call.1} parent=1 // pred_region
      %64 = dma.done [#allocation3], 2304
    $region21: #{tpu_custom_call.1} parent=1 // pred_fallthru
      _
    // Predicated region
    $region22: #{tpu_custom_call.1} parent=1 // pred_check
      _
    $region23: #{tpu_custom_call.1} parent=1 // pred_check_branch
      %66 = sbr.rel (0) target = $region25
    $region24: #{tpu_custom_call.1} parent=1 // pred_region
      %68 = dma.done [#allocation6], 36864
    $region25: #{tpu_custom_call.1} parent=1 // pred_fallthru
      _
    // Predicated region
    $region26: #{tpu_custom_call.1} parent=1 // pred_check
      _
    $region27: #{tpu_custom_call.1} parent=1 // pred_check_branch
      %70 = sbr.rel (0) target = $region29
    $region28: #{tpu_custom_call.1} parent=1 // pred_region
      %72 = dma.done [#allocation6], 32
    $region29: #{tpu_custom_call.1} parent=1 // pred_fallthru
      _
    // Predicated region
    $region30: #{tpu_custom_call.1} parent=1 // pred_check
      _
    $region31: #{tpu_custom_call.1} parent=1 // pred_check_branch
      %74 = sbr.rel (0) target = $region33
    $region32: #{tpu_custom_call.1} parent=1 // pred_region
      %76 = dma.done [#allocation9], 32
    $region33: #{tpu_custom_call.1} parent=1 // pred_fallthru
      _
    %v77 = vld [vmem:[#allocation7] sm:$0x3]
    %v78 = vld [vmem:[#allocation8] sm:$0x3]
    %v79 = vld [vmem:[#allocation2] sm:$0xff]
    %v80 = vld [vmem:[#allocation2 + $0x10] sm:$0xff]
    %v81 = vld [vmem:[#allocation2 + $0x20] sm:$0xff]
    %v82 = vld [vmem:[#allocation2 + $0x30] sm:$0xff]
    %v83 = vld [vmem:[#allocation2 + $0x40] sm:$0xff]
    %v84 = vld [vmem:[#allocation2 + $0x50] sm:$0xff]
    %v85 = vld [vmem:[#allocation2 + $0x60] sm:$0xff]
    %v86 = vld [vmem:[#allocation2 + $0x70] sm:$0xff]
    %v87 = vld [vmem:[#allocation2 + $0x8] sm:$0x11]
    %v88 = vld [vmem:[#allocation2 + $0x18] sm:$0x11]
    %v89 = vld [vmem:[#allocation2 + $0x28] sm:$0x11]
    %v90 = vld [vmem:[#allocation2 + $0x38] sm:$0x11]
    %v91 = vld [vmem:[#allocation2 + $0x48] sm:$0x11]
    %v92 = vld [vmem:[#allocation2 + $0x58] sm:$0x11]
    %v93 = vld [vmem:[#allocation2 + $0x68] sm:$0x11]
    %v94 = vld [vmem:[#allocation2 + $0x78] sm:$0x11]
    %vm95 = vsmask.f32 3328
    %vm96 = vsmask.f32 7440
    %vm97 = vmor %vm95, %vm96
    %v99 = vshrl.u32 %v79, 16
    %v101 = vrot.slane %v99, 4
    %v102 = vshll.u32 %v79, 16
    %v104 = vrot.slane %v102, 5
    %v105 = vor.u32 %v101, %v104
    %v106 = vrot.slane %v105, 4
    %v108 = vshll.u32 %v87, 16
    %v110 = vrot.slane %v108, 5
    %v111 = vsel %vm97, %v106, %v110
    %v113 = vshrl.u32 %v80, 16
    %v115 = vrot.slane %v113, 4
    %v116 = vshll.u32 %v80, 16
    %v118 = vrot.slane %v116, 5
    %v119 = vor.u32 %v115, %v118
    %v120 = vrot.slane %v119, 4
    %v122 = vshll.u32 %v88, 16
    %v124 = vrot.slane %v122, 5
    %v125 = vsel %vm97, %v120, %v124
    %v127 = vshrl.u32 %v81, 16
    %v129 = vrot.slane %v127, 4
    %v130 = vshll.u32 %v81, 16
    %v132 = vrot.slane %v130, 5
    %v133 = vor.u32 %v129, %v132
    %v134 = vrot.slane %v133, 4
    %v136 = vshll.u32 %v89, 16
    %v138 = vrot.slane %v136, 5
    %v139 = vsel %vm97, %v134, %v138
    %v141 = vshrl.u32 %v82, 16
    %v143 = vrot.slane %v141, 4
    %v144 = vshll.u32 %v82, 16
    %v146 = vrot.slane %v144, 5
    %v147 = vor.u32 %v143, %v146
    %v148 = vrot.slane %v147, 4
    %v150 = vshll.u32 %v90, 16
    %v152 = vrot.slane %v150, 5
    %v153 = vsel %vm97, %v148, %v152
    %v155 = vshrl.u32 %v83, 16
    %v157 = vrot.slane %v155, 4
    %v158 = vshll.u32 %v83, 16
    %v160 = vrot.slane %v158, 5
    %v161 = vor.u32 %v157, %v160
    %v162 = vrot.slane %v161, 4
    %v164 = vshll.u32 %v91, 16
    %v166 = vrot.slane %v164, 5
    %v167 = vsel %vm97, %v162, %v166
    %v169 = vshrl.u32 %v84, 16
    %v171 = vrot.slane %v169, 4
    %v172 = vshll.u32 %v84, 16
    %v174 = vrot.slane %v172, 5
    %v175 = vor.u32 %v171, %v174
    %v176 = vrot.slane %v175, 4
    %v178 = vshll.u32 %v92, 16
    %v180 = vrot.slane %v178, 5
    %v181 = vsel %vm97, %v176, %v180
    %v183 = vshrl.u32 %v85, 16
    %v185 = vrot.slane %v183, 4
    %v186 = vshll.u32 %v85, 16
    %v188 = vrot.slane %v186, 5
    %v189 = vor.u32 %v185, %v188
    %v190 = vrot.slane %v189, 4
    %v192 = vshll.u32 %v93, 16
    %v194 = vrot.slane %v192, 5
    %v195 = vsel %vm97, %v190, %v194
    %v197 = vshrl.u32 %v86, 16
    %v199 = vrot.slane %v197, 4
    %v200 = vshll.u32 %v86, 16
    %v202 = vrot.slane %v200, 5
    %v203 = vor.u32 %v199, %v202
    %v204 = vrot.slane %v203, 4
    %v206 = vshll.u32 %v94, 16
    %v208 = vrot.slane %v206, 5
    %v209 = vsel %vm97, %v204, %v208
    %s210 = scalar_lea.vmem [#allocation2], 16
    %v211 = vld [vmem:[%s210] sm:$0xff]
    %v212 = vld [vmem:[%s210 + $0x10] sm:$0xff]
    %v213 = vld [vmem:[%s210 + $0x20] sm:$0xff]
    %v214 = vld [vmem:[%s210 + $0x30] sm:$0xff]
    %v215 = vld [vmem:[%s210 + $0x40] sm:$0xff]
    %v216 = vld [vmem:[%s210 + $0x50] sm:$0xff]
    %v217 = vld [vmem:[%s210 + $0x60] sm:$0xff]
    %v218 = vld [vmem:[%s210 + $0x70] sm:$0xff]
    %v219 = vld [vmem:[%s210 + $0x8] sm:$0x11]
    %v220 = vld [vmem:[%s210 + $0x18] sm:$0x11]
    %v221 = vld [vmem:[%s210 + $0x28] sm:$0x11]
    %v222 = vld [vmem:[%s210 + $0x38] sm:$0x11]
    %v223 = vld [vmem:[%s210 + $0x48] sm:$0x11]
    %v224 = vld [vmem:[%s210 + $0x58] sm:$0x11]
    %v225 = vld [vmem:[%s210 + $0x68] sm:$0x11]
    %v226 = vld [vmem:[%s210 + $0x78] sm:$0x11]
    %v228 = vshrl.u32 %v211, 16
    %v230 = vrot.slane %v228, 4
    %v231 = vshll.u32 %v211, 16
    %v233 = vrot.slane %v231, 5
    %v234 = vor.u32 %v230, %v233
    %v235 = vrot.slane %v234, 4
    %v237 = vshll.u32 %v219, 16
    %v239 = vrot.slane %v237, 5
    %v240 = vsel %vm97, %v235, %v239
    %v242 = vshrl.u32 %v212, 16
    %v244 = vrot.slane %v242, 4
    %v245 = vshll.u32 %v212, 16
    %v247 = vrot.slane %v245, 5
    %v248 = vor.u32 %v244, %v247
    %v249 = vrot.slane %v248, 4
    %v251 = vshll.u32 %v220, 16
    %v253 = vrot.slane %v251, 5
    %v254 = vsel %vm97, %v249, %v253
    %v256 = vshrl.u32 %v213, 16
    %v258 = vrot.slane %v256, 4
    %v259 = vshll.u32 %v213, 16
    %v261 = vrot.slane %v259, 5
    %v262 = vor.u32 %v258, %v261
    %v263 = vrot.slane %v262, 4
    %v265 = vshll.u32 %v221, 16
    %v267 = vrot.slane %v265, 5
    %v268 = vsel %vm97, %v263, %v267
    %v270 = vshrl.u32 %v214, 16
    %v272 = vrot.slane %v270, 4
    %v273 = vshll.u32 %v214, 16
    %v275 = vrot.slane %v273, 5
    %v276 = vor.u32 %v272, %v275
    %v277 = vrot.slane %v276, 4
    %v279 = vshll.u32 %v222, 16
    %v281 = vrot.slane %v279, 5
    %v282 = vsel %vm97, %v277, %v281
    %v284 = vshrl.u32 %v215, 16
    %v286 = vrot.slane %v284, 4
    %v287 = vshll.u32 %v215, 16
    %v289 = vrot.slane %v287, 5
    %v290 = vor.u32 %v286, %v289
    %v291 = vrot.slane %v290, 4
    %v293 = vshll.u32 %v223, 16
    %v295 = vrot.slane %v293, 5
    %v296 = vsel %vm97, %v291, %v295
    %v298 = vshrl.u32 %v216, 16
    %v300 = vrot.slane %v298, 4
    %v301 = vshll.u32 %v216, 16
    %v303 = vrot.slane %v301, 5
    %v304 = vor.u32 %v300, %v303
    %v305 = vrot.slane %v304, 4
    %v307 = vshll.u32 %v224, 16
    %v309 = vrot.slane %v307, 5
    %v310 = vsel %vm97, %v305, %v309
    %v312 = vshrl.u32 %v217, 16
    %v314 = vrot.slane %v312, 4
    %v315 = vshll.u32 %v217, 16
    %v317 = vrot.slane %v315, 5
    %v318 = vor.u32 %v314, %v317
    %v319 = vrot.slane %v318, 4
    %v321 = vshll.u32 %v225, 16
    %v323 = vrot.slane %v321, 5
    %v324 = vsel %vm97, %v319, %v323
    %v326 = vshrl.u32 %v218, 16
    %v328 = vrot.slane %v326, 4
    %v329 = vshll.u32 %v218, 16
    %v331 = vrot.slane %v329, 5
    %v332 = vor.u32 %v328, %v331
    %v333 = vrot.slane %v332, 4
    %v335 = vshll.u32 %v226, 16
    %v337 = vrot.slane %v335, 5
    %v338 = vsel %vm97, %v333, %v337
    %s339 = scalar_lea.vmem [#allocation5], 1024
    %v340 = vld [vmem:[%s339] sm:$0xff]
    %v341 = vld [vmem:[%s339 + $0x8] sm:$0xff]
    %v342 = vld [vmem:[%s339 + $0x10] sm:$0xff]
    %v343 = vld [vmem:[%s339 + $0x18] sm:$0xff]
    %v344 = vld [vmem:[%s339 + $0x20] sm:$0xff]
    %v345 = vld [vmem:[%s339 + $0x28] sm:$0xff]
    %v346 = vld [vmem:[%s339 + $0x30] sm:$0xff]
    %v347 = vld [vmem:[%s339 + $0x38] sm:$0xff]
    %v348 = vld [vmem:[%s339 + $0x40] sm:$0xff]
    %v349 = vld [vmem:[%s339 + $0x48] sm:$0xff]
    %v350 = vld [vmem:[%s339 + $0x50] sm:$0xff]
    %v351 = vld [vmem:[%s339 + $0x58] sm:$0xff]
    %v352 = vld [vmem:[%s339 + $0x60] sm:$0xff]
    %v353 = vld [vmem:[%s339 + $0x68] sm:$0xff]
    %v354 = vld [vmem:[%s339 + $0x70] sm:$0xff]
    %v355 = vld [vmem:[%s339 + $0x78] sm:$0xff]
    %v356 = vld [vmem:[%s339 + $0x80] sm:$0xff]
    %v357 = vld [vmem:[%s339 + $0x88] sm:$0xff]
    %v358 = vld [vmem:[%s339 + $0x90] sm:$0xff]
    %v359 = vld [vmem:[%s339 + $0x98] sm:$0xff]
    %v360 = vld [vmem:[%s339 + $0xa0] sm:$0xff]
    %v361 = vld [vmem:[%s339 + $0xa8] sm:$0xff]
    %v362 = vld [vmem:[%s339 + $0xb0] sm:$0xff]
    %v363 = vld [vmem:[%s339 + $0xb8] sm:$0xff]
    %v364 = vld [vmem:[%s339 + $0xc0] sm:$0xff]
    %v365 = vld [vmem:[%s339 + $0xc8] sm:$0xff]
    %v366 = vld [vmem:[%s339 + $0xd0] sm:$0xff]
    %v367 = vld [vmem:[%s339 + $0xd8] sm:$0xff]
    %v368 = vld [vmem:[%s339 + $0xe0] sm:$0xff]
    %v369 = vld [vmem:[%s339 + $0xe8] sm:$0xff]
    %v370 = vld [vmem:[%s339 + $0xf0] sm:$0xff]
    %v371 = vld [vmem:[%s339 + $0xf8] sm:$0xff]
    %v380 = vunpack.c.l.b16 %v79
    %v381 = vunpack.c.h.b16 %v79
    %v382 = vunpack.c.l.b16 %v80
    %v383 = vunpack.c.h.b16 %v80
    %v384 = vunpack.c.l.b16 %v81
    %v385 = vunpack.c.h.b16 %v81
    %v386 = vunpack.c.l.b16 %v82
    %v387 = vunpack.c.h.b16 %v82
    %v388 = vunpack.c.l.b16 %v83
    %v389 = vunpack.c.h.b16 %v83
    %v390 = vunpack.c.l.b16 %v84
    %v391 = vunpack.c.h.b16 %v84
    %v392 = vunpack.c.l.b16 %v85
    %v393 = vunpack.c.h.b16 %v85
    %v394 = vunpack.c.l.b16 %v86
    %v395 = vunpack.c.h.b16 %v86
    %v396 = vpack.c.b16 %v382, %v380
    %v397 = vpack.c.b16 %v383, %v381
    %v398 = vpack.c.b16 %v386, %v384
    %v399 = vpack.c.b16 %v387, %v385
    %v400 = vpack.c.b16 %v390, %v388
    %v401 = vpack.c.b16 %v391, %v389
    %v402 = vpack.c.b16 %v394, %v392
    %v403 = vpack.c.b16 %v395, %v393
    %v444 = vunpack.c.l.b16 %v340
    %v445 = vunpack.c.h.b16 %v340
    %v446 = vunpack.c.l.b16 %v341
    %v447 = vunpack.c.h.b16 %v341
    %v448 = vunpack.c.l.b16 %v342
    %v449 = vunpack.c.h.b16 %v342
    %v450 = vunpack.c.l.b16 %v343
    %v451 = vunpack.c.h.b16 %v343
    %v452 = vunpack.c.l.b16 %v344
    %v453 = vunpack.c.h.b16 %v344
    %v454 = vunpack.c.l.b16 %v345
    %v455 = vunpack.c.h.b16 %v345
    %v456 = vunpack.c.l.b16 %v346
    %v457 = vunpack.c.h.b16 %v346
    %v458 = vunpack.c.l.b16 %v347
    %v459 = vunpack.c.h.b16 %v347
    %v460 = vunpack.c.l.b16 %v348
    %v461 = vunpack.c.h.b16 %v348
    %v462 = vunpack.c.l.b16 %v349
    %v463 = vunpack.c.h.b16 %v349
    %v464 = vunpack.c.l.b16 %v350
    %v465 = vunpack.c.h.b16 %v350
    %v466 = vunpack.c.l.b16 %v351
    %v467 = vunpack.c.h.b16 %v351
    %v468 = vunpack.c.l.b16 %v352
    %v469 = vunpack.c.h.b16 %v352
    %v470 = vunpack.c.l.b16 %v353
    %v471 = vunpack.c.h.b16 %v353
    %v472 = vunpack.c.l.b16 %v354
    %v473 = vunpack.c.h.b16 %v354
    %v474 = vunpack.c.l.b16 %v355
    %v475 = vunpack.c.h.b16 %v355
    %v476 = vunpack.c.l.b16 %v356
    %v477 = vunpack.c.h.b16 %v356
    %v478 = vunpack.c.l.b16 %v357
    %v479 = vunpack.c.h.b16 %v357
    %v480 = vunpack.c.l.b16 %v358
    %v481 = vunpack.c.h.b16 %v358
    %v482 = vunpack.c.l.b16 %v359
    %v483 = vunpack.c.h.b16 %v359
    %v484 = vunpack.c.l.b16 %v360
    %v485 = vunpack.c.h.b16 %v360
    %v486 = vunpack.c.l.b16 %v361
    %v487 = vunpack.c.h.b16 %v361
    %v488 = vunpack.c.l.b16 %v362
    %v489 = vunpack.c.h.b16 %v362
    %v490 = vunpack.c.l.b16 %v363
    %v491 = vunpack.c.h.b16 %v363
    %v492 = vunpack.c.l.b16 %v364
    %v493 = vunpack.c.h.b16 %v364
    %v494 = vunpack.c.l.b16 %v365
    %v495 = vunpack.c.h.b16 %v365
    %v496 = vunpack.c.l.b16 %v366
    %v497 = vunpack.c.h.b16 %v366
    %v498 = vunpack.c.l.b16 %v367
    %v499 = vunpack.c.h.b16 %v367
    %v500 = vunpack.c.l.b16 %v368
    %v501 = vunpack.c.h.b16 %v368
    %v502 = vunpack.c.l.b16 %v369
    %v503 = vunpack.c.h.b16 %v369
    %v504 = vunpack.c.l.b16 %v370
    %v505 = vunpack.c.h.b16 %v370
    %v506 = vunpack.c.l.b16 %v371
    %v507 = vunpack.c.h.b16 %v371
    %v508 = vpack.c.b16 %v446, %v444
    %v509 = vpack.c.b16 %v447, %v445
    %v510 = vpack.c.b16 %v450, %v448
    %v511 = vpack.c.b16 %v451, %v449
    %v512 = vpack.c.b16 %v454, %v452
    %v513 = vpack.c.b16 %v455, %v453
    %v514 = vpack.c.b16 %v458, %v456
    %v515 = vpack.c.b16 %v459, %v457
    %v516 = vpack.c.b16 %v462, %v460
    %v517 = vpack.c.b16 %v463, %v461
    %v518 = vpack.c.b16 %v466, %v464
    %v519 = vpack.c.b16 %v467, %v465
    %v520 = vpack.c.b16 %v470, %v468
    %v521 = vpack.c.b16 %v471, %v469
    %v522 = vpack.c.b16 %v474, %v472
    %v523 = vpack.c.b16 %v475, %v473
    %v524 = vpack.c.b16 %v478, %v476
    %v525 = vpack.c.b16 %v479, %v477
    %v526 = vpack.c.b16 %v482, %v480
    %v527 = vpack.c.b16 %v483, %v481
    %v528 = vpack.c.b16 %v486, %v484
    %v529 = vpack.c.b16 %v487, %v485
    %v530 = vpack.c.b16 %v490, %v488
    %v531 = vpack.c.b16 %v491, %v489
    %v532 = vpack.c.b16 %v494, %v492
    %v533 = vpack.c.b16 %v495, %v493
    %v534 = vpack.c.b16 %v498, %v496
    %v535 = vpack.c.b16 %v499, %v497
    %v536 = vpack.c.b16 %v502, %v500
    %v537 = vpack.c.b16 %v503, %v501
    %v538 = vpack.c.b16 %v506, %v504
    %v539 = vpack.c.b16 %v507, %v505
    %572 = vmatpush.bf16.msra.mxu0 %v522
    %573 = vmatpush.bf16.msra.mxu0 %v520
    %574 = vmatpush.bf16.msra.mxu0 %v518
    %575 = vmatpush.bf16.msra.mxu0 %v516
    %576 = vmatpush.bf16.msra.mxu0 %v514
    %577 = vmatpush.bf16.msra.mxu0 %v512
    %578 = vmatpush.bf16.msra.mxu0 %v510
    %579 = vmatpush.bf16.msra.mxu0 %v508
    %580 = vmatmul.bf16.gmra.mxu0 %v396
    %v581 = vpop.f32.mrf.mxu0
    %v582 = vadd.f32 0.0, %v581
    %v583 = vpop.f32.mrf.mxu0
    %v584 = vadd.f32 0.0, %v583
    %585 = vmatmul.bf16.gmra.mxu0 %v398
    %v586 = vpop.f32.mrf.mxu0
    %v587 = vadd.f32 0.0, %v586
    %v588 = vpop.f32.mrf.mxu0
    %v589 = vadd.f32 0.0, %v588
    %590 = vmatmul.bf16.gmra.mxu0 %v400
    %v591 = vpop.f32.mrf.mxu0
    %v592 = vadd.f32 0.0, %v591
    %v593 = vpop.f32.mrf.mxu0
    %v594 = vadd.f32 0.0, %v593
    %595 = vmatmul.bf16.gmra.mxu0 %v402
    %v596 = vpop.f32.mrf.mxu0
    %v597 = vadd.f32 0.0, %v596
    %v598 = vpop.f32.mrf.mxu0
    %v599 = vadd.f32 0.0, %v598
    %600 = vdwg.mxu0
    %601 = vmatpush.bf16.msra.mxu0 %v538
    %602 = vmatpush.bf16.msra.mxu0 %v536
    %603 = vmatpush.bf16.msra.mxu0 %v534
    %604 = vmatpush.bf16.msra.mxu0 %v532
    %605 = vmatpush.bf16.msra.mxu0 %v530
    %606 = vmatpush.bf16.msra.mxu0 %v528
    %607 = vmatpush.bf16.msra.mxu0 %v526
    %608 = vmatpush.bf16.msra.mxu0 %v524
    %609 = vmatmul.bf16.gmra.mxu0 %v397
    %v610 = vpop.f32.mrf.mxu0
    %v611 = vadd.f32 %v582, %v610
    %v612 = vpop.f32.mrf.mxu0
    %v613 = vadd.f32 %v584, %v612
    %614 = vmatmul.bf16.gmra.mxu0 %v399
    %v615 = vpop.f32.mrf.mxu0
    %v616 = vadd.f32 %v587, %v615
    %v617 = vpop.f32.mrf.mxu0
    %v618 = vadd.f32 %v589, %v617
    %619 = vmatmul.bf16.gmra.mxu0 %v401
    %v620 = vpop.f32.mrf.mxu0
    %v621 = vadd.f32 %v592, %v620
    %v622 = vpop.f32.mrf.mxu0
    %v623 = vadd.f32 %v594, %v622
    %624 = vmatmul.bf16.gmra.mxu0 %v403
    %v625 = vpop.f32.mrf.mxu0
    %v626 = vadd.f32 %v597, %v625
    %v627 = vpop.f32.mrf.mxu0
    %v628 = vadd.f32 %v599, %v627
    %629 = vdwg.mxu0
    %630 = vmatpush.bf16.msra.mxu0 %v523
    %631 = vmatpush.bf16.msra.mxu0 %v521
    %632 = vmatpush.bf16.msra.mxu0 %v519
    %633 = vmatpush.bf16.msra.mxu0 %v517
    %634 = vmatpush.bf16.msra.mxu0 %v515
    %635 = vmatpush.bf16.msra.mxu0 %v513
    %636 = vmatpush.bf16.msra.mxu0 %v511
    %637 = vmatpush.bf16.msra.mxu0 %v509
    %638 = vmatmul.bf16.gmra.mxu0 %v396
    %v639 = vpop.f32.mrf.mxu0
    %v640 = vadd.f32 0.0, %v639
    %v641 = vpop.f32.mrf.mxu0
    %v642 = vadd.f32 0.0, %v641
    %643 = vmatmul.bf16.gmra.mxu0 %v398
    %v644 = vpop.f32.mrf.mxu0
    %v645 = vadd.f32 0.0, %v644
    %v646 = vpop.f32.mrf.mxu0
    %v647 = vadd.f32 0.0, %v646
    %648 = vmatmul.bf16.gmra.mxu0 %v400
    %v649 = vpop.f32.mrf.mxu0
    %v650 = vadd.f32 0.0, %v649
    %v651 = vpop.f32.mrf.mxu0
    %v652 = vadd.f32 0.0, %v651
    %653 = vmatmul.bf16.gmra.mxu0 %v402
    %v654 = vpop.f32.mrf.mxu0
    %v655 = vadd.f32 0.0, %v654
    %v656 = vpop.f32.mrf.mxu0
    %v657 = vadd.f32 0.0, %v656
    %658 = vdwg.mxu0
    %659 = vmatpush.bf16.msra.mxu0 %v539
    %660 = vmatpush.bf16.msra.mxu0 %v537
    %661 = vmatpush.bf16.msra.mxu0 %v535
    %662 = vmatpush.bf16.msra.mxu0 %v533
    %663 = vmatpush.bf16.msra.mxu0 %v531
    %664 = vmatpush.bf16.msra.mxu0 %v529
    %665 = vmatpush.bf16.msra.mxu0 %v527
    %666 = vmatpush.bf16.msra.mxu0 %v525
    %667 = vmatmul.bf16.gmra.mxu0 %v397
    %v668 = vpop.f32.mrf.mxu0
    %v669 = vadd.f32 %v640, %v668
    %v670 = vpop.f32.mrf.mxu0
    %v671 = vadd.f32 %v642, %v670
    %672 = vmatmul.bf16.gmra.mxu0 %v399
    %v673 = vpop.f32.mrf.mxu0
    %v674 = vadd.f32 %v645, %v673
    %v675 = vpop.f32.mrf.mxu0
    %v676 = vadd.f32 %v647, %v675
    %677 = vmatmul.bf16.gmra.mxu0 %v401
    %v678 = vpop.f32.mrf.mxu0
    %v679 = vadd.f32 %v650, %v678
    %v680 = vpop.f32.mrf.mxu0
    %v681 = vadd.f32 %v652, %v680
    %682 = vmatmul.bf16.gmra.mxu0 %v403
    %v683 = vpop.f32.mrf.mxu0
    %v684 = vadd.f32 %v655, %v683
    %v685 = vpop.f32.mrf.mxu0
    %v686 = vadd.f32 %v657, %v685
    %687 = vdwg.mxu0
    %v689 = vperm.slane %v77, 0
    %v690 = vperm.slane %v77, 1
    %v693 = vmul.f32 %v611, %v689
    %v694 = vmul.f32 %v669, %v690
    %v695 = vmul.f32 %v613, %v689
    %v696 = vmul.f32 %v671, %v690
    %v697 = vmul.f32 %v616, %v689
    %v698 = vmul.f32 %v674, %v690
    %v699 = vmul.f32 %v618, %v689
    %v700 = vmul.f32 %v676, %v690
    %v701 = vmul.f32 %v621, %v689
    %v702 = vmul.f32 %v679, %v690
    %v703 = vmul.f32 %v623, %v689
    %v704 = vmul.f32 %v681, %v690
    %v705 = vmul.f32 %v626, %v689
    %v706 = vmul.f32 %v684, %v690
    %v707 = vmul.f32 %v628, %v689
    %v708 = vmul.f32 %v686, %v690
    %v710 = vperm.slane %v78, 0
    %v711 = vperm.slane %v78, 1
    %v714 = vadd.f32 %v693, %v710
    %v715 = vadd.f32 %v694, %v711
    %v716 = vadd.f32 %v695, %v710
    %v717 = vadd.f32 %v696, %v711
    %v718 = vadd.f32 %v697, %v710
    %v719 = vadd.f32 %v698, %v711
    %v720 = vadd.f32 %v699, %v710
    %v721 = vadd.f32 %v700, %v711
    %v722 = vadd.f32 %v701, %v710
    %v723 = vadd.f32 %v702, %v711
    %v724 = vadd.f32 %v703, %v710
    %v725 = vadd.f32 %v704, %v711
    %v726 = vadd.f32 %v705, %v710
    %v727 = vadd.f32 %v706, %v711
    %v728 = vadd.f32 %v707, %v710
    %v729 = vadd.f32 %v708, %v711
    %v730 = vmax.f32 %v714, 0.0
    %v731 = vmax.f32 %v715, 0.0
    %v732 = vmax.f32 %v716, 0.0
    %v733 = vmax.f32 %v717, 0.0
    %v734 = vmax.f32 %v718, 0.0
    %v735 = vmax.f32 %v719, 0.0
    %v736 = vmax.f32 %v720, 0.0
    %v737 = vmax.f32 %v721, 0.0
    %v738 = vmax.f32 %v722, 0.0
    %v739 = vmax.f32 %v723, 0.0
    %v740 = vmax.f32 %v724, 0.0
    %v741 = vmax.f32 %v725, 0.0
    %v742 = vmax.f32 %v726, 0.0
    %v743 = vmax.f32 %v727, 0.0
    %v744 = vmax.f32 %v728, 0.0
    %v745 = vmax.f32 %v729, 0.0
    %v746 = vpack.c.bf16 %v731, %v730
    %v747 = vpack.c.bf16 %v733, %v732
    %v748 = vpack.c.bf16 %v735, %v734
    %v749 = vpack.c.bf16 %v737, %v736
    %v750 = vpack.c.bf16 %v739, %v738
    %v751 = vpack.c.bf16 %v741, %v740
    %v752 = vpack.c.bf16 %v743, %v742
    %v753 = vpack.c.bf16 %v745, %v744
    %754 = vst [vmem:[#allocation10] sm:$0xff] %v746
    %755 = vst [vmem:[#allocation10 + $0x20] sm:$0xff] %v747
    %756 = vst [vmem:[#allocation10 + $0x40] sm:$0xff] %v748
    %757 = vst [vmem:[#allocation10 + $0x60] sm:$0xff] %v749
    %758 = vst [vmem:[#allocation10 + $0x80] sm:$0xff] %v750
    %759 = vst [vmem:[#allocation10 + $0xa0] sm:$0xff] %v751
    %760 = vst [vmem:[#allocation10 + $0xc0] sm:$0xff] %v752
    %761 = vst [vmem:[#allocation10 + $0xe0] sm:$0xff] %v753
    %s762 = scalar_lea.vmem [#allocation5], 768
    %v763 = vld [vmem:[%s762] sm:$0xff]
    %v764 = vld [vmem:[%s762 + $0x8] sm:$0xff]
    %v765 = vld [vmem:[%s762 + $0x10] sm:$0xff]
    %v766 = vld [vmem:[%s762 + $0x18] sm:$0xff]
    %v767 = vld [vmem:[%s762 + $0x20] sm:$0xff]
    %v768 = vld [vmem:[%s762 + $0x28] sm:$0xff]
    %v769 = vld [vmem:[%s762 + $0x30] sm:$0xff]
    %v770 = vld [vmem:[%s762 + $0x38] sm:$0xff]
    %v771 = vld [vmem:[%s762 + $0x40] sm:$0xff]
    %v772 = vld [vmem:[%s762 + $0x48] sm:$0xff]
    %v773 = vld [vmem:[%s762 + $0x50] sm:$0xff]
    %v774 = vld [vmem:[%s762 + $0x58] sm:$0xff]
    %v775 = vld [vmem:[%s762 + $0x60] sm:$0xff]
    %v776 = vld [vmem:[%s762 + $0x68] sm:$0xff]
    %v777 = vld [vmem:[%s762 + $0x70] sm:$0xff]
    %v778 = vld [vmem:[%s762 + $0x78] sm:$0xff]
    %v779 = vld [vmem:[%s762 + $0x80] sm:$0xff]
    %v780 = vld [vmem:[%s762 + $0x88] sm:$0xff]
    %v781 = vld [vmem:[%s762 + $0x90] sm:$0xff]
    %v782 = vld [vmem:[%s762 + $0x98] sm:$0xff]
    %v783 = vld [vmem:[%s762 + $0xa0] sm:$0xff]
    %v784 = vld [vmem:[%s762 + $0xa8] sm:$0xff]
    %v785 = vld [vmem:[%s762 + $0xb0] sm:$0xff]
    %v786 = vld [vmem:[%s762 + $0xb8] sm:$0xff]
    %v787 = vld [vmem:[%s762 + $0xc0] sm:$0xff]
    %v788 = vld [vmem:[%s762 + $0xc8] sm:$0xff]
    %v789 = vld [vmem:[%s762 + $0xd0] sm:$0xff]
    %v790 = vld [vmem:[%s762 + $0xd8] sm:$0xff]
    %v791 = vld [vmem:[%s762 + $0xe0] sm:$0xff]
    %v792 = vld [vmem:[%s762 + $0xe8] sm:$0xff]
    %v793 = vld [vmem:[%s762 + $0xf0] sm:$0xff]
    %v794 = vld [vmem:[%s762 + $0xf8] sm:$0xff]
    %s795 = scalar_lea.vmem [#allocation5], 1280
    %v796 = vld [vmem:[%s795] sm:$0xff]
    %v797 = vld [vmem:[%s795 + $0x8] sm:$0xff]
    %v798 = vld [vmem:[%s795 + $0x10] sm:$0xff]
    %v799 = vld [vmem:[%s795 + $0x18] sm:$0xff]
    %v800 = vld [vmem:[%s795 + $0x20] sm:$0xff]
    %v801 = vld [vmem:[%s795 + $0x28] sm:$0xff]
    %v802 = vld [vmem:[%s795 + $0x30] sm:$0xff]
    %v803 = vld [vmem:[%s795 + $0x38] sm:$0xff]
    %v804 = vld [vmem:[%s795 + $0x40] sm:$0xff]
    %v805 = vld [vmem:[%s795 + $0x48] sm:$0xff]
    %v806 = vld [vmem:[%s795 + $0x50] sm:$0xff]
    %v807 = vld [vmem:[%s795 + $0x58] sm:$0xff]
    %v808 = vld [vmem:[%s795 + $0x60] sm:$0xff]
    %v809 = vld [vmem:[%s795 + $0x68] sm:$0xff]
    %v810 = vld [vmem:[%s795 + $0x70] sm:$0xff]
    %v811 = vld [vmem:[%s795 + $0x78] sm:$0xff]
    %v812 = vld [vmem:[%s795 + $0x80] sm:$0xff]
    %v813 = vld [vmem:[%s795 + $0x88] sm:$0xff]
    %v814 = vld [vmem:[%s795 + $0x90] sm:$0xff]
    %v815 = vld [vmem:[%s795 + $0x98] sm:$0xff]
    %v816 = vld [vmem:[%s795 + $0xa0] sm:$0xff]
    %v817 = vld [vmem:[%s795 + $0xa8] sm:$0xff]
    %v818 = vld [vmem:[%s795 + $0xb0] sm:$0xff]
    %v819 = vld [vmem:[%s795 + $0xb8] sm:$0xff]
    %v820 = vld [vmem:[%s795 + $0xc0] sm:$0xff]
    %v821 = vld [vmem:[%s795 + $0xc8] sm:$0xff]
    %v822 = vld [vmem:[%s795 + $0xd0] sm:$0xff]
    %v823 = vld [vmem:[%s795 + $0xd8] sm:$0xff]
    %v824 = vld [vmem:[%s795 + $0xe0] sm:$0xff]
    %v825 = vld [vmem:[%s795 + $0xe8] sm:$0xff]
    %v826 = vld [vmem:[%s795 + $0xf0] sm:$0xff]
    %v827 = vld [vmem:[%s795 + $0xf8] sm:$0xff]
    %v828 = vunpack.c.l.b16 %v111
    %v829 = vunpack.c.h.b16 %v111
    %v830 = vunpack.c.l.b16 %v125
    %v831 = vunpack.c.h.b16 %v125
    %v832 = vunpack.c.l.b16 %v139
    %v833 = vunpack.c.h.b16 %v139
    %v834 = vunpack.c.l.b16 %v153
    %v835 = vunpack.c.h.b16 %v153
    %v836 = vunpack.c.l.b16 %v167
    %v837 = vunpack.c.h.b16 %v167
    %v838 = vunpack.c.l.b16 %v181
    %v839 = vunpack.c.h.b16 %v181
    %v840 = vunpack.c.l.b16 %v195
    %v841 = vunpack.c.h.b16 %v195
    %v842 = vunpack.c.l.b16 %v209
    %v843 = vunpack.c.h.b16 %v209
    %v844 = vpack.c.b16 %v830, %v828
    %v845 = vpack.c.b16 %v831, %v829
    %v846 = vpack.c.b16 %v834, %v832
    %v847 = vpack.c.b16 %v835, %v833
    %v848 = vpack.c.b16 %v838, %v836
    %v849 = vpack.c.b16 %v839, %v837
    %v850 = vpack.c.b16 %v842, %v840
    %v851 = vpack.c.b16 %v843, %v841
    %v892 = vunpack.c.l.b16 %v796
    %v893 = vunpack.c.h.b16 %v796
    %v894 = vunpack.c.l.b16 %v797
    %v895 = vunpack.c.h.b16 %v797
    %v896 = vunpack.c.l.b16 %v798
    %v897 = vunpack.c.h.b16 %v798
    %v898 = vunpack.c.l.b16 %v799
    %v899 = vunpack.c.h.b16 %v799
    %v900 = vunpack.c.l.b16 %v800
    %v901 = vunpack.c.h.b16 %v800
    %v902 = vunpack.c.l.b16 %v801
    %v903 = vunpack.c.h.b16 %v801
    %v904 = vunpack.c.l.b16 %v802
    %v905 = vunpack.c.h.b16 %v802
    %v906 = vunpack.c.l.b16 %v803
    %v907 = vunpack.c.h.b16 %v803
    %v908 = vunpack.c.l.b16 %v804
    %v909 = vunpack.c.h.b16 %v804
    %v910 = vunpack.c.l.b16 %v805
    %v911 = vunpack.c.h.b16 %v805
    %v912 = vunpack.c.l.b16 %v806
    %v913 = vunpack.c.h.b16 %v806
    %v914 = vunpack.c.l.b16 %v807
    %v915 = vunpack.c.h.b16 %v807
    %v916 = vunpack.c.l.b16 %v808
    %v917 = vunpack.c.h.b16 %v808
    %v918 = vunpack.c.l.b16 %v809
    %v919 = vunpack.c.h.b16 %v809
    %v920 = vunpack.c.l.b16 %v810
    %v921 = vunpack.c.h.b16 %v810
    %v922 = vunpack.c.l.b16 %v811
    %v923 = vunpack.c.h.b16 %v811
    %v924 = vunpack.c.l.b16 %v812
    %v925 = vunpack.c.h.b16 %v812
    %v926 = vunpack.c.l.b16 %v813
    %v927 = vunpack.c.h.b16 %v813
    %v928 = vunpack.c.l.b16 %v814
    %v929 = vunpack.c.h.b16 %v814
    %v930 = vunpack.c.l.b16 %v815
    %v931 = vunpack.c.h.b16 %v815
    %v932 = vunpack.c.l.b16 %v816
    %v933 = vunpack.c.h.b16 %v816
    %v934 = vunpack.c.l.b16 %v817
    %v935 = vunpack.c.h.b16 %v817
    %v936 = vunpack.c.l.b16 %v818
    %v937 = vunpack.c.h.b16 %v818
    %v938 = vunpack.c.l.b16 %v819
    %v939 = vunpack.c.h.b16 %v819
    %v940 = vunpack.c.l.b16 %v820
    %v941 = vunpack.c.h.b16 %v820
    %v942 = vunpack.c.l.b16 %v821
    %v943 = vunpack.c.h.b16 %v821
    %v944 = vunpack.c.l.b16 %v822
    %v945 = vunpack.c.h.b16 %v822
    %v946 = vunpack.c.l.b16 %v823
    %v947 = vunpack.c.h.b16 %v823
    %v948 = vunpack.c.l.b16 %v824
    %v949 = vunpack.c.h.b16 %v824
    %v950 = vunpack.c.l.b16 %v825
    %v951 = vunpack.c.h.b16 %v825
    %v952 = vunpack.c.l.b16 %v826
    %v953 = vunpack.c.h.b16 %v826
    %v954 = vunpack.c.l.b16 %v827
    %v955 = vunpack.c.h.b16 %v827
    %v956 = vpack.c.b16 %v894, %v892
    %v957 = vpack.c.b16 %v895, %v893
    %v958 = vpack.c.b16 %v898, %v896
    %v959 = vpack.c.b16 %v899, %v897
    %v960 = vpack.c.b16 %v902, %v900
    %v961 = vpack.c.b16 %v903, %v901
    %v962 = vpack.c.b16 %v906, %v904
    %v963 = vpack.c.b16 %v907, %v905
    %v964 = vpack.c.b16 %v910, %v908
    %v965 = vpack.c.b16 %v911, %v909
    %v966 = vpack.c.b16 %v914, %v912
    %v967 = vpack.c.b16 %v915, %v913
    %v968 = vpack.c.b16 %v918, %v916
    %v969 = vpack.c.b16 %v919, %v917
    %v970 = vpack.c.b16 %v922, %v920
    %v971 = vpack.c.b16 %v923, %v921
    %v972 = vpack.c.b16 %v926, %v924
    %v973 = vpack.c.b16 %v927, %v925
    %v974 = vpack.c.b16 %v930, %v928
    %v975 = vpack.c.b16 %v931, %v929
    %v976 = vpack.c.b16 %v934, %v932
    %v977 = vpack.c.b16 %v935, %v933
    %v978 = vpack.c.b16 %v938, %v936
    %v979 = vpack.c.b16 %v939, %v937
    %v980 = vpack.c.b16 %v942, %v940
    %v981 = vpack.c.b16 %v943, %v941
    %v982 = vpack.c.b16 %v946, %v944
    %v983 = vpack.c.b16 %v947, %v945
    %v984 = vpack.c.b16 %v950, %v948
    %v985 = vpack.c.b16 %v951, %v949
    %v986 = vpack.c.b16 %v954, %v952
    %v987 = vpack.c.b16 %v955, %v953
    %1020 = vmatpush.bf16.msra.mxu0 %v970
    %1021 = vmatpush.bf16.msra.mxu0 %v968
    %1022 = vmatpush.bf16.msra.mxu0 %v966
    %1023 = vmatpush.bf16.msra.mxu0 %v964
    %1024 = vmatpush.bf16.msra.mxu0 %v962
    %1025 = vmatpush.bf16.msra.mxu0 %v960
    %1026 = vmatpush.bf16.msra.mxu0 %v958
    %1027 = vmatpush.bf16.msra.mxu0 %v956
    %1028 = vmatmul.bf16.gmra.mxu0 %v844
    %v1029 = vpop.f32.mrf.mxu0
    %v1030 = vadd.f32 0.0, %v1029
    %v1031 = vpop.f32.mrf.mxu0
    %v1032 = vadd.f32 0.0, %v1031
    %1033 = vmatmul.bf16.gmra.mxu0 %v846
    %v1034 = vpop.f32.mrf.mxu0
    %v1035 = vadd.f32 0.0, %v1034
    %v1036 = vpop.f32.mrf.mxu0
    %v1037 = vadd.f32 0.0, %v1036
    %1038 = vmatmul.bf16.gmra.mxu0 %v848
    %v1039 = vpop.f32.mrf.mxu0
    %v1040 = vadd.f32 0.0, %v1039
    %v1041 = vpop.f32.mrf.mxu0
    %v1042 = vadd.f32 0.0, %v1041
    %1043 = vmatmul.bf16.gmra.mxu0 %v850
    %v1044 = vpop.f32.mrf.mxu0
    %v1045 = vadd.f32 0.0, %v1044
    %v1046 = vpop.f32.mrf.mxu0
    %v1047 = vadd.f32 0.0, %v1046
    %1048 = vdwg.mxu0
    %1049 = vmatpush.bf16.msra.mxu0 %v986
    %1050 = vmatpush.bf16.msra.mxu0 %v984
    %1051 = vmatpush.bf16.msra.mxu0 %v982
    %1052 = vmatpush.bf16.msra.mxu0 %v980
    %1053 = vmatpush.bf16.msra.mxu0 %v978
    %1054 = vmatpush.bf16.msra.mxu0 %v976
    %1055 = vmatpush.bf16.msra.mxu0 %v974
    %1056 = vmatpush.bf16.msra.mxu0 %v972
    %1057 = vmatmul.bf16.gmra.mxu0 %v845
    %v1058 = vpop.f32.mrf.mxu0
    %v1059 = vadd.f32 %v1030, %v1058
    %v1060 = vpop.f32.mrf.mxu0
    %v1061 = vadd.f32 %v1032, %v1060
    %1062 = vmatmul.bf16.gmra.mxu0 %v847
    %v1063 = vpop.f32.mrf.mxu0
    %v1064 = vadd.f32 %v1035, %v1063
    %v1065 = vpop.f32.mrf.mxu0
    %v1066 = vadd.f32 %v1037, %v1065
    %1067 = vmatmul.bf16.gmra.mxu0 %v849
    %v1068 = vpop.f32.mrf.mxu0
    %v1069 = vadd.f32 %v1040, %v1068
    %v1070 = vpop.f32.mrf.mxu0
    %v1071 = vadd.f32 %v1042, %v1070
    %1072 = vmatmul.bf16.gmra.mxu0 %v851
    %v1073 = vpop.f32.mrf.mxu0
    %v1074 = vadd.f32 %v1045, %v1073
    %v1075 = vpop.f32.mrf.mxu0
    %v1076 = vadd.f32 %v1047, %v1075
    %1077 = vdwg.mxu0
    %1078 = vmatpush.bf16.msra.mxu0 %v971
    %1079 = vmatpush.bf16.msra.mxu0 %v969
    %1080 = vmatpush.bf16.msra.mxu0 %v967
    %1081 = vmatpush.bf16.msra.mxu0 %v965
    %1082 = vmatpush.bf16.msra.mxu0 %v963
    %1083 = vmatpush.bf16.msra.mxu0 %v961
    %1084 = vmatpush.bf16.msra.mxu0 %v959
    %1085 = vmatpush.bf16.msra.mxu0 %v957
    %1086 = vmatmul.bf16.gmra.mxu0 %v844
    %v1087 = vpop.f32.mrf.mxu0
    %v1088 = vadd.f32 0.0, %v1087
    %v1089 = vpop.f32.mrf.mxu0
    %v1090 = vadd.f32 0.0, %v1089
    %1091 = vmatmul.bf16.gmra.mxu0 %v846
    %v1092 = vpop.f32.mrf.mxu0
    %v1093 = vadd.f32 0.0, %v1092
    %v1094 = vpop.f32.mrf.mxu0
    %v1095 = vadd.f32 0.0, %v1094
    %1096 = vmatmul.bf16.gmra.mxu0 %v848
    %v1097 = vpop.f32.mrf.mxu0
    %v1098 = vadd.f32 0.0, %v1097
    %v1099 = vpop.f32.mrf.mxu0
    %v1100 = vadd.f32 0.0, %v1099
    %1101 = vmatmul.bf16.gmra.mxu0 %v850
    %v1102 = vpop.f32.mrf.mxu0
    %v1103 = vadd.f32 0.0, %v1102
    %v1104 = vpop.f32.mrf.mxu0
    %v1105 = vadd.f32 0.0, %v1104
    %1106 = vdwg.mxu0
    %1107 = vmatpush.bf16.msra.mxu0 %v987
    %1108 = vmatpush.bf16.msra.mxu0 %v985
    %1109 = vmatpush.bf16.msra.mxu0 %v983
    %1110 = vmatpush.bf16.msra.mxu0 %v981
    %1111 = vmatpush.bf16.msra.mxu0 %v979
    %1112 = vmatpush.bf16.msra.mxu0 %v977
    %1113 = vmatpush.bf16.msra.mxu0 %v975
    %1114 = vmatpush.bf16.msra.mxu0 %v973
    %1115 = vmatmul.bf16.gmra.mxu0 %v845
    %v1116 = vpop.f32.mrf.mxu0
    %v1117 = vadd.f32 %v1088, %v1116
    %v1118 = vpop.f32.mrf.mxu0
    %v1119 = vadd.f32 %v1090, %v1118
    %1120 = vmatmul.bf16.gmra.mxu0 %v847
    %v1121 = vpop.f32.mrf.mxu0
    %v1122 = vadd.f32 %v1093, %v1121
    %v1123 = vpop.f32.mrf.mxu0
    %v1124 = vadd.f32 %v1095, %v1123
    %1125 = vmatmul.bf16.gmra.mxu0 %v849
    %v1126 = vpop.f32.mrf.mxu0
    %v1127 = vadd.f32 %v1098, %v1126
    %v1128 = vpop.f32.mrf.mxu0
    %v1129 = vadd.f32 %v1100, %v1128
    %1130 = vmatmul.bf16.gmra.mxu0 %v851
    %v1131 = vpop.f32.mrf.mxu0
    %v1132 = vadd.f32 %v1103, %v1131
    %v1133 = vpop.f32.mrf.mxu0
    %v1134 = vadd.f32 %v1105, %v1133
    %1135 = vdwg.mxu0
    %v1168 = vunpack.c.l.b16 %v763
    %v1169 = vunpack.c.h.b16 %v763
    %v1170 = vunpack.c.l.b16 %v764
    %v1171 = vunpack.c.h.b16 %v764
    %v1172 = vunpack.c.l.b16 %v765
    %v1173 = vunpack.c.h.b16 %v765
    %v1174 = vunpack.c.l.b16 %v766
    %v1175 = vunpack.c.h.b16 %v766
    %v1176 = vunpack.c.l.b16 %v767
    %v1177 = vunpack.c.h.b16 %v767
    %v1178 = vunpack.c.l.b16 %v768
    %v1179 = vunpack.c.h.b16 %v768
    %v1180 = vunpack.c.l.b16 %v769
    %v1181 = vunpack.c.h.b16 %v769
    %v1182 = vunpack.c.l.b16 %v770
    %v1183 = vunpack.c.h.b16 %v770
    %v1184 = vunpack.c.l.b16 %v771
    %v1185 = vunpack.c.h.b16 %v771
    %v1186 = vunpack.c.l.b16 %v772
    %v1187 = vunpack.c.h.b16 %v772
    %v1188 = vunpack.c.l.b16 %v773
    %v1189 = vunpack.c.h.b16 %v773
    %v1190 = vunpack.c.l.b16 %v774
    %v1191 = vunpack.c.h.b16 %v774
    %v1192 = vunpack.c.l.b16 %v775
    %v1193 = vunpack.c.h.b16 %v775
    %v1194 = vunpack.c.l.b16 %v776
    %v1195 = vunpack.c.h.b16 %v776
    %v1196 = vunpack.c.l.b16 %v777
    %v1197 = vunpack.c.h.b16 %v777
    %v1198 = vunpack.c.l.b16 %v778
    %v1199 = vunpack.c.h.b16 %v778
    %v1200 = vunpack.c.l.b16 %v779
    %v1201 = vunpack.c.h.b16 %v779
    %v1202 = vunpack.c.l.b16 %v780
    %v1203 = vunpack.c.h.b16 %v780
    %v1204 = vunpack.c.l.b16 %v781
    %v1205 = vunpack.c.h.b16 %v781
    %v1206 = vunpack.c.l.b16 %v782
    %v1207 = vunpack.c.h.b16 %v782
    %v1208 = vunpack.c.l.b16 %v783
    %v1209 = vunpack.c.h.b16 %v783
    %v1210 = vunpack.c.l.b16 %v784
    %v1211 = vunpack.c.h.b16 %v784
    %v1212 = vunpack.c.l.b16 %v785
    %v1213 = vunpack.c.h.b16 %v785
    %v1214 = vunpack.c.l.b16 %v786
    %v1215 = vunpack.c.h.b16 %v786
    %v1216 = vunpack.c.l.b16 %v787
    %v1217 = vunpack.c.h.b16 %v787
    %v1218 = vunpack.c.l.b16 %v788
    %v1219 = vunpack.c.h.b16 %v788
    %v1220 = vunpack.c.l.b16 %v789
    %v1221 = vunpack.c.h.b16 %v789
    %v1222 = vunpack.c.l.b16 %v790
    %v1223 = vunpack.c.h.b16 %v790
    %v1224 = vunpack.c.l.b16 %v791
    %v1225 = vunpack.c.h.b16 %v791
    %v1226 = vunpack.c.l.b16 %v792
    %v1227 = vunpack.c.h.b16 %v792
    %v1228 = vunpack.c.l.b16 %v793
    %v1229 = vunpack.c.h.b16 %v793
    %v1230 = vunpack.c.l.b16 %v794
    %v1231 = vunpack.c.h.b16 %v794
    %v1232 = vpack.c.b16 %v1170, %v1168
    %v1233 = vpack.c.b16 %v1171, %v1169
    %v1234 = vpack.c.b16 %v1174, %v1172
    %v1235 = vpack.c.b16 %v1175, %v1173
    %v1236 = vpack.c.b16 %v1178, %v1176
    %v1237 = vpack.c.b16 %v1179, %v1177
    %v1238 = vpack.c.b16 %v1182, %v1180
    %v1239 = vpack.c.b16 %v1183, %v1181
    %v1240 = vpack.c.b16 %v1186, %v1184
    %v1241 = vpack.c.b16 %v1187, %v1185
    %v1242 = vpack.c.b16 %v1190, %v1188
    %v1243 = vpack.c.b16 %v1191, %v1189
    %v1244 = vpack.c.b16 %v1194, %v1192
    %v1245 = vpack.c.b16 %v1195, %v1193
    %v1246 = vpack.c.b16 %v1198, %v1196
    %v1247 = vpack.c.b16 %v1199, %v1197
    %v1248 = vpack.c.b16 %v1202, %v1200
    %v1249 = vpack.c.b16 %v1203, %v1201
    %v1250 = vpack.c.b16 %v1206, %v1204
    %v1251 = vpack.c.b16 %v1207, %v1205
    %v1252 = vpack.c.b16 %v1210, %v1208
    %v1253 = vpack.c.b16 %v1211, %v1209
    %v1254 = vpack.c.b16 %v1214, %v1212
    %v1255 = vpack.c.b16 %v1215, %v1213
    %v1256 = vpack.c.b16 %v1218, %v1216
    %v1257 = vpack.c.b16 %v1219, %v1217
    %v1258 = vpack.c.b16 %v1222, %v1220
    %v1259 = vpack.c.b16 %v1223, %v1221
    %v1260 = vpack.c.b16 %v1226, %v1224
    %v1261 = vpack.c.b16 %v1227, %v1225
    %v1262 = vpack.c.b16 %v1230, %v1228
    %v1263 = vpack.c.b16 %v1231, %v1229
    %1296 = vmatpush.bf16.msra.mxu0 %v1246
    %1297 = vmatpush.bf16.msra.mxu0 %v1244
    %1298 = vmatpush.bf16.msra.mxu0 %v1242
    %1299 = vmatpush.bf16.msra.mxu0 %v1240
    %1300 = vmatpush.bf16.msra.mxu0 %v1238
    %1301 = vmatpush.bf16.msra.mxu0 %v1236
    %1302 = vmatpush.bf16.msra.mxu0 %v1234
    %1303 = vmatpush.bf16.msra.mxu0 %v1232
    %1304 = vmatmul.bf16.gmra.mxu0 %v396
    %v1305 = vpop.f32.mrf.mxu0
    %v1306 = vadd.f32 %v1059, %v1305
    %v1307 = vpop.f32.mrf.mxu0
    %v1308 = vadd.f32 %v1061, %v1307
    %1309 = vmatmul.bf16.gmra.mxu0 %v398
    %v1310 = vpop.f32.mrf.mxu0
    %v1311 = vadd.f32 %v1064, %v1310
    %v1312 = vpop.f32.mrf.mxu0
    %v1313 = vadd.f32 %v1066, %v1312
    %1314 = vmatmul.bf16.gmra.mxu0 %v400
    %v1315 = vpop.f32.mrf.mxu0
    %v1316 = vadd.f32 %v1069, %v1315
    %v1317 = vpop.f32.mrf.mxu0
    %v1318 = vadd.f32 %v1071, %v1317
    %1319 = vmatmul.bf16.gmra.mxu0 %v402
    %v1320 = vpop.f32.mrf.mxu0
    %v1321 = vadd.f32 %v1074, %v1320
    %v1322 = vpop.f32.mrf.mxu0
    %v1323 = vadd.f32 %v1076, %v1322
    %1324 = vdwg.mxu0
    %1325 = vmatpush.bf16.msra.mxu0 %v1262
    %1326 = vmatpush.bf16.msra.mxu0 %v1260
    %1327 = vmatpush.bf16.msra.mxu0 %v1258
    %1328 = vmatpush.bf16.msra.mxu0 %v1256
    %1329 = vmatpush.bf16.msra.mxu0 %v1254
    %1330 = vmatpush.bf16.msra.mxu0 %v1252
    %1331 = vmatpush.bf16.msra.mxu0 %v1250
    %1332 = vmatpush.bf16.msra.mxu0 %v1248
    %1333 = vmatmul.bf16.gmra.mxu0 %v397
    %v1334 = vpop.f32.mrf.mxu0
    %v1335 = vadd.f32 %v1306, %v1334
    %v1336 = vpop.f32.mrf.mxu0
    %v1337 = vadd.f32 %v1308, %v1336
    %1338 = vmatmul.bf16.gmra.mxu0 %v399
    %v1339 = vpop.f32.mrf.mxu0
    %v1340 = vadd.f32 %v1311, %v1339
    %v1341 = vpop.f32.mrf.mxu0
    %v1342 = vadd.f32 %v1313, %v1341
    %1343 = vmatmul.bf16.gmra.mxu0 %v401
    %v1344 = vpop.f32.mrf.mxu0
    %v1345 = vadd.f32 %v1316, %v1344
    %v1346 = vpop.f32.mrf.mxu0
    %v1347 = vadd.f32 %v1318, %v1346
    %1348 = vmatmul.bf16.gmra.mxu0 %v403
    %v1349 = vpop.f32.mrf.mxu0
    %v1350 = vadd.f32 %v1321, %v1349
    %v1351 = vpop.f32.mrf.mxu0
    %v1352 = vadd.f32 %v1323, %v1351
    %1353 = vdwg.mxu0
    %1354 = vmatpush.bf16.msra.mxu0 %v1247
    %1355 = vmatpush.bf16.msra.mxu0 %v1245
    %1356 = vmatpush.bf16.msra.mxu0 %v1243
    %1357 = vmatpush.bf16.msra.mxu0 %v1241
    %1358 = vmatpush.bf16.msra.mxu0 %v1239
    %1359 = vmatpush.bf16.msra.mxu0 %v1237
    %1360 = vmatpush.bf16.msra.mxu0 %v1235
    %1361 = vmatpush.bf16.msra.mxu0 %v1233
    %1362 = vmatmul.bf16.gmra.mxu0 %v396
    %v1363 = vpop.f32.mrf.mxu0
    %v1364 = vadd.f32 %v1117, %v1363
    %v1365 = vpop.f32.mrf.mxu0
    %v1366 = vadd.f32 %v1119, %v1365
    %1367 = vmatmul.bf16.gmra.mxu0 %v398
    %v1368 = vpop.f32.mrf.mxu0
    %v1369 = vadd.f32 %v1122, %v1368
    %v1370 = vpop.f32.mrf.mxu0
    %v1371 = vadd.f32 %v1124, %v1370
    %1372 = vmatmul.bf16.gmra.mxu0 %v400
    %v1373 = vpop.f32.mrf.mxu0
    %v1374 = vadd.f32 %v1127, %v1373
    %v1375 = vpop.f32.mrf.mxu0
    %v1376 = vadd.f32 %v1129, %v1375
    %1377 = vmatmul.bf16.gmra.mxu0 %v402
    %v1378 = vpop.f32.mrf.mxu0
    %v1379 = vadd.f32 %v1132, %v1378
    %v1380 = vpop.f32.mrf.mxu0
    %v1381 = vadd.f32 %v1134, %v1380
    %1382 = vdwg.mxu0
    %1383 = vmatpush.bf16.msra.mxu0 %v1263
    %1384 = vmatpush.bf16.msra.mxu0 %v1261
    %1385 = vmatpush.bf16.msra.mxu0 %v1259
    %1386 = vmatpush.bf16.msra.mxu0 %v1257
    %1387 = vmatpush.bf16.msra.mxu0 %v1255
    %1388 = vmatpush.bf16.msra.mxu0 %v1253
    %1389 = vmatpush.bf16.msra.mxu0 %v1251
    %1390 = vmatpush.bf16.msra.mxu0 %v1249
    %1391 = vmatmul.bf16.gmra.mxu0 %v397
    %v1392 = vpop.f32.mrf.mxu0
    %v1393 = vadd.f32 %v1364, %v1392
    %v1394 = vpop.f32.mrf.mxu0
    %v1395 = vadd.f32 %v1366, %v1394
    %1396 = vmatmul.bf16.gmra.mxu0 %v399
    %v1397 = vpop.f32.mrf.mxu0
    %v1398 = vadd.f32 %v1369, %v1397
    %v1399 = vpop.f32.mrf.mxu0
    %v1400 = vadd.f32 %v1371, %v1399
    %1401 = vmatmul.bf16.gmra.mxu0 %v401
    %v1402 = vpop.f32.mrf.mxu0
    %v1403 = vadd.f32 %v1374, %v1402
    %v1404 = vpop.f32.mrf.mxu0
    %v1405 = vadd.f32 %v1376, %v1404
    %1406 = vmatmul.bf16.gmra.mxu0 %v403
    %v1407 = vpop.f32.mrf.mxu0
    %v1408 = vadd.f32 %v1379, %v1407
    %v1409 = vpop.f32.mrf.mxu0
    %v1410 = vadd.f32 %v1381, %v1409
    %1411 = vdwg.mxu0
    %v1412 = vmul.f32 %v1335, %v689
    %v1413 = vmul.f32 %v1393, %v690
    %v1414 = vmul.f32 %v1337, %v689
    %v1415 = vmul.f32 %v1395, %v690
    %v1416 = vmul.f32 %v1340, %v689
    %v1417 = vmul.f32 %v1398, %v690
    %v1418 = vmul.f32 %v1342, %v689
    %v1419 = vmul.f32 %v1400, %v690
    %v1420 = vmul.f32 %v1345, %v689
    %v1421 = vmul.f32 %v1403, %v690
    %v1422 = vmul.f32 %v1347, %v689
    %v1423 = vmul.f32 %v1405, %v690
    %v1424 = vmul.f32 %v1350, %v689
    %v1425 = vmul.f32 %v1408, %v690
    %v1426 = vmul.f32 %v1352, %v689
    %v1427 = vmul.f32 %v1410, %v690
    %v1428 = vadd.f32 %v1412, %v710
    %v1429 = vadd.f32 %v1413, %v711
    %v1430 = vadd.f32 %v1414, %v710
    %v1431 = vadd.f32 %v1415, %v711
    %v1432 = vadd.f32 %v1416, %v710
    %v1433 = vadd.f32 %v1417, %v711
    %v1434 = vadd.f32 %v1418, %v710
    %v1435 = vadd.f32 %v1419, %v711
    %v1436 = vadd.f32 %v1420, %v710
    %v1437 = vadd.f32 %v1421, %v711
    %v1438 = vadd.f32 %v1422, %v710
    %v1439 = vadd.f32 %v1423, %v711
    %v1440 = vadd.f32 %v1424, %v710
    %v1441 = vadd.f32 %v1425, %v711
    %v1442 = vadd.f32 %v1426, %v710
    %v1443 = vadd.f32 %v1427, %v711
    %v1444 = vmax.f32 %v1428, 0.0
    %v1445 = vmax.f32 %v1429, 0.0
    %v1446 = vmax.f32 %v1430, 0.0
    %v1447 = vmax.f32 %v1431, 0.0
    %v1448 = vmax.f32 %v1432, 0.0
    %v1449 = vmax.f32 %v1433, 0.0
    %v1450 = vmax.f32 %v1434, 0.0
    %v1451 = vmax.f32 %v1435, 0.0
    %v1452 = vmax.f32 %v1436, 0.0
    %v1453 = vmax.f32 %v1437, 0.0
    %v1454 = vmax.f32 %v1438, 0.0
    %v1455 = vmax.f32 %v1439, 0.0
    %v1456 = vmax.f32 %v1440, 0.0
    %v1457 = vmax.f32 %v1441, 0.0
    %v1458 = vmax.f32 %v1442, 0.0
    %v1459 = vmax.f32 %v1443, 0.0
    %v1460 = vpack.c.bf16 %v1445, %v1444
    %v1461 = vpack.c.bf16 %v1447, %v1446
    %v1462 = vpack.c.bf16 %v1449, %v1448
    %v1463 = vpack.c.bf16 %v1451, %v1450
    %v1464 = vpack.c.bf16 %v1453, %v1452
    %v1465 = vpack.c.bf16 %v1455, %v1454
    %v1466 = vpack.c.bf16 %v1457, %v1456
    %v1467 = vpack.c.bf16 %v1459, %v1458
    %1468 = vst [vmem:[#allocation10 + $0x8] sm:$0xff] %v1460
    %1469 = vst [vmem:[#allocation10 + $0x28] sm:$0xff] %v1461
    %1470 = vst [vmem:[#allocation10 + $0x48] sm:$0xff] %v1462
    %1471 = vst [vmem:[#allocation10 + $0x68] sm:$0xff] %v1463
    %1472 = vst [vmem:[#allocation10 + $0x88] sm:$0xff] %v1464
    %1473 = vst [vmem:[#allocation10 + $0xa8] sm:$0xff] %v1465
    %1474 = vst [vmem:[#allocation10 + $0xc8] sm:$0xff] %v1466
    %1475 = vst [vmem:[#allocation10 + $0xe8] sm:$0xff] %v1467
    %s1476 = scalar_lea.vmem [#allocation5], 256
    %v1477 = vld [vmem:[%s1476] sm:$0xff]
    %v1478 = vld [vmem:[%s1476 + $0x8] sm:$0xff]
    %v1479 = vld [vmem:[%s1476 + $0x10] sm:$0xff]
    %v1480 = vld [vmem:[%s1476 + $0x18] sm:$0xff]
    %v1481 = vld [vmem:[%s1476 + $0x20] sm:$0xff]
    %v1482 = vld [vmem:[%s1476 + $0x28] sm:$0xff]
    %v1483 = vld [vmem:[%s1476 + $0x30] sm:$0xff]
    %v1484 = vld [vmem:[%s1476 + $0x38] sm:$0xff]
    %v1485 = vld [vmem:[%s1476 + $0x40] sm:$0xff]
    %v1486 = vld [vmem:[%s1476 + $0x48] sm:$0xff]
    %v1487 = vld [vmem:[%s1476 + $0x50] sm:$0xff]
    %v1488 = vld [vmem:[%s1476 + $0x58] sm:$0xff]
    %v1489 = vld [vmem:[%s1476 + $0x60] sm:$0xff]
    %v1490 = vld [vmem:[%s1476 + $0x68] sm:$0xff]
    %v1491 = vld [vmem:[%s1476 + $0x70] sm:$0xff]
    %v1492 = vld [vmem:[%s1476 + $0x78] sm:$0xff]
    %v1493 = vld [vmem:[%s1476 + $0x80] sm:$0xff]
    %v1494 = vld [vmem:[%s1476 + $0x88] sm:$0xff]
    %v1495 = vld [vmem:[%s1476 + $0x90] sm:$0xff]
    %v1496 = vld [vmem:[%s1476 + $0x98] sm:$0xff]
    %v1497 = vld [vmem:[%s1476 + $0xa0] sm:$0xff]
    %v1498 = vld [vmem:[%s1476 + $0xa8] sm:$0xff]
    %v1499 = vld [vmem:[%s1476 + $0xb0] sm:$0xff]
    %v1500 = vld [vmem:[%s1476 + $0xb8] sm:$0xff]
    %v1501 = vld [vmem:[%s1476 + $0xc0] sm:$0xff]
    %v1502 = vld [vmem:[%s1476 + $0xc8] sm:$0xff]
    %v1503 = vld [vmem:[%s1476 + $0xd0] sm:$0xff]
    %v1504 = vld [vmem:[%s1476 + $0xd8] sm:$0xff]
    %v1505 = vld [vmem:[%s1476 + $0xe0] sm:$0xff]
    %v1506 = vld [vmem:[%s1476 + $0xe8] sm:$0xff]
    %v1507 = vld [vmem:[%s1476 + $0xf0] sm:$0xff]
    %v1508 = vld [vmem:[%s1476 + $0xf8] sm:$0xff]
    %s1509 = scalar_lea.vmem [#allocation5], 1792
    %v1510 = vld [vmem:[%s1509] sm:$0xff]
    %v1511 = vld [vmem:[%s1509 + $0x8] sm:$0xff]
    %v1512 = vld [vmem:[%s1509 + $0x10] sm:$0xff]
    %v1513 = vld [vmem:[%s1509 + $0x18] sm:$0xff]
    %v1514 = vld [vmem:[%s1509 + $0x20] sm:$0xff]
    %v1515 = vld [vmem:[%s1509 + $0x28] sm:$0xff]
    %v1516 = vld [vmem:[%s1509 + $0x30] sm:$0xff]
    %v1517 = vld [vmem:[%s1509 + $0x38] sm:$0xff]
    %v1518 = vld [vmem:[%s1509 + $0x40] sm:$0xff]
    %v1519 = vld [vmem:[%s1509 + $0x48] sm:$0xff]
    %v1520 = vld [vmem:[%s1509 + $0x50] sm:$0xff]
    %v1521 = vld [vmem:[%s1509 + $0x58] sm:$0xff]
    %v1522 = vld [vmem:[%s1509 + $0x60] sm:$0xff]
    %v1523 = vld [vmem:[%s1509 + $0x68] sm:$0xff]
    %v1524 = vld [vmem:[%s1509 + $0x70] sm:$0xff]
    %v1525 = vld [vmem:[%s1509 + $0x78] sm:$0xff]
    %v1526 = vld [vmem:[%s1509 + $0x80] sm:$0xff]
    %v1527 = vld [vmem:[%s1509 + $0x88] sm:$0xff]
    %v1528 = vld [vmem:[%s1509 + $0x90] sm:$0xff]
    %v1529 = vld [vmem:[%s1509 + $0x98] sm:$0xff]
    %v1530 = vld [vmem:[%s1509 + $0xa0] sm:$0xff]
    %v1531 = vld [vmem:[%s1509 + $0xa8] sm:$0xff]
    %v1532 = vld [vmem:[%s1509 + $0xb0] sm:$0xff]
    %v1533 = vld [vmem:[%s1509 + $0xb8] sm:$0xff]
    %v1534 = vld [vmem:[%s1509 + $0xc0] sm:$0xff]
    %v1535 = vld [vmem:[%s1509 + $0xc8] sm:$0xff]
    %v1536 = vld [vmem:[%s1509 + $0xd0] sm:$0xff]
    %v1537 = vld [vmem:[%s1509 + $0xd8] sm:$0xff]
    %v1538 = vld [vmem:[%s1509 + $0xe0] sm:$0xff]
    %v1539 = vld [vmem:[%s1509 + $0xe8] sm:$0xff]
    %v1540 = vld [vmem:[%s1509 + $0xf0] sm:$0xff]
    %v1541 = vld [vmem:[%s1509 + $0xf8] sm:$0xff]
    %v1550 = vunpack.c.l.b16 %v211
    %v1551 = vunpack.c.h.b16 %v211
    %v1552 = vunpack.c.l.b16 %v212
    %v1553 = vunpack.c.h.b16 %v212
    %v1554 = vunpack.c.l.b16 %v213
    %v1555 = vunpack.c.h.b16 %v213
    %v1556 = vunpack.c.l.b16 %v214
    %v1557 = vunpack.c.h.b16 %v214
    %v1558 = vunpack.c.l.b16 %v215
    %v1559 = vunpack.c.h.b16 %v215
    %v1560 = vunpack.c.l.b16 %v216
    %v1561 = vunpack.c.h.b16 %v216
    %v1562 = vunpack.c.l.b16 %v217
    %v1563 = vunpack.c.h.b16 %v217
    %v1564 = vunpack.c.l.b16 %v218
    %v1565 = vunpack.c.h.b16 %v218
    %v1566 = vpack.c.b16 %v1552, %v1550
    %v1567 = vpack.c.b16 %v1553, %v1551
    %v1568 = vpack.c.b16 %v1556, %v1554
    %v1569 = vpack.c.b16 %v1557, %v1555
    %v1570 = vpack.c.b16 %v1560, %v1558
    %v1571 = vpack.c.b16 %v1561, %v1559
    %v1572 = vpack.c.b16 %v1564, %v1562
    %v1573 = vpack.c.b16 %v1565, %v1563
    %v1614 = vunpack.c.l.b16 %v1510
    %v1615 = vunpack.c.h.b16 %v1510
    %v1616 = vunpack.c.l.b16 %v1511
    %v1617 = vunpack.c.h.b16 %v1511
    %v1618 = vunpack.c.l.b16 %v1512
    %v1619 = vunpack.c.h.b16 %v1512
    %v1620 = vunpack.c.l.b16 %v1513
    %v1621 = vunpack.c.h.b16 %v1513
    %v1622 = vunpack.c.l.b16 %v1514
    %v1623 = vunpack.c.h.b16 %v1514
    %v1624 = vunpack.c.l.b16 %v1515
    %v1625 = vunpack.c.h.b16 %v1515
    %v1626 = vunpack.c.l.b16 %v1516
    %v1627 = vunpack.c.h.b16 %v1516
    %v1628 = vunpack.c.l.b16 %v1517
    %v1629 = vunpack.c.h.b16 %v1517
    %v1630 = vunpack.c.l.b16 %v1518
    %v1631 = vunpack.c.h.b16 %v1518
    %v1632 = vunpack.c.l.b16 %v1519
    %v1633 = vunpack.c.h.b16 %v1519
    %v1634 = vunpack.c.l.b16 %v1520
    %v1635 = vunpack.c.h.b16 %v1520
    %v1636 = vunpack.c.l.b16 %v1521
    %v1637 = vunpack.c.h.b16 %v1521
    %v1638 = vunpack.c.l.b16 %v1522
    %v1639 = vunpack.c.h.b16 %v1522
    %v1640 = vunpack.c.l.b16 %v1523
    %v1641 = vunpack.c.h.b16 %v1523
    %v1642 = vunpack.c.l.b16 %v1524
    %v1643 = vunpack.c.h.b16 %v1524
    %v1644 = vunpack.c.l.b16 %v1525
    %v1645 = vunpack.c.h.b16 %v1525
    %v1646 = vunpack.c.l.b16 %v1526
    %v1647 = vunpack.c.h.b16 %v1526
    %v1648 = vunpack.c.l.b16 %v1527
    %v1649 = vunpack.c.h.b16 %v1527
    %v1650 = vunpack.c.l.b16 %v1528
    %v1651 = vunpack.c.h.b16 %v1528
    %v1652 = vunpack.c.l.b16 %v1529
    %v1653 = vunpack.c.h.b16 %v1529
    %v1654 = vunpack.c.l.b16 %v1530
    %v1655 = vunpack.c.h.b16 %v1530
    %v1656 = vunpack.c.l.b16 %v1531
    %v1657 = vunpack.c.h.b16 %v1531
    %v1658 = vunpack.c.l.b16 %v1532
    %v1659 = vunpack.c.h.b16 %v1532
    %v1660 = vunpack.c.l.b16 %v1533
    %v1661 = vunpack.c.h.b16 %v1533
    %v1662 = vunpack.c.l.b16 %v1534
    %v1663 = vunpack.c.h.b16 %v1534
    %v1664 = vunpack.c.l.b16 %v1535
    %v1665 = vunpack.c.h.b16 %v1535
    %v1666 = vunpack.c.l.b16 %v1536
    %v1667 = vunpack.c.h.b16 %v1536
    %v1668 = vunpack.c.l.b16 %v1537
    %v1669 = vunpack.c.h.b16 %v1537
    %v1670 = vunpack.c.l.b16 %v1538
    %v1671 = vunpack.c.h.b16 %v1538
    %v1672 = vunpack.c.l.b16 %v1539
    %v1673 = vunpack.c.h.b16 %v1539
    %v1674 = vunpack.c.l.b16 %v1540
    %v1675 = vunpack.c.h.b16 %v1540
    %v1676 = vunpack.c.l.b16 %v1541
    %v1677 = vunpack.c.h.b16 %v1541
    %v1678 = vpack.c.b16 %v1616, %v1614
    %v1679 = vpack.c.b16 %v1617, %v1615
    %v1680 = vpack.c.b16 %v1620, %v1618
    %v1681 = vpack.c.b16 %v1621, %v1619
    %v1682 = vpack.c.b16 %v1624, %v1622
    %v1683 = vpack.c.b16 %v1625, %v1623
    %v1684 = vpack.c.b16 %v1628, %v1626
    %v1685 = vpack.c.b16 %v1629, %v1627
    %v1686 = vpack.c.b16 %v1632, %v1630
    %v1687 = vpack.c.b16 %v1633, %v1631
    %v1688 = vpack.c.b16 %v1636, %v1634
    %v1689 = vpack.c.b16 %v1637, %v1635
    %v1690 = vpack.c.b16 %v1640, %v1638
    %v1691 = vpack.c.b16 %v1641, %v1639
    %v1692 = vpack.c.b16 %v1644, %v1642
    %v1693 = vpack.c.b16 %v1645, %v1643
    %v1694 = vpack.c.b16 %v1648, %v1646
    %v1695 = vpack.c.b16 %v1649, %v1647
    %v1696 = vpack.c.b16 %v1652, %v1650
    %v1697 = vpack.c.b16 %v1653, %v1651
    %v1698 = vpack.c.b16 %v1656, %v1654
    %v1699 = vpack.c.b16 %v1657, %v1655
    %v1700 = vpack.c.b16 %v1660, %v1658
    %v1701 = vpack.c.b16 %v1661, %v1659
    %v1702 = vpack.c.b16 %v1664, %v1662
    %v1703 = vpack.c.b16 %v1665, %v1663
    %v1704 = vpack.c.b16 %v1668, %v1666
    %v1705 = vpack.c.b16 %v1669, %v1667
    %v1706 = vpack.c.b16 %v1672, %v1670
    %v1707 = vpack.c.b16 %v1673, %v1671
    %v1708 = vpack.c.b16 %v1676, %v1674
    %v1709 = vpack.c.b16 %v1677, %v1675
    %1742 = vmatpush.bf16.msra.mxu0 %v1692
    %1743 = vmatpush.bf16.msra.mxu0 %v1690
    %1744 = vmatpush.bf16.msra.mxu0 %v1688
    %1745 = vmatpush.bf16.msra.mxu0 %v1686
    %1746 = vmatpush.bf16.msra.mxu0 %v1684
    %1747 = vmatpush.bf16.msra.mxu0 %v1682
    %1748 = vmatpush.bf16.msra.mxu0 %v1680
    %1749 = vmatpush.bf16.msra.mxu0 %v1678
    %1750 = vmatmul.bf16.gmra.mxu0 %v1566
    %v1751 = vpop.f32.mrf.mxu0
    %v1752 = vadd.f32 0.0, %v1751
    %v1753 = vpop.f32.mrf.mxu0
    %v1754 = vadd.f32 0.0, %v1753
    %1755 = vmatmul.bf16.gmra.mxu0 %v1568
    %v1756 = vpop.f32.mrf.mxu0
    %v1757 = vadd.f32 0.0, %v1756
    %v1758 = vpop.f32.mrf.mxu0
    %v1759 = vadd.f32 0.0, %v1758
    %1760 = vmatmul.bf16.gmra.mxu0 %v1570
    %v1761 = vpop.f32.mrf.mxu0
    %v1762 = vadd.f32 0.0, %v1761
    %v1763 = vpop.f32.mrf.mxu0
    %v1764 = vadd.f32 0.0, %v1763
    %1765 = vmatmul.bf16.gmra.mxu0 %v1572
    %v1766 = vpop.f32.mrf.mxu0
    %v1767 = vadd.f32 0.0, %v1766
    %v1768 = vpop.f32.mrf.mxu0
    %v1769 = vadd.f32 0.0, %v1768
    %1770 = vdwg.mxu0
    %1771 = vmatpush.bf16.msra.mxu0 %v1708
    %1772 = vmatpush.bf16.msra.mxu0 %v1706
    %1773 = vmatpush.bf16.msra.mxu0 %v1704
    %1774 = vmatpush.bf16.msra.mxu0 %v1702
    %1775 = vmatpush.bf16.msra.mxu0 %v1700
    %1776 = vmatpush.bf16.msra.mxu0 %v1698
    %1777 = vmatpush.bf16.msra.mxu0 %v1696
    %1778 = vmatpush.bf16.msra.mxu0 %v1694
    %1779 = vmatmul.bf16.gmra.mxu0 %v1567
    %v1780 = vpop.f32.mrf.mxu0
    %v1781 = vadd.f32 %v1752, %v1780
    %v1782 = vpop.f32.mrf.mxu0
    %v1783 = vadd.f32 %v1754, %v1782
    %1784 = vmatmul.bf16.gmra.mxu0 %v1569
    %v1785 = vpop.f32.mrf.mxu0
    %v1786 = vadd.f32 %v1757, %v1785
    %v1787 = vpop.f32.mrf.mxu0
    %v1788 = vadd.f32 %v1759, %v1787
    %1789 = vmatmul.bf16.gmra.mxu0 %v1571
    %v1790 = vpop.f32.mrf.mxu0
    %v1791 = vadd.f32 %v1762, %v1790
    %v1792 = vpop.f32.mrf.mxu0
    %v1793 = vadd.f32 %v1764, %v1792
    %1794 = vmatmul.bf16.gmra.mxu0 %v1573
    %v1795 = vpop.f32.mrf.mxu0
    %v1796 = vadd.f32 %v1767, %v1795
    %v1797 = vpop.f32.mrf.mxu0
    %v1798 = vadd.f32 %v1769, %v1797
    %1799 = vdwg.mxu0
    %1800 = vmatpush.bf16.msra.mxu0 %v1693
    %1801 = vmatpush.bf16.msra.mxu0 %v1691
    %1802 = vmatpush.bf16.msra.mxu0 %v1689
    %1803 = vmatpush.bf16.msra.mxu0 %v1687
    %1804 = vmatpush.bf16.msra.mxu0 %v1685
    %1805 = vmatpush.bf16.msra.mxu0 %v1683
    %1806 = vmatpush.bf16.msra.mxu0 %v1681
    %1807 = vmatpush.bf16.msra.mxu0 %v1679
    %1808 = vmatmul.bf16.gmra.mxu0 %v1566
    %v1809 = vpop.f32.mrf.mxu0
    %v1810 = vadd.f32 0.0, %v1809
    %v1811 = vpop.f32.mrf.mxu0
    %v1812 = vadd.f32 0.0, %v1811
    %1813 = vmatmul.bf16.gmra.mxu0 %v1568
    %v1814 = vpop.f32.mrf.mxu0
    %v1815 = vadd.f32 0.0, %v1814
    %v1816 = vpop.f32.mrf.mxu0
    %v1817 = vadd.f32 0.0, %v1816
    %1818 = vmatmul.bf16.gmra.mxu0 %v1570
    %v1819 = vpop.f32.mrf.mxu0
    %v1820 = vadd.f32 0.0, %v1819
    %v1821 = vpop.f32.mrf.mxu0
    %v1822 = vadd.f32 0.0, %v1821
    %1823 = vmatmul.bf16.gmra.mxu0 %v1572
    %v1824 = vpop.f32.mrf.mxu0
    %v1825 = vadd.f32 0.0, %v1824
    %v1826 = vpop.f32.mrf.mxu0
    %v1827 = vadd.f32 0.0, %v1826
    %1828 = vdwg.mxu0
    %1829 = vmatpush.bf16.msra.mxu0 %v1709
    %1830 = vmatpush.bf16.msra.mxu0 %v1707
    %1831 = vmatpush.bf16.msra.mxu0 %v1705
    %1832 = vmatpush.bf16.msra.mxu0 %v1703
    %1833 = vmatpush.bf16.msra.mxu0 %v1701
    %1834 = vmatpush.bf16.msra.mxu0 %v1699
    %1835 = vmatpush.bf16.msra.mxu0 %v1697
    %1836 = vmatpush.bf16.msra.mxu0 %v1695
    %1837 = vmatmul.bf16.gmra.mxu0 %v1567
    %v1838 = vpop.f32.mrf.mxu0
    %v1839 = vadd.f32 %v1810, %v1838
    %v1840 = vpop.f32.mrf.mxu0
    %v1841 = vadd.f32 %v1812, %v1840
    %1842 = vmatmul.bf16.gmra.mxu0 %v1569
    %v1843 = vpop.f32.mrf.mxu0
    %v1844 = vadd.f32 %v1815, %v1843
    %v1845 = vpop.f32.mrf.mxu0
    %v1846 = vadd.f32 %v1817, %v1845
    %1847 = vmatmul.bf16.gmra.mxu0 %v1571
    %v1848 = vpop.f32.mrf.mxu0
    %v1849 = vadd.f32 %v1820, %v1848
    %v1850 = vpop.f32.mrf.mxu0
    %v1851 = vadd.f32 %v1822, %v1850
    %1852 = vmatmul.bf16.gmra.mxu0 %v1573
    %v1853 = vpop.f32.mrf.mxu0
    %v1854 = vadd.f32 %v1825, %v1853
    %v1855 = vpop.f32.mrf.mxu0
    %v1856 = vadd.f32 %v1827, %v1855
    %1857 = vdwg.mxu0
    %v1890 = vunpack.c.l.b16 %v1477
    %v1891 = vunpack.c.h.b16 %v1477
    %v1892 = vunpack.c.l.b16 %v1478
    %v1893 = vunpack.c.h.b16 %v1478
    %v1894 = vunpack.c.l.b16 %v1479
    %v1895 = vunpack.c.h.b16 %v1479
    %v1896 = vunpack.c.l.b16 %v1480
    %v1897 = vunpack.c.h.b16 %v1480
    %v1898 = vunpack.c.l.b16 %v1481
    %v1899 = vunpack.c.h.b16 %v1481
    %v1900 = vunpack.c.l.b16 %v1482
    %v1901 = vunpack.c.h.b16 %v1482
    %v1902 = vunpack.c.l.b16 %v1483
    %v1903 = vunpack.c.h.b16 %v1483
    %v1904 = vunpack.c.l.b16 %v1484
    %v1905 = vunpack.c.h.b16 %v1484
    %v1906 = vunpack.c.l.b16 %v1485
    %v1907 = vunpack.c.h.b16 %v1485
    %v1908 = vunpack.c.l.b16 %v1486
    %v1909 = vunpack.c.h.b16 %v1486
    %v1910 = vunpack.c.l.b16 %v1487
    %v1911 = vunpack.c.h.b16 %v1487
    %v1912 = vunpack.c.l.b16 %v1488
    %v1913 = vunpack.c.h.b16 %v1488
    %v1914 = vunpack.c.l.b16 %v1489
    %v1915 = vunpack.c.h.b16 %v1489
    %v1916 = vunpack.c.l.b16 %v1490
    %v1917 = vunpack.c.h.b16 %v1490
    %v1918 = vunpack.c.l.b16 %v1491
    %v1919 = vunpack.c.h.b16 %v1491
    %v1920 = vunpack.c.l.b16 %v1492
    %v1921 = vunpack.c.h.b16 %v1492
    %v1922 = vunpack.c.l.b16 %v1493
    %v1923 = vunpack.c.h.b16 %v1493
    %v1924 = vunpack.c.l.b16 %v1494
    %v1925 = vunpack.c.h.b16 %v1494
    %v1926 = vunpack.c.l.b16 %v1495
    %v1927 = vunpack.c.h.b16 %v1495
    %v1928 = vunpack.c.l.b16 %v1496
    %v1929 = vunpack.c.h.b16 %v1496
    %v1930 = vunpack.c.l.b16 %v1497
    %v1931 = vunpack.c.h.b16 %v1497
    %v1932 = vunpack.c.l.b16 %v1498
    %v1933 = vunpack.c.h.b16 %v1498
    %v1934 = vunpack.c.l.b16 %v1499
    %v1935 = vunpack.c.h.b16 %v1499
    %v1936 = vunpack.c.l.b16 %v1500
    %v1937 = vunpack.c.h.b16 %v1500
    %v1938 = vunpack.c.l.b16 %v1501
    %v1939 = vunpack.c.h.b16 %v1501
    %v1940 = vunpack.c.l.b16 %v1502
    %v1941 = vunpack.c.h.b16 %v1502
    %v1942 = vunpack.c.l.b16 %v1503
    %v1943 = vunpack.c.h.b16 %v1503
    %v1944 = vunpack.c.l.b16 %v1504
    %v1945 = vunpack.c.h.b16 %v1504
    %v1946 = vunpack.c.l.b16 %v1505
    %v1947 = vunpack.c.h.b16 %v1505
    %v1948 = vunpack.c.l.b16 %v1506
    %v1949 = vunpack.c.h.b16 %v1506
    %v1950 = vunpack.c.l.b16 %v1507
    %v1951 = vunpack.c.h.b16 %v1507
    %v1952 = vunpack.c.l.b16 %v1508
    %v1953 = vunpack.c.h.b16 %v1508
    %v1954 = vpack.c.b16 %v1892, %v1890
    %v1955 = vpack.c.b16 %v1893, %v1891
    %v1956 = vpack.c.b16 %v1896, %v1894
    %v1957 = vpack.c.b16 %v1897, %v1895
    %v1958 = vpack.c.b16 %v1900, %v1898
    %v1959 = vpack.c.b16 %v1901, %v1899
    %v1960 = vpack.c.b16 %v1904, %v1902
    %v1961 = vpack.c.b16 %v1905, %v1903
    %v1962 = vpack.c.b16 %v1908, %v1906
    %v1963 = vpack.c.b16 %v1909, %v1907
    %v1964 = vpack.c.b16 %v1912, %v1910
    %v1965 = vpack.c.b16 %v1913, %v1911
    %v1966 = vpack.c.b16 %v1916, %v1914
    %v1967 = vpack.c.b16 %v1917, %v1915
    %v1968 = vpack.c.b16 %v1920, %v1918
    %v1969 = vpack.c.b16 %v1921, %v1919
    %v1970 = vpack.c.b16 %v1924, %v1922
    %v1971 = vpack.c.b16 %v1925, %v1923
    %v1972 = vpack.c.b16 %v1928, %v1926
    %v1973 = vpack.c.b16 %v1929, %v1927
    %v1974 = vpack.c.b16 %v1932, %v1930
    %v1975 = vpack.c.b16 %v1933, %v1931
    %v1976 = vpack.c.b16 %v1936, %v1934
    %v1977 = vpack.c.b16 %v1937, %v1935
    %v1978 = vpack.c.b16 %v1940, %v1938
    %v1979 = vpack.c.b16 %v1941, %v1939
    %v1980 = vpack.c.b16 %v1944, %v1942
    %v1981 = vpack.c.b16 %v1945, %v1943
    %v1982 = vpack.c.b16 %v1948, %v1946
    %v1983 = vpack.c.b16 %v1949, %v1947
    %v1984 = vpack.c.b16 %v1952, %v1950
    %v1985 = vpack.c.b16 %v1953, %v1951
    %2018 = vmatpush.bf16.msra.mxu0 %v1968
    %2019 = vmatpush.bf16.msra.mxu0 %v1966
    %2020 = vmatpush.bf16.msra.mxu0 %v1964
    %2021 = vmatpush.bf16.msra.mxu0 %v1962
    %2022 = vmatpush.bf16.msra.mxu0 %v1960
    %2023 = vmatpush.bf16.msra.mxu0 %v1958
    %2024 = vmatpush.bf16.msra.mxu0 %v1956
    %2025 = vmatpush.bf16.msra.mxu0 %v1954
    %2026 = vmatmul.bf16.gmra.mxu0 %v396
    %v2027 = vpop.f32.mrf.mxu0
    %v2028 = vadd.f32 %v1781, %v2027
    %v2029 = vpop.f32.mrf.mxu0
    %v2030 = vadd.f32 %v1783, %v2029
    %2031 = vmatmul.bf16.gmra.mxu0 %v398
    %v2032 = vpop.f32.mrf.mxu0
    %v2033 = vadd.f32 %v1786, %v2032
    %v2034 = vpop.f32.mrf.mxu0
    %v2035 = vadd.f32 %v1788, %v2034
    %2036 = vmatmul.bf16.gmra.mxu0 %v400
    %v2037 = vpop.f32.mrf.mxu0
    %v2038 = vadd.f32 %v1791, %v2037
    %v2039 = vpop.f32.mrf.mxu0
    %v2040 = vadd.f32 %v1793, %v2039
    %2041 = vmatmul.bf16.gmra.mxu0 %v402
    %v2042 = vpop.f32.mrf.mxu0
    %v2043 = vadd.f32 %v1796, %v2042
    %v2044 = vpop.f32.mrf.mxu0
    %v2045 = vadd.f32 %v1798, %v2044
    %2046 = vdwg.mxu0
    %2047 = vmatpush.bf16.msra.mxu0 %v1984
    %2048 = vmatpush.bf16.msra.mxu0 %v1982
    %2049 = vmatpush.bf16.msra.mxu0 %v1980
    %2050 = vmatpush.bf16.msra.mxu0 %v1978
    %2051 = vmatpush.bf16.msra.mxu0 %v1976
    %2052 = vmatpush.bf16.msra.mxu0 %v1974
    %2053 = vmatpush.bf16.msra.mxu0 %v1972
    %2054 = vmatpush.bf16.msra.mxu0 %v1970
    %2055 = vmatmul.bf16.gmra.mxu0 %v397
    %v2056 = vpop.f32.mrf.mxu0
    %v2057 = vadd.f32 %v2028, %v2056
    %v2058 = vpop.f32.mrf.mxu0
    %v2059 = vadd.f32 %v2030, %v2058
    %2060 = vmatmul.bf16.gmra.mxu0 %v399
    %v2061 = vpop.f32.mrf.mxu0
    %v2062 = vadd.f32 %v2033, %v2061
    %v2063 = vpop.f32.mrf.mxu0
    %v2064 = vadd.f32 %v2035, %v2063
    %2065 = vmatmul.bf16.gmra.mxu0 %v401
    %v2066 = vpop.f32.mrf.mxu0
    %v2067 = vadd.f32 %v2038, %v2066
    %v2068 = vpop.f32.mrf.mxu0
    %v2069 = vadd.f32 %v2040, %v2068
    %2070 = vmatmul.bf16.gmra.mxu0 %v403
    %v2071 = vpop.f32.mrf.mxu0
    %v2072 = vadd.f32 %v2043, %v2071
    %v2073 = vpop.f32.mrf.mxu0
    %v2074 = vadd.f32 %v2045, %v2073
    %2075 = vdwg.mxu0
    %2076 = vmatpush.bf16.msra.mxu0 %v1969
    %2077 = vmatpush.bf16.msra.mxu0 %v1967
    %2078 = vmatpush.bf16.msra.mxu0 %v1965
    %2079 = vmatpush.bf16.msra.mxu0 %v1963
    %2080 = vmatpush.bf16.msra.mxu0 %v1961
    %2081 = vmatpush.bf16.msra.mxu0 %v1959
    %2082 = vmatpush.bf16.msra.mxu0 %v1957
    %2083 = vmatpush.bf16.msra.mxu0 %v1955
    %2084 = vmatmul.bf16.gmra.mxu0 %v396
    %v2085 = vpop.f32.mrf.mxu0
    %v2086 = vadd.f32 %v1839, %v2085
    %v2087 = vpop.f32.mrf.mxu0
    %v2088 = vadd.f32 %v1841, %v2087
    %2089 = vmatmul.bf16.gmra.mxu0 %v398
    %v2090 = vpop.f32.mrf.mxu0
    %v2091 = vadd.f32 %v1844, %v2090
    %v2092 = vpop.f32.mrf.mxu0
    %v2093 = vadd.f32 %v1846, %v2092
    %2094 = vmatmul.bf16.gmra.mxu0 %v400
    %v2095 = vpop.f32.mrf.mxu0
    %v2096 = vadd.f32 %v1849, %v2095
    %v2097 = vpop.f32.mrf.mxu0
    %v2098 = vadd.f32 %v1851, %v2097
    %2099 = vmatmul.bf16.gmra.mxu0 %v402
    %v2100 = vpop.f32.mrf.mxu0
    %v2101 = vadd.f32 %v1854, %v2100
    %v2102 = vpop.f32.mrf.mxu0
    %v2103 = vadd.f32 %v1856, %v2102
    %2104 = vdwg.mxu0
    %2105 = vmatpush.bf16.msra.mxu0 %v1985
    %2106 = vmatpush.bf16.msra.mxu0 %v1983
    %2107 = vmatpush.bf16.msra.mxu0 %v1981
    %2108 = vmatpush.bf16.msra.mxu0 %v1979
    %2109 = vmatpush.bf16.msra.mxu0 %v1977
    %2110 = vmatpush.bf16.msra.mxu0 %v1975
    %2111 = vmatpush.bf16.msra.mxu0 %v1973
    %2112 = vmatpush.bf16.msra.mxu0 %v1971
    %2113 = vmatmul.bf16.gmra.mxu0 %v397
    %v2114 = vpop.f32.mrf.mxu0
    %v2115 = vadd.f32 %v2086, %v2114
    %v2116 = vpop.f32.mrf.mxu0
    %v2117 = vadd.f32 %v2088, %v2116
    %2118 = vmatmul.bf16.gmra.mxu0 %v399
    %v2119 = vpop.f32.mrf.mxu0
    %v2120 = vadd.f32 %v2091, %v2119
    %v2121 = vpop.f32.mrf.mxu0
    %v2122 = vadd.f32 %v2093, %v2121
    %2123 = vmatmul.bf16.gmra.mxu0 %v401
    %v2124 = vpop.f32.mrf.mxu0
    %v2125 = vadd.f32 %v2096, %v2124
    %v2126 = vpop.f32.mrf.mxu0
    %v2127 = vadd.f32 %v2098, %v2126
    %2128 = vmatmul.bf16.gmra.mxu0 %v403
    %v2129 = vpop.f32.mrf.mxu0
    %v2130 = vadd.f32 %v2101, %v2129
    %v2131 = vpop.f32.mrf.mxu0
    %v2132 = vadd.f32 %v2103, %v2131
    %2133 = vdwg.mxu0
    %v2134 = vmul.f32 %v2057, %v689
    %v2135 = vmul.f32 %v2115, %v690
    %v2136 = vmul.f32 %v2059, %v689
    %v2137 = vmul.f32 %v2117, %v690
    %v2138 = vmul.f32 %v2062, %v689
    %v2139 = vmul.f32 %v2120, %v690
    %v2140 = vmul.f32 %v2064, %v689
    %v2141 = vmul.f32 %v2122, %v690
    %v2142 = vmul.f32 %v2067, %v689
    %v2143 = vmul.f32 %v2125, %v690
    %v2144 = vmul.f32 %v2069, %v689
    %v2145 = vmul.f32 %v2127, %v690
    %v2146 = vmul.f32 %v2072, %v689
    %v2147 = vmul.f32 %v2130, %v690
    %v2148 = vmul.f32 %v2074, %v689
    %v2149 = vmul.f32 %v2132, %v690
    %v2150 = vadd.f32 %v2134, %v710
    %v2151 = vadd.f32 %v2135, %v711
    %v2152 = vadd.f32 %v2136, %v710
    %v2153 = vadd.f32 %v2137, %v711
    %v2154 = vadd.f32 %v2138, %v710
    %v2155 = vadd.f32 %v2139, %v711
    %v2156 = vadd.f32 %v2140, %v710
    %v2157 = vadd.f32 %v2141, %v711
    %v2158 = vadd.f32 %v2142, %v710
    %v2159 = vadd.f32 %v2143, %v711
    %v2160 = vadd.f32 %v2144, %v710
    %v2161 = vadd.f32 %v2145, %v711
    %v2162 = vadd.f32 %v2146, %v710
    %v2163 = vadd.f32 %v2147, %v711
    %v2164 = vadd.f32 %v2148, %v710
    %v2165 = vadd.f32 %v2149, %v711
    %v2166 = vmax.f32 %v2150, 0.0
    %v2167 = vmax.f32 %v2151, 0.0
    %v2168 = vmax.f32 %v2152, 0.0
    %v2169 = vmax.f32 %v2153, 0.0
    %v2170 = vmax.f32 %v2154, 0.0
    %v2171 = vmax.f32 %v2155, 0.0
    %v2172 = vmax.f32 %v2156, 0.0
    %v2173 = vmax.f32 %v2157, 0.0
    %v2174 = vmax.f32 %v2158, 0.0
    %v2175 = vmax.f32 %v2159, 0.0
    %v2176 = vmax.f32 %v2160, 0.0
    %v2177 = vmax.f32 %v2161, 0.0
    %v2178 = vmax.f32 %v2162, 0.0
    %v2179 = vmax.f32 %v2163, 0.0
    %v2180 = vmax.f32 %v2164, 0.0
    %v2181 = vmax.f32 %v2165, 0.0
    %v2182 = vpack.c.bf16 %v2167, %v2166
    %v2183 = vpack.c.bf16 %v2169, %v2168
    %v2184 = vpack.c.bf16 %v2171, %v2170
    %v2185 = vpack.c.bf16 %v2173, %v2172
    %v2186 = vpack.c.bf16 %v2175, %v2174
    %v2187 = vpack.c.bf16 %v2177, %v2176
    %v2188 = vpack.c.bf16 %v2179, %v2178
    %v2189 = vpack.c.bf16 %v2181, %v2180
    %2190 = vst [vmem:[#allocation10 + $0x10] sm:$0xff] %v2182
    %2191 = vst [vmem:[#allocation10 + $0x30] sm:$0xff] %v2183
    %2192 = vst [vmem:[#allocation10 + $0x50] sm:$0xff] %v2184
    %2193 = vst [vmem:[#allocation10 + $0x70] sm:$0xff] %v2185
    %2194 = vst [vmem:[#allocation10 + $0x90] sm:$0xff] %v2186
    %2195 = vst [vmem:[#allocation10 + $0xb0] sm:$0xff] %v2187
    %2196 = vst [vmem:[#allocation10 + $0xd0] sm:$0xff] %v2188
    %2197 = vst [vmem:[#allocation10 + $0xf0] sm:$0xff] %v2189
    %v2198 = vld [vmem:[#allocation5] sm:$0xff]
    %v2199 = vld [vmem:[#allocation5 + $0x8] sm:$0xff]
    %v2200 = vld [vmem:[#allocation5 + $0x10] sm:$0xff]
    %v2201 = vld [vmem:[#allocation5 + $0x18] sm:$0xff]
    %v2202 = vld [vmem:[#allocation5 + $0x20] sm:$0xff]
    %v2203 = vld [vmem:[#allocation5 + $0x28] sm:$0xff]
    %v2204 = vld [vmem:[#allocation5 + $0x30] sm:$0xff]
    %v2205 = vld [vmem:[#allocation5 + $0x38] sm:$0xff]
    %v2206 = vld [vmem:[#allocation5 + $0x40] sm:$0xff]
    %v2207 = vld [vmem:[#allocation5 + $0x48] sm:$0xff]
    %v2208 = vld [vmem:[#allocation5 + $0x50] sm:$0xff]
    %v2209 = vld [vmem:[#allocation5 + $0x58] sm:$0xff]
    %v2210 = vld [vmem:[#allocation5 + $0x60] sm:$0xff]
    %v2211 = vld [vmem:[#allocation5 + $0x68] sm:$0xff]
    %v2212 = vld [vmem:[#allocation5 + $0x70] sm:$0xff]
    %v2213 = vld [vmem:[#allocation5 + $0x78] sm:$0xff]
    %v2214 = vld [vmem:[#allocation5 + $0x80] sm:$0xff]
    %v2215 = vld [vmem:[#allocation5 + $0x88] sm:$0xff]
    %v2216 = vld [vmem:[#allocation5 + $0x90] sm:$0xff]
    %v2217 = vld [vmem:[#allocation5 + $0x98] sm:$0xff]
    %v2218 = vld [vmem:[#allocation5 + $0xa0] sm:$0xff]
    %v2219 = vld [vmem:[#allocation5 + $0xa8] sm:$0xff]
    %v2220 = vld [vmem:[#allocation5 + $0xb0] sm:$0xff]
    %v2221 = vld [vmem:[#allocation5 + $0xb8] sm:$0xff]
    %v2222 = vld [vmem:[#allocation5 + $0xc0] sm:$0xff]
    %v2223 = vld [vmem:[#allocation5 + $0xc8] sm:$0xff]
    %v2224 = vld [vmem:[#allocation5 + $0xd0] sm:$0xff]
    %v2225 = vld [vmem:[#allocation5 + $0xd8] sm:$0xff]
    %v2226 = vld [vmem:[#allocation5 + $0xe0] sm:$0xff]
    %v2227 = vld [vmem:[#allocation5 + $0xe8] sm:$0xff]
    %v2228 = vld [vmem:[#allocation5 + $0xf0] sm:$0xff]
    %v2229 = vld [vmem:[#allocation5 + $0xf8] sm:$0xff]
    %s2230 = scalar_lea.vmem [#allocation5], 512
    %v2231 = vld [vmem:[%s2230] sm:$0xff]
    %v2232 = vld [vmem:[%s2230 + $0x8] sm:$0xff]
    %v2233 = vld [vmem:[%s2230 + $0x10] sm:$0xff]
    %v2234 = vld [vmem:[%s2230 + $0x18] sm:$0xff]
    %v2235 = vld [vmem:[%s2230 + $0x20] sm:$0xff]
    %v2236 = vld [vmem:[%s2230 + $0x28] sm:$0xff]
    %v2237 = vld [vmem:[%s2230 + $0x30] sm:$0xff]
    %v2238 = vld [vmem:[%s2230 + $0x38] sm:$0xff]
    %v2239 = vld [vmem:[%s2230 + $0x40] sm:$0xff]
    %v2240 = vld [vmem:[%s2230 + $0x48] sm:$0xff]
    %v2241 = vld [vmem:[%s2230 + $0x50] sm:$0xff]
    %v2242 = vld [vmem:[%s2230 + $0x58] sm:$0xff]
    %v2243 = vld [vmem:[%s2230 + $0x60] sm:$0xff]
    %v2244 = vld [vmem:[%s2230 + $0x68] sm:$0xff]
    %v2245 = vld [vmem:[%s2230 + $0x70] sm:$0xff]
    %v2246 = vld [vmem:[%s2230 + $0x78] sm:$0xff]
    %v2247 = vld [vmem:[%s2230 + $0x80] sm:$0xff]
    %v2248 = vld [vmem:[%s2230 + $0x88] sm:$0xff]
    %v2249 = vld [vmem:[%s2230 + $0x90] sm:$0xff]
    %v2250 = vld [vmem:[%s2230 + $0x98] sm:$0xff]
    %v2251 = vld [vmem:[%s2230 + $0xa0] sm:$0xff]
    %v2252 = vld [vmem:[%s2230 + $0xa8] sm:$0xff]
    %v2253 = vld [vmem:[%s2230 + $0xb0] sm:$0xff]
    %v2254 = vld [vmem:[%s2230 + $0xb8] sm:$0xff]
    %v2255 = vld [vmem:[%s2230 + $0xc0] sm:$0xff]
    %v2256 = vld [vmem:[%s2230 + $0xc8] sm:$0xff]
    %v2257 = vld [vmem:[%s2230 + $0xd0] sm:$0xff]
    %v2258 = vld [vmem:[%s2230 + $0xd8] sm:$0xff]
    %v2259 = vld [vmem:[%s2230 + $0xe0] sm:$0xff]
    %v2260 = vld [vmem:[%s2230 + $0xe8] sm:$0xff]
    %v2261 = vld [vmem:[%s2230 + $0xf0] sm:$0xff]
    %v2262 = vld [vmem:[%s2230 + $0xf8] sm:$0xff]
    %v2295 = vunpack.c.l.b16 %v2231
    %v2296 = vunpack.c.h.b16 %v2231
    %v2297 = vunpack.c.l.b16 %v2232
    %v2298 = vunpack.c.h.b16 %v2232
    %v2299 = vunpack.c.l.b16 %v2233
    %v2300 = vunpack.c.h.b16 %v2233
    %v2301 = vunpack.c.l.b16 %v2234
    %v2302 = vunpack.c.h.b16 %v2234
    %v2303 = vunpack.c.l.b16 %v2235
    %v2304 = vunpack.c.h.b16 %v2235
    %v2305 = vunpack.c.l.b16 %v2236
    %v2306 = vunpack.c.h.b16 %v2236
    %v2307 = vunpack.c.l.b16 %v2237
    %v2308 = vunpack.c.h.b16 %v2237
    %v2309 = vunpack.c.l.b16 %v2238
    %v2310 = vunpack.c.h.b16 %v2238
    %v2311 = vunpack.c.l.b16 %v2239
    %v2312 = vunpack.c.h.b16 %v2239
    %v2313 = vunpack.c.l.b16 %v2240
    %v2314 = vunpack.c.h.b16 %v2240
    %v2315 = vunpack.c.l.b16 %v2241
    %v2316 = vunpack.c.h.b16 %v2241
    %v2317 = vunpack.c.l.b16 %v2242
    %v2318 = vunpack.c.h.b16 %v2242
    %v2319 = vunpack.c.l.b16 %v2243
    %v2320 = vunpack.c.h.b16 %v2243
    %v2321 = vunpack.c.l.b16 %v2244
    %v2322 = vunpack.c.h.b16 %v2244
    %v2323 = vunpack.c.l.b16 %v2245
    %v2324 = vunpack.c.h.b16 %v2245
    %v2325 = vunpack.c.l.b16 %v2246
    %v2326 = vunpack.c.h.b16 %v2246
    %v2327 = vunpack.c.l.b16 %v2247
    %v2328 = vunpack.c.h.b16 %v2247
    %v2329 = vunpack.c.l.b16 %v2248
    %v2330 = vunpack.c.h.b16 %v2248
    %v2331 = vunpack.c.l.b16 %v2249
    %v2332 = vunpack.c.h.b16 %v2249
    %v2333 = vunpack.c.l.b16 %v2250
    %v2334 = vunpack.c.h.b16 %v2250
    %v2335 = vunpack.c.l.b16 %v2251
    %v2336 = vunpack.c.h.b16 %v2251
    %v2337 = vunpack.c.l.b16 %v2252
    %v2338 = vunpack.c.h.b16 %v2252
    %v2339 = vunpack.c.l.b16 %v2253
    %v2340 = vunpack.c.h.b16 %v2253
    %v2341 = vunpack.c.l.b16 %v2254
    %v2342 = vunpack.c.h.b16 %v2254
    %v2343 = vunpack.c.l.b16 %v2255
    %v2344 = vunpack.c.h.b16 %v2255
    %v2345 = vunpack.c.l.b16 %v2256
    %v2346 = vunpack.c.h.b16 %v2256
    %v2347 = vunpack.c.l.b16 %v2257
    %v2348 = vunpack.c.h.b16 %v2257
    %v2349 = vunpack.c.l.b16 %v2258
    %v2350 = vunpack.c.h.b16 %v2258
    %v2351 = vunpack.c.l.b16 %v2259
    %v2352 = vunpack.c.h.b16 %v2259
    %v2353 = vunpack.c.l.b16 %v2260
    %v2354 = vunpack.c.h.b16 %v2260
    %v2355 = vunpack.c.l.b16 %v2261
    %v2356 = vunpack.c.h.b16 %v2261
    %v2357 = vunpack.c.l.b16 %v2262
    %v2358 = vunpack.c.h.b16 %v2262
    %v2359 = vpack.c.b16 %v2297, %v2295
    %v2360 = vpack.c.b16 %v2298, %v2296
    %v2361 = vpack.c.b16 %v2301, %v2299
    %v2362 = vpack.c.b16 %v2302, %v2300
    %v2363 = vpack.c.b16 %v2305, %v2303
    %v2364 = vpack.c.b16 %v2306, %v2304
    %v2365 = vpack.c.b16 %v2309, %v2307
    %v2366 = vpack.c.b16 %v2310, %v2308
    %v2367 = vpack.c.b16 %v2313, %v2311
    %v2368 = vpack.c.b16 %v2314, %v2312
    %v2369 = vpack.c.b16 %v2317, %v2315
    %v2370 = vpack.c.b16 %v2318, %v2316
    %v2371 = vpack.c.b16 %v2321, %v2319
    %v2372 = vpack.c.b16 %v2322, %v2320
    %v2373 = vpack.c.b16 %v2325, %v2323
    %v2374 = vpack.c.b16 %v2326, %v2324
    %v2375 = vpack.c.b16 %v2329, %v2327
    %v2376 = vpack.c.b16 %v2330, %v2328
    %v2377 = vpack.c.b16 %v2333, %v2331
    %v2378 = vpack.c.b16 %v2334, %v2332
    %v2379 = vpack.c.b16 %v2337, %v2335
    %v2380 = vpack.c.b16 %v2338, %v2336
    %v2381 = vpack.c.b16 %v2341, %v2339
    %v2382 = vpack.c.b16 %v2342, %v2340
    %v2383 = vpack.c.b16 %v2345, %v2343
    %v2384 = vpack.c.b16 %v2346, %v2344
    %v2385 = vpack.c.b16 %v2349, %v2347
    %v2386 = vpack.c.b16 %v2350, %v2348
    %v2387 = vpack.c.b16 %v2353, %v2351
    %v2388 = vpack.c.b16 %v2354, %v2352
    %v2389 = vpack.c.b16 %v2357, %v2355
    %v2390 = vpack.c.b16 %v2358, %v2356
    %2423 = vmatpush.bf16.msra.mxu0 %v2373
    %2424 = vmatpush.bf16.msra.mxu0 %v2371
    %2425 = vmatpush.bf16.msra.mxu0 %v2369
    %2426 = vmatpush.bf16.msra.mxu0 %v2367
    %2427 = vmatpush.bf16.msra.mxu0 %v2365
    %2428 = vmatpush.bf16.msra.mxu0 %v2363
    %2429 = vmatpush.bf16.msra.mxu0 %v2361
    %2430 = vmatpush.bf16.msra.mxu0 %v2359
    %2431 = vmatmul.bf16.gmra.mxu0 %v844
    %v2432 = vpop.f32.mrf.mxu0
    %v2433 = vadd.f32 0.0, %v2432
    %v2434 = vpop.f32.mrf.mxu0
    %v2435 = vadd.f32 0.0, %v2434
    %2436 = vmatmul.bf16.gmra.mxu0 %v846
    %v2437 = vpop.f32.mrf.mxu0
    %v2438 = vadd.f32 0.0, %v2437
    %v2439 = vpop.f32.mrf.mxu0
    %v2440 = vadd.f32 0.0, %v2439
    %2441 = vmatmul.bf16.gmra.mxu0 %v848
    %v2442 = vpop.f32.mrf.mxu0
    %v2443 = vadd.f32 0.0, %v2442
    %v2444 = vpop.f32.mrf.mxu0
    %v2445 = vadd.f32 0.0, %v2444
    %2446 = vmatmul.bf16.gmra.mxu0 %v850
    %v2447 = vpop.f32.mrf.mxu0
    %v2448 = vadd.f32 0.0, %v2447
    %v2449 = vpop.f32.mrf.mxu0
    %v2450 = vadd.f32 0.0, %v2449
    %2451 = vdwg.mxu0
    %2452 = vmatpush.bf16.msra.mxu0 %v2389
    %2453 = vmatpush.bf16.msra.mxu0 %v2387
    %2454 = vmatpush.bf16.msra.mxu0 %v2385
    %2455 = vmatpush.bf16.msra.mxu0 %v2383
    %2456 = vmatpush.bf16.msra.mxu0 %v2381
    %2457 = vmatpush.bf16.msra.mxu0 %v2379
    %2458 = vmatpush.bf16.msra.mxu0 %v2377
    %2459 = vmatpush.bf16.msra.mxu0 %v2375
    %2460 = vmatmul.bf16.gmra.mxu0 %v845
    %v2461 = vpop.f32.mrf.mxu0
    %v2462 = vadd.f32 %v2433, %v2461
    %v2463 = vpop.f32.mrf.mxu0
    %v2464 = vadd.f32 %v2435, %v2463
    %2465 = vmatmul.bf16.gmra.mxu0 %v847
    %v2466 = vpop.f32.mrf.mxu0
    %v2467 = vadd.f32 %v2438, %v2466
    %v2468 = vpop.f32.mrf.mxu0
    %v2469 = vadd.f32 %v2440, %v2468
    %2470 = vmatmul.bf16.gmra.mxu0 %v849
    %v2471 = vpop.f32.mrf.mxu0
    %v2472 = vadd.f32 %v2443, %v2471
    %v2473 = vpop.f32.mrf.mxu0
    %v2474 = vadd.f32 %v2445, %v2473
    %2475 = vmatmul.bf16.gmra.mxu0 %v851
    %v2476 = vpop.f32.mrf.mxu0
    %v2477 = vadd.f32 %v2448, %v2476
    %v2478 = vpop.f32.mrf.mxu0
    %v2479 = vadd.f32 %v2450, %v2478
    %2480 = vdwg.mxu0
    %2481 = vmatpush.bf16.msra.mxu0 %v2374
    %2482 = vmatpush.bf16.msra.mxu0 %v2372
    %2483 = vmatpush.bf16.msra.mxu0 %v2370
    %2484 = vmatpush.bf16.msra.mxu0 %v2368
    %2485 = vmatpush.bf16.msra.mxu0 %v2366
    %2486 = vmatpush.bf16.msra.mxu0 %v2364
    %2487 = vmatpush.bf16.msra.mxu0 %v2362
    %2488 = vmatpush.bf16.msra.mxu0 %v2360
    %2489 = vmatmul.bf16.gmra.mxu0 %v844
    %v2490 = vpop.f32.mrf.mxu0
    %v2491 = vadd.f32 0.0, %v2490
    %v2492 = vpop.f32.mrf.mxu0
    %v2493 = vadd.f32 0.0, %v2492
    %2494 = vmatmul.bf16.gmra.mxu0 %v846
    %v2495 = vpop.f32.mrf.mxu0
    %v2496 = vadd.f32 0.0, %v2495
    %v2497 = vpop.f32.mrf.mxu0
    %v2498 = vadd.f32 0.0, %v2497
    %2499 = vmatmul.bf16.gmra.mxu0 %v848
    %v2500 = vpop.f32.mrf.mxu0
    %v2501 = vadd.f32 0.0, %v2500
    %v2502 = vpop.f32.mrf.mxu0
    %v2503 = vadd.f32 0.0, %v2502
    %2504 = vmatmul.bf16.gmra.mxu0 %v850
    %v2505 = vpop.f32.mrf.mxu0
    %v2506 = vadd.f32 0.0, %v2505
    %v2507 = vpop.f32.mrf.mxu0
    %v2508 = vadd.f32 0.0, %v2507
    %2509 = vdwg.mxu0
    %2510 = vmatpush.bf16.msra.mxu0 %v2390
    %2511 = vmatpush.bf16.msra.mxu0 %v2388
    %2512 = vmatpush.bf16.msra.mxu0 %v2386
    %2513 = vmatpush.bf16.msra.mxu0 %v2384
    %2514 = vmatpush.bf16.msra.mxu0 %v2382
    %2515 = vmatpush.bf16.msra.mxu0 %v2380
    %2516 = vmatpush.bf16.msra.mxu0 %v2378
    %2517 = vmatpush.bf16.msra.mxu0 %v2376
    %2518 = vmatmul.bf16.gmra.mxu0 %v845
    %v2519 = vpop.f32.mrf.mxu0
    %v2520 = vadd.f32 %v2491, %v2519
    %v2521 = vpop.f32.mrf.mxu0
    %v2522 = vadd.f32 %v2493, %v2521
    %2523 = vmatmul.bf16.gmra.mxu0 %v847
    %v2524 = vpop.f32.mrf.mxu0
    %v2525 = vadd.f32 %v2496, %v2524
    %v2526 = vpop.f32.mrf.mxu0
    %v2527 = vadd.f32 %v2498, %v2526
    %2528 = vmatmul.bf16.gmra.mxu0 %v849
    %v2529 = vpop.f32.mrf.mxu0
    %v2530 = vadd.f32 %v2501, %v2529
    %v2531 = vpop.f32.mrf.mxu0
    %v2532 = vadd.f32 %v2503, %v2531
    %2533 = vmatmul.bf16.gmra.mxu0 %v851
    %v2534 = vpop.f32.mrf.mxu0
    %v2535 = vadd.f32 %v2506, %v2534
    %v2536 = vpop.f32.mrf.mxu0
    %v2537 = vadd.f32 %v2508, %v2536
    %2538 = vdwg.mxu0
    %v2571 = vunpack.c.l.b16 %v2198
    %v2572 = vunpack.c.h.b16 %v2198
    %v2573 = vunpack.c.l.b16 %v2199
    %v2574 = vunpack.c.h.b16 %v2199
    %v2575 = vunpack.c.l.b16 %v2200
    %v2576 = vunpack.c.h.b16 %v2200
    %v2577 = vunpack.c.l.b16 %v2201
    %v2578 = vunpack.c.h.b16 %v2201
    %v2579 = vunpack.c.l.b16 %v2202
    %v2580 = vunpack.c.h.b16 %v2202
    %v2581 = vunpack.c.l.b16 %v2203
    %v2582 = vunpack.c.h.b16 %v2203
    %v2583 = vunpack.c.l.b16 %v2204
    %v2584 = vunpack.c.h.b16 %v2204
    %v2585 = vunpack.c.l.b16 %v2205
    %v2586 = vunpack.c.h.b16 %v2205
    %v2587 = vunpack.c.l.b16 %v2206
    %v2588 = vunpack.c.h.b16 %v2206
    %v2589 = vunpack.c.l.b16 %v2207
    %v2590 = vunpack.c.h.b16 %v2207
    %v2591 = vunpack.c.l.b16 %v2208
    %v2592 = vunpack.c.h.b16 %v2208
    %v2593 = vunpack.c.l.b16 %v2209
    %v2594 = vunpack.c.h.b16 %v2209
    %v2595 = vunpack.c.l.b16 %v2210
    %v2596 = vunpack.c.h.b16 %v2210
    %v2597 = vunpack.c.l.b16 %v2211
    %v2598 = vunpack.c.h.b16 %v2211
    %v2599 = vunpack.c.l.b16 %v2212
    %v2600 = vunpack.c.h.b16 %v2212
    %v2601 = vunpack.c.l.b16 %v2213
    %v2602 = vunpack.c.h.b16 %v2213
    %v2603 = vunpack.c.l.b16 %v2214
    %v2604 = vunpack.c.h.b16 %v2214
    %v2605 = vunpack.c.l.b16 %v2215
    %v2606 = vunpack.c.h.b16 %v2215
    %v2607 = vunpack.c.l.b16 %v2216
    %v2608 = vunpack.c.h.b16 %v2216
    %v2609 = vunpack.c.l.b16 %v2217
    %v2610 = vunpack.c.h.b16 %v2217
    %v2611 = vunpack.c.l.b16 %v2218
    %v2612 = vunpack.c.h.b16 %v2218
    %v2613 = vunpack.c.l.b16 %v2219
    %v2614 = vunpack.c.h.b16 %v2219
    %v2615 = vunpack.c.l.b16 %v2220
    %v2616 = vunpack.c.h.b16 %v2220
    %v2617 = vunpack.c.l.b16 %v2221
    %v2618 = vunpack.c.h.b16 %v2221
    %v2619 = vunpack.c.l.b16 %v2222
    %v2620 = vunpack.c.h.b16 %v2222
    %v2621 = vunpack.c.l.b16 %v2223
    %v2622 = vunpack.c.h.b16 %v2223
    %v2623 = vunpack.c.l.b16 %v2224
    %v2624 = vunpack.c.h.b16 %v2224
    %v2625 = vunpack.c.l.b16 %v2225
    %v2626 = vunpack.c.h.b16 %v2225
    %v2627 = vunpack.c.l.b16 %v2226
    %v2628 = vunpack.c.h.b16 %v2226
    %v2629 = vunpack.c.l.b16 %v2227
    %v2630 = vunpack.c.h.b16 %v2227
    %v2631 = vunpack.c.l.b16 %v2228
    %v2632 = vunpack.c.h.b16 %v2228
    %v2633 = vunpack.c.l.b16 %v2229
    %v2634 = vunpack.c.h.b16 %v2229
    %v2635 = vpack.c.b16 %v2573, %v2571
    %v2636 = vpack.c.b16 %v2574, %v2572
    %v2637 = vpack.c.b16 %v2577, %v2575
    %v2638 = vpack.c.b16 %v2578, %v2576
    %v2639 = vpack.c.b16 %v2581, %v2579
    %v2640 = vpack.c.b16 %v2582, %v2580
    %v2641 = vpack.c.b16 %v2585, %v2583
    %v2642 = vpack.c.b16 %v2586, %v2584
    %v2643 = vpack.c.b16 %v2589, %v2587
    %v2644 = vpack.c.b16 %v2590, %v2588
    %v2645 = vpack.c.b16 %v2593, %v2591
    %v2646 = vpack.c.b16 %v2594, %v2592
    %v2647 = vpack.c.b16 %v2597, %v2595
    %v2648 = vpack.c.b16 %v2598, %v2596
    %v2649 = vpack.c.b16 %v2601, %v2599
    %v2650 = vpack.c.b16 %v2602, %v2600
    %v2651 = vpack.c.b16 %v2605, %v2603
    %v2652 = vpack.c.b16 %v2606, %v2604
    %v2653 = vpack.c.b16 %v2609, %v2607
    %v2654 = vpack.c.b16 %v2610, %v2608
    %v2655 = vpack.c.b16 %v2613, %v2611
    %v2656 = vpack.c.b16 %v2614, %v2612
    %v2657 = vpack.c.b16 %v2617, %v2615
    %v2658 = vpack.c.b16 %v2618, %v2616
    %v2659 = vpack.c.b16 %v2621, %v2619
    %v2660 = vpack.c.b16 %v2622, %v2620
    %v2661 = vpack.c.b16 %v2625, %v2623
    %v2662 = vpack.c.b16 %v2626, %v2624
    %v2663 = vpack.c.b16 %v2629, %v2627
    %v2664 = vpack.c.b16 %v2630, %v2628
    %v2665 = vpack.c.b16 %v2633, %v2631
    %v2666 = vpack.c.b16 %v2634, %v2632
    %2699 = vmatpush.bf16.msra.mxu0 %v2649
    %2700 = vmatpush.bf16.msra.mxu0 %v2647
    %2701 = vmatpush.bf16.msra.mxu0 %v2645
    %2702 = vmatpush.bf16.msra.mxu0 %v2643
    %2703 = vmatpush.bf16.msra.mxu0 %v2641
    %2704 = vmatpush.bf16.msra.mxu0 %v2639
    %2705 = vmatpush.bf16.msra.mxu0 %v2637
    %2706 = vmatpush.bf16.msra.mxu0 %v2635
    %2707 = vmatmul.bf16.gmra.mxu0 %v396
    %v2708 = vpop.f32.mrf.mxu0
    %v2709 = vadd.f32 %v2462, %v2708
    %v2710 = vpop.f32.mrf.mxu0
    %v2711 = vadd.f32 %v2464, %v2710
    %2712 = vmatmul.bf16.gmra.mxu0 %v398
    %v2713 = vpop.f32.mrf.mxu0
    %v2714 = vadd.f32 %v2467, %v2713
    %v2715 = vpop.f32.mrf.mxu0
    %v2716 = vadd.f32 %v2469, %v2715
    %2717 = vmatmul.bf16.gmra.mxu0 %v400
    %v2718 = vpop.f32.mrf.mxu0
    %v2719 = vadd.f32 %v2472, %v2718
    %v2720 = vpop.f32.mrf.mxu0
    %v2721 = vadd.f32 %v2474, %v2720
    %2722 = vmatmul.bf16.gmra.mxu0 %v402
    %v2723 = vpop.f32.mrf.mxu0
    %v2724 = vadd.f32 %v2477, %v2723
    %v2725 = vpop.f32.mrf.mxu0
    %v2726 = vadd.f32 %v2479, %v2725
    %2727 = vdwg.mxu0
    %2728 = vmatpush.bf16.msra.mxu0 %v2665
    %2729 = vmatpush.bf16.msra.mxu0 %v2663
    %2730 = vmatpush.bf16.msra.mxu0 %v2661
    %2731 = vmatpush.bf16.msra.mxu0 %v2659
    %2732 = vmatpush.bf16.msra.mxu0 %v2657
    %2733 = vmatpush.bf16.msra.mxu0 %v2655
    %2734 = vmatpush.bf16.msra.mxu0 %v2653
    %2735 = vmatpush.bf16.msra.mxu0 %v2651
    %2736 = vmatmul.bf16.gmra.mxu0 %v397
    %v2737 = vpop.f32.mrf.mxu0
    %v2738 = vadd.f32 %v2709, %v2737
    %v2739 = vpop.f32.mrf.mxu0
    %v2740 = vadd.f32 %v2711, %v2739
    %2741 = vmatmul.bf16.gmra.mxu0 %v399
    %v2742 = vpop.f32.mrf.mxu0
    %v2743 = vadd.f32 %v2714, %v2742
    %v2744 = vpop.f32.mrf.mxu0
    %v2745 = vadd.f32 %v2716, %v2744
    %2746 = vmatmul.bf16.gmra.mxu0 %v401
    %v2747 = vpop.f32.mrf.mxu0
    %v2748 = vadd.f32 %v2719, %v2747
    %v2749 = vpop.f32.mrf.mxu0
    %v2750 = vadd.f32 %v2721, %v2749
    %2751 = vmatmul.bf16.gmra.mxu0 %v403
    %v2752 = vpop.f32.mrf.mxu0
    %v2753 = vadd.f32 %v2724, %v2752
    %v2754 = vpop.f32.mrf.mxu0
    %v2755 = vadd.f32 %v2726, %v2754
    %2756 = vdwg.mxu0
    %2757 = vmatpush.bf16.msra.mxu0 %v2650
    %2758 = vmatpush.bf16.msra.mxu0 %v2648
    %2759 = vmatpush.bf16.msra.mxu0 %v2646
    %2760 = vmatpush.bf16.msra.mxu0 %v2644
    %2761 = vmatpush.bf16.msra.mxu0 %v2642
    %2762 = vmatpush.bf16.msra.mxu0 %v2640
    %2763 = vmatpush.bf16.msra.mxu0 %v2638
    %2764 = vmatpush.bf16.msra.mxu0 %v2636
    %2765 = vmatmul.bf16.gmra.mxu0 %v396
    %v2766 = vpop.f32.mrf.mxu0
    %v2767 = vadd.f32 %v2520, %v2766
    %v2768 = vpop.f32.mrf.mxu0
    %v2769 = vadd.f32 %v2522, %v2768
    %2770 = vmatmul.bf16.gmra.mxu0 %v398
    %v2771 = vpop.f32.mrf.mxu0
    %v2772 = vadd.f32 %v2525, %v2771
    %v2773 = vpop.f32.mrf.mxu0
    %v2774 = vadd.f32 %v2527, %v2773
    %2775 = vmatmul.bf16.gmra.mxu0 %v400
    %v2776 = vpop.f32.mrf.mxu0
    %v2777 = vadd.f32 %v2530, %v2776
    %v2778 = vpop.f32.mrf.mxu0
    %v2779 = vadd.f32 %v2532, %v2778
    %2780 = vmatmul.bf16.gmra.mxu0 %v402
    %v2781 = vpop.f32.mrf.mxu0
    %v2782 = vadd.f32 %v2535, %v2781
    %v2783 = vpop.f32.mrf.mxu0
    %v2784 = vadd.f32 %v2537, %v2783
    %2785 = vdwg.mxu0
    %2786 = vmatpush.bf16.msra.mxu0 %v2666
    %2787 = vmatpush.bf16.msra.mxu0 %v2664
    %2788 = vmatpush.bf16.msra.mxu0 %v2662
    %2789 = vmatpush.bf16.msra.mxu0 %v2660
    %2790 = vmatpush.bf16.msra.mxu0 %v2658
    %2791 = vmatpush.bf16.msra.mxu0 %v2656
    %2792 = vmatpush.bf16.msra.mxu0 %v2654
    %2793 = vmatpush.bf16.msra.mxu0 %v2652
    %2794 = vmatmul.bf16.gmra.mxu0 %v397
    %v2795 = vpop.f32.mrf.mxu0
    %v2796 = vadd.f32 %v2767, %v2795
    %v2797 = vpop.f32.mrf.mxu0
    %v2798 = vadd.f32 %v2769, %v2797
    %2799 = vmatmul.bf16.gmra.mxu0 %v399
    %v2800 = vpop.f32.mrf.mxu0
    %v2801 = vadd.f32 %v2772, %v2800
    %v2802 = vpop.f32.mrf.mxu0
    %v2803 = vadd.f32 %v2774, %v2802
    %2804 = vmatmul.bf16.gmra.mxu0 %v401
    %v2805 = vpop.f32.mrf.mxu0
    %v2806 = vadd.f32 %v2777, %v2805
    %v2807 = vpop.f32.mrf.mxu0
    %v2808 = vadd.f32 %v2779, %v2807
    %2809 = vmatmul.bf16.gmra.mxu0 %v403
    %v2810 = vpop.f32.mrf.mxu0
    %v2811 = vadd.f32 %v2782, %v2810
    %v2812 = vpop.f32.mrf.mxu0
    %v2813 = vadd.f32 %v2784, %v2812
    %2814 = vdwg.mxu0
    %s2815 = scalar_lea.vmem [#allocation5], 1536
    %v2816 = vld [vmem:[%s2815] sm:$0xff]
    %v2817 = vld [vmem:[%s2815 + $0x8] sm:$0xff]
    %v2818 = vld [vmem:[%s2815 + $0x10] sm:$0xff]
    %v2819 = vld [vmem:[%s2815 + $0x18] sm:$0xff]
    %v2820 = vld [vmem:[%s2815 + $0x20] sm:$0xff]
    %v2821 = vld [vmem:[%s2815 + $0x28] sm:$0xff]
    %v2822 = vld [vmem:[%s2815 + $0x30] sm:$0xff]
    %v2823 = vld [vmem:[%s2815 + $0x38] sm:$0xff]
    %v2824 = vld [vmem:[%s2815 + $0x40] sm:$0xff]
    %v2825 = vld [vmem:[%s2815 + $0x48] sm:$0xff]
    %v2826 = vld [vmem:[%s2815 + $0x50] sm:$0xff]
    %v2827 = vld [vmem:[%s2815 + $0x58] sm:$0xff]
    %v2828 = vld [vmem:[%s2815 + $0x60] sm:$0xff]
    %v2829 = vld [vmem:[%s2815 + $0x68] sm:$0xff]
    %v2830 = vld [vmem:[%s2815 + $0x70] sm:$0xff]
    %v2831 = vld [vmem:[%s2815 + $0x78] sm:$0xff]
    %v2832 = vld [vmem:[%s2815 + $0x80] sm:$0xff]
    %v2833 = vld [vmem:[%s2815 + $0x88] sm:$0xff]
    %v2834 = vld [vmem:[%s2815 + $0x90] sm:$0xff]
    %v2835 = vld [vmem:[%s2815 + $0x98] sm:$0xff]
    %v2836 = vld [vmem:[%s2815 + $0xa0] sm:$0xff]
    %v2837 = vld [vmem:[%s2815 + $0xa8] sm:$0xff]
    %v2838 = vld [vmem:[%s2815 + $0xb0] sm:$0xff]
    %v2839 = vld [vmem:[%s2815 + $0xb8] sm:$0xff]
    %v2840 = vld [vmem:[%s2815 + $0xc0] sm:$0xff]
    %v2841 = vld [vmem:[%s2815 + $0xc8] sm:$0xff]
    %v2842 = vld [vmem:[%s2815 + $0xd0] sm:$0xff]
    %v2843 = vld [vmem:[%s2815 + $0xd8] sm:$0xff]
    %v2844 = vld [vmem:[%s2815 + $0xe0] sm:$0xff]
    %v2845 = vld [vmem:[%s2815 + $0xe8] sm:$0xff]
    %v2846 = vld [vmem:[%s2815 + $0xf0] sm:$0xff]
    %v2847 = vld [vmem:[%s2815 + $0xf8] sm:$0xff]
    %v2880 = vunpack.c.l.b16 %v2816
    %v2881 = vunpack.c.h.b16 %v2816
    %v2882 = vunpack.c.l.b16 %v2817
    %v2883 = vunpack.c.h.b16 %v2817
    %v2884 = vunpack.c.l.b16 %v2818
    %v2885 = vunpack.c.h.b16 %v2818
    %v2886 = vunpack.c.l.b16 %v2819
    %v2887 = vunpack.c.h.b16 %v2819
    %v2888 = vunpack.c.l.b16 %v2820
    %v2889 = vunpack.c.h.b16 %v2820
    %v2890 = vunpack.c.l.b16 %v2821
    %v2891 = vunpack.c.h.b16 %v2821
    %v2892 = vunpack.c.l.b16 %v2822
    %v2893 = vunpack.c.h.b16 %v2822
    %v2894 = vunpack.c.l.b16 %v2823
    %v2895 = vunpack.c.h.b16 %v2823
    %v2896 = vunpack.c.l.b16 %v2824
    %v2897 = vunpack.c.h.b16 %v2824
    %v2898 = vunpack.c.l.b16 %v2825
    %v2899 = vunpack.c.h.b16 %v2825
    %v2900 = vunpack.c.l.b16 %v2826
    %v2901 = vunpack.c.h.b16 %v2826
    %v2902 = vunpack.c.l.b16 %v2827
    %v2903 = vunpack.c.h.b16 %v2827
    %v2904 = vunpack.c.l.b16 %v2828
    %v2905 = vunpack.c.h.b16 %v2828
    %v2906 = vunpack.c.l.b16 %v2829
    %v2907 = vunpack.c.h.b16 %v2829
    %v2908 = vunpack.c.l.b16 %v2830
    %v2909 = vunpack.c.h.b16 %v2830
    %v2910 = vunpack.c.l.b16 %v2831
    %v2911 = vunpack.c.h.b16 %v2831
    %v2912 = vunpack.c.l.b16 %v2832
    %v2913 = vunpack.c.h.b16 %v2832
    %v2914 = vunpack.c.l.b16 %v2833
    %v2915 = vunpack.c.h.b16 %v2833
    %v2916 = vunpack.c.l.b16 %v2834
    %v2917 = vunpack.c.h.b16 %v2834
    %v2918 = vunpack.c.l.b16 %v2835
    %v2919 = vunpack.c.h.b16 %v2835
    %v2920 = vunpack.c.l.b16 %v2836
    %v2921 = vunpack.c.h.b16 %v2836
    %v2922 = vunpack.c.l.b16 %v2837
    %v2923 = vunpack.c.h.b16 %v2837
    %v2924 = vunpack.c.l.b16 %v2838
    %v2925 = vunpack.c.h.b16 %v2838
    %v2926 = vunpack.c.l.b16 %v2839
    %v2927 = vunpack.c.h.b16 %v2839
    %v2928 = vunpack.c.l.b16 %v2840
    %v2929 = vunpack.c.h.b16 %v2840
    %v2930 = vunpack.c.l.b16 %v2841
    %v2931 = vunpack.c.h.b16 %v2841
    %v2932 = vunpack.c.l.b16 %v2842
    %v2933 = vunpack.c.h.b16 %v2842
    %v2934 = vunpack.c.l.b16 %v2843
    %v2935 = vunpack.c.h.b16 %v2843
    %v2936 = vunpack.c.l.b16 %v2844
    %v2937 = vunpack.c.h.b16 %v2844
    %v2938 = vunpack.c.l.b16 %v2845
    %v2939 = vunpack.c.h.b16 %v2845
    %v2940 = vunpack.c.l.b16 %v2846
    %v2941 = vunpack.c.h.b16 %v2846
    %v2942 = vunpack.c.l.b16 %v2847
    %v2943 = vunpack.c.h.b16 %v2847
    %v2944 = vpack.c.b16 %v2882, %v2880
    %v2945 = vpack.c.b16 %v2883, %v2881
    %v2946 = vpack.c.b16 %v2886, %v2884
    %v2947 = vpack.c.b16 %v2887, %v2885
    %v2948 = vpack.c.b16 %v2890, %v2888
    %v2949 = vpack.c.b16 %v2891, %v2889
    %v2950 = vpack.c.b16 %v2894, %v2892
    %v2951 = vpack.c.b16 %v2895, %v2893
    %v2952 = vpack.c.b16 %v2898, %v2896
    %v2953 = vpack.c.b16 %v2899, %v2897
    %v2954 = vpack.c.b16 %v2902, %v2900
    %v2955 = vpack.c.b16 %v2903, %v2901
    %v2956 = vpack.c.b16 %v2906, %v2904
    %v2957 = vpack.c.b16 %v2907, %v2905
    %v2958 = vpack.c.b16 %v2910, %v2908
    %v2959 = vpack.c.b16 %v2911, %v2909
    %v2960 = vpack.c.b16 %v2914, %v2912
    %v2961 = vpack.c.b16 %v2915, %v2913
    %v2962 = vpack.c.b16 %v2918, %v2916
    %v2963 = vpack.c.b16 %v2919, %v2917
    %v2964 = vpack.c.b16 %v2922, %v2920
    %v2965 = vpack.c.b16 %v2923, %v2921
    %v2966 = vpack.c.b16 %v2926, %v2924
    %v2967 = vpack.c.b16 %v2927, %v2925
    %v2968 = vpack.c.b16 %v2930, %v2928
    %v2969 = vpack.c.b16 %v2931, %v2929
    %v2970 = vpack.c.b16 %v2934, %v2932
    %v2971 = vpack.c.b16 %v2935, %v2933
    %v2972 = vpack.c.b16 %v2938, %v2936
    %v2973 = vpack.c.b16 %v2939, %v2937
    %v2974 = vpack.c.b16 %v2942, %v2940
    %v2975 = vpack.c.b16 %v2943, %v2941
    %3008 = vmatpush.bf16.msra.mxu0 %v2958
    %3009 = vmatpush.bf16.msra.mxu0 %v2956
    %3010 = vmatpush.bf16.msra.mxu0 %v2954
    %3011 = vmatpush.bf16.msra.mxu0 %v2952
    %3012 = vmatpush.bf16.msra.mxu0 %v2950
    %3013 = vmatpush.bf16.msra.mxu0 %v2948
    %3014 = vmatpush.bf16.msra.mxu0 %v2946
    %3015 = vmatpush.bf16.msra.mxu0 %v2944
    %3016 = vmatmul.bf16.gmra.mxu0 %v1566
    %v3017 = vpop.f32.mrf.mxu0
    %v3018 = vadd.f32 0.0, %v3017
    %v3019 = vpop.f32.mrf.mxu0
    %v3020 = vadd.f32 0.0, %v3019
    %3021 = vmatmul.bf16.gmra.mxu0 %v1568
    %v3022 = vpop.f32.mrf.mxu0
    %v3023 = vadd.f32 0.0, %v3022
    %v3024 = vpop.f32.mrf.mxu0
    %v3025 = vadd.f32 0.0, %v3024
    %3026 = vmatmul.bf16.gmra.mxu0 %v1570
    %v3027 = vpop.f32.mrf.mxu0
    %v3028 = vadd.f32 0.0, %v3027
    %v3029 = vpop.f32.mrf.mxu0
    %v3030 = vadd.f32 0.0, %v3029
    %3031 = vmatmul.bf16.gmra.mxu0 %v1572
    %v3032 = vpop.f32.mrf.mxu0
    %v3033 = vadd.f32 0.0, %v3032
    %v3034 = vpop.f32.mrf.mxu0
    %v3035 = vadd.f32 0.0, %v3034
    %3036 = vdwg.mxu0
    %3037 = vmatpush.bf16.msra.mxu0 %v2974
    %3038 = vmatpush.bf16.msra.mxu0 %v2972
    %3039 = vmatpush.bf16.msra.mxu0 %v2970
    %3040 = vmatpush.bf16.msra.mxu0 %v2968
    %3041 = vmatpush.bf16.msra.mxu0 %v2966
    %3042 = vmatpush.bf16.msra.mxu0 %v2964
    %3043 = vmatpush.bf16.msra.mxu0 %v2962
    %3044 = vmatpush.bf16.msra.mxu0 %v2960
    %3045 = vmatmul.bf16.gmra.mxu0 %v1567
    %v3046 = vpop.f32.mrf.mxu0
    %v3047 = vadd.f32 %v3018, %v3046
    %v3048 = vpop.f32.mrf.mxu0
    %v3049 = vadd.f32 %v3020, %v3048
    %3050 = vmatmul.bf16.gmra.mxu0 %v1569
    %v3051 = vpop.f32.mrf.mxu0
    %v3052 = vadd.f32 %v3023, %v3051
    %v3053 = vpop.f32.mrf.mxu0
    %v3054 = vadd.f32 %v3025, %v3053
    %3055 = vmatmul.bf16.gmra.mxu0 %v1571
    %v3056 = vpop.f32.mrf.mxu0
    %v3057 = vadd.f32 %v3028, %v3056
    %v3058 = vpop.f32.mrf.mxu0
    %v3059 = vadd.f32 %v3030, %v3058
    %3060 = vmatmul.bf16.gmra.mxu0 %v1573
    %v3061 = vpop.f32.mrf.mxu0
    %v3062 = vadd.f32 %v3033, %v3061
    %v3063 = vpop.f32.mrf.mxu0
    %v3064 = vadd.f32 %v3035, %v3063
    %3065 = vdwg.mxu0
    %3066 = vmatpush.bf16.msra.mxu0 %v2959
    %3067 = vmatpush.bf16.msra.mxu0 %v2957
    %3068 = vmatpush.bf16.msra.mxu0 %v2955
    %3069 = vmatpush.bf16.msra.mxu0 %v2953
    %3070 = vmatpush.bf16.msra.mxu0 %v2951
    %3071 = vmatpush.bf16.msra.mxu0 %v2949
    %3072 = vmatpush.bf16.msra.mxu0 %v2947
    %3073 = vmatpush.bf16.msra.mxu0 %v2945
    %3074 = vmatmul.bf16.gmra.mxu0 %v1566
    %v3075 = vpop.f32.mrf.mxu0
    %v3076 = vadd.f32 0.0, %v3075
    %v3077 = vpop.f32.mrf.mxu0
    %v3078 = vadd.f32 0.0, %v3077
    %3079 = vmatmul.bf16.gmra.mxu0 %v1568
    %v3080 = vpop.f32.mrf.mxu0
    %v3081 = vadd.f32 0.0, %v3080
    %v3082 = vpop.f32.mrf.mxu0
    %v3083 = vadd.f32 0.0, %v3082
    %3084 = vmatmul.bf16.gmra.mxu0 %v1570
    %v3085 = vpop.f32.mrf.mxu0
    %v3086 = vadd.f32 0.0, %v3085
    %v3087 = vpop.f32.mrf.mxu0
    %v3088 = vadd.f32 0.0, %v3087
    %3089 = vmatmul.bf16.gmra.mxu0 %v1572
    %v3090 = vpop.f32.mrf.mxu0
    %v3091 = vadd.f32 0.0, %v3090
    %v3092 = vpop.f32.mrf.mxu0
    %v3093 = vadd.f32 0.0, %v3092
    %3094 = vdwg.mxu0
    %3095 = vmatpush.bf16.msra.mxu0 %v2975
    %3096 = vmatpush.bf16.msra.mxu0 %v2973
    %3097 = vmatpush.bf16.msra.mxu0 %v2971
    %3098 = vmatpush.bf16.msra.mxu0 %v2969
    %3099 = vmatpush.bf16.msra.mxu0 %v2967
    %3100 = vmatpush.bf16.msra.mxu0 %v2965
    %3101 = vmatpush.bf16.msra.mxu0 %v2963
    %3102 = vmatpush.bf16.msra.mxu0 %v2961
    %3103 = vmatmul.bf16.gmra.mxu0 %v1567
    %v3104 = vpop.f32.mrf.mxu0
    %v3105 = vadd.f32 %v3076, %v3104
    %v3106 = vpop.f32.mrf.mxu0
    %v3107 = vadd.f32 %v3078, %v3106
    %3108 = vmatmul.bf16.gmra.mxu0 %v1569
    %v3109 = vpop.f32.mrf.mxu0
    %v3110 = vadd.f32 %v3081, %v3109
    %v3111 = vpop.f32.mrf.mxu0
    %v3112 = vadd.f32 %v3083, %v3111
    %3113 = vmatmul.bf16.gmra.mxu0 %v1571
    %v3114 = vpop.f32.mrf.mxu0
    %v3115 = vadd.f32 %v3086, %v3114
    %v3116 = vpop.f32.mrf.mxu0
    %v3117 = vadd.f32 %v3088, %v3116
    %3118 = vmatmul.bf16.gmra.mxu0 %v1573
    %v3119 = vpop.f32.mrf.mxu0
    %v3120 = vadd.f32 %v3091, %v3119
    %v3121 = vpop.f32.mrf.mxu0
    %v3122 = vadd.f32 %v3093, %v3121
    %3123 = vdwg.mxu0
    %v3124 = vadd.f32 %v2738, %v3047
    %v3125 = vadd.f32 %v2796, %v3105
    %v3126 = vadd.f32 %v2740, %v3049
    %v3127 = vadd.f32 %v2798, %v3107
    %v3128 = vadd.f32 %v2743, %v3052
    %v3129 = vadd.f32 %v2801, %v3110
    %v3130 = vadd.f32 %v2745, %v3054
    %v3131 = vadd.f32 %v2803, %v3112
    %v3132 = vadd.f32 %v2748, %v3057
    %v3133 = vadd.f32 %v2806, %v3115
    %v3134 = vadd.f32 %v2750, %v3059
    %v3135 = vadd.f32 %v2808, %v3117
    %v3136 = vadd.f32 %v2753, %v3062
    %v3137 = vadd.f32 %v2811, %v3120
    %v3138 = vadd.f32 %v2755, %v3064
    %v3139 = vadd.f32 %v2813, %v3122
    %s3140 = scalar_lea.vmem [#allocation5], 2048
    %v3141 = vld [vmem:[%s3140] sm:$0xff]
    %v3142 = vld [vmem:[%s3140 + $0x8] sm:$0xff]
    %v3143 = vld [vmem:[%s3140 + $0x10] sm:$0xff]
    %v3144 = vld [vmem:[%s3140 + $0x18] sm:$0xff]
    %v3145 = vld [vmem:[%s3140 + $0x20] sm:$0xff]
    %v3146 = vld [vmem:[%s3140 + $0x28] sm:$0xff]
    %v3147 = vld [vmem:[%s3140 + $0x30] sm:$0xff]
    %v3148 = vld [vmem:[%s3140 + $0x38] sm:$0xff]
    %v3149 = vld [vmem:[%s3140 + $0x40] sm:$0xff]
    %v3150 = vld [vmem:[%s3140 + $0x48] sm:$0xff]
    %v3151 = vld [vmem:[%s3140 + $0x50] sm:$0xff]
    %v3152 = vld [vmem:[%s3140 + $0x58] sm:$0xff]
    %v3153 = vld [vmem:[%s3140 + $0x60] sm:$0xff]
    %v3154 = vld [vmem:[%s3140 + $0x68] sm:$0xff]
    %v3155 = vld [vmem:[%s3140 + $0x70] sm:$0xff]
    %v3156 = vld [vmem:[%s3140 + $0x78] sm:$0xff]
    %v3157 = vld [vmem:[%s3140 + $0x80] sm:$0xff]
    %v3158 = vld [vmem:[%s3140 + $0x88] sm:$0xff]
    %v3159 = vld [vmem:[%s3140 + $0x90] sm:$0xff]
    %v3160 = vld [vmem:[%s3140 + $0x98] sm:$0xff]
    %v3161 = vld [vmem:[%s3140 + $0xa0] sm:$0xff]
    %v3162 = vld [vmem:[%s3140 + $0xa8] sm:$0xff]
    %v3163 = vld [vmem:[%s3140 + $0xb0] sm:$0xff]
    %v3164 = vld [vmem:[%s3140 + $0xb8] sm:$0xff]
    %v3165 = vld [vmem:[%s3140 + $0xc0] sm:$0xff]
    %v3166 = vld [vmem:[%s3140 + $0xc8] sm:$0xff]
    %v3167 = vld [vmem:[%s3140 + $0xd0] sm:$0xff]
    %v3168 = vld [vmem:[%s3140 + $0xd8] sm:$0xff]
    %v3169 = vld [vmem:[%s3140 + $0xe0] sm:$0xff]
    %v3170 = vld [vmem:[%s3140 + $0xe8] sm:$0xff]
    %v3171 = vld [vmem:[%s3140 + $0xf0] sm:$0xff]
    %v3172 = vld [vmem:[%s3140 + $0xf8] sm:$0xff]
    %v3173 = vunpack.c.l.b16 %v240
    %v3174 = vunpack.c.h.b16 %v240
    %v3175 = vunpack.c.l.b16 %v254
    %v3176 = vunpack.c.h.b16 %v254
    %v3177 = vunpack.c.l.b16 %v268
    %v3178 = vunpack.c.h.b16 %v268
    %v3179 = vunpack.c.l.b16 %v282
    %v3180 = vunpack.c.h.b16 %v282
    %v3181 = vunpack.c.l.b16 %v296
    %v3182 = vunpack.c.h.b16 %v296
    %v3183 = vunpack.c.l.b16 %v310
    %v3184 = vunpack.c.h.b16 %v310
    %v3185 = vunpack.c.l.b16 %v324
    %v3186 = vunpack.c.h.b16 %v324
    %v3187 = vunpack.c.l.b16 %v338
    %v3188 = vunpack.c.h.b16 %v338
    %v3189 = vpack.c.b16 %v3175, %v3173
    %v3190 = vpack.c.b16 %v3176, %v3174
    %v3191 = vpack.c.b16 %v3179, %v3177
    %v3192 = vpack.c.b16 %v3180, %v3178
    %v3193 = vpack.c.b16 %v3183, %v3181
    %v3194 = vpack.c.b16 %v3184, %v3182
    %v3195 = vpack.c.b16 %v3187, %v3185
    %v3196 = vpack.c.b16 %v3188, %v3186
    %v3237 = vunpack.c.l.b16 %v3141
    %v3238 = vunpack.c.h.b16 %v3141
    %v3239 = vunpack.c.l.b16 %v3142
    %v3240 = vunpack.c.h.b16 %v3142
    %v3241 = vunpack.c.l.b16 %v3143
    %v3242 = vunpack.c.h.b16 %v3143
    %v3243 = vunpack.c.l.b16 %v3144
    %v3244 = vunpack.c.h.b16 %v3144
    %v3245 = vunpack.c.l.b16 %v3145
    %v3246 = vunpack.c.h.b16 %v3145
    %v3247 = vunpack.c.l.b16 %v3146
    %v3248 = vunpack.c.h.b16 %v3146
    %v3249 = vunpack.c.l.b16 %v3147
    %v3250 = vunpack.c.h.b16 %v3147
    %v3251 = vunpack.c.l.b16 %v3148
    %v3252 = vunpack.c.h.b16 %v3148
    %v3253 = vunpack.c.l.b16 %v3149
    %v3254 = vunpack.c.h.b16 %v3149
    %v3255 = vunpack.c.l.b16 %v3150
    %v3256 = vunpack.c.h.b16 %v3150
    %v3257 = vunpack.c.l.b16 %v3151
    %v3258 = vunpack.c.h.b16 %v3151
    %v3259 = vunpack.c.l.b16 %v3152
    %v3260 = vunpack.c.h.b16 %v3152
    %v3261 = vunpack.c.l.b16 %v3153
    %v3262 = vunpack.c.h.b16 %v3153
    %v3263 = vunpack.c.l.b16 %v3154
    %v3264 = vunpack.c.h.b16 %v3154
    %v3265 = vunpack.c.l.b16 %v3155
    %v3266 = vunpack.c.h.b16 %v3155
    %v3267 = vunpack.c.l.b16 %v3156
    %v3268 = vunpack.c.h.b16 %v3156
    %v3269 = vunpack.c.l.b16 %v3157
    %v3270 = vunpack.c.h.b16 %v3157
    %v3271 = vunpack.c.l.b16 %v3158
    %v3272 = vunpack.c.h.b16 %v3158
    %v3273 = vunpack.c.l.b16 %v3159
    %v3274 = vunpack.c.h.b16 %v3159
    %v3275 = vunpack.c.l.b16 %v3160
    %v3276 = vunpack.c.h.b16 %v3160
    %v3277 = vunpack.c.l.b16 %v3161
    %v3278 = vunpack.c.h.b16 %v3161
    %v3279 = vunpack.c.l.b16 %v3162
    %v3280 = vunpack.c.h.b16 %v3162
    %v3281 = vunpack.c.l.b16 %v3163
    %v3282 = vunpack.c.h.b16 %v3163
    %v3283 = vunpack.c.l.b16 %v3164
    %v3284 = vunpack.c.h.b16 %v3164
    %v3285 = vunpack.c.l.b16 %v3165
    %v3286 = vunpack.c.h.b16 %v3165
    %v3287 = vunpack.c.l.b16 %v3166
    %v3288 = vunpack.c.h.b16 %v3166
    %v3289 = vunpack.c.l.b16 %v3167
    %v3290 = vunpack.c.h.b16 %v3167
    %v3291 = vunpack.c.l.b16 %v3168
    %v3292 = vunpack.c.h.b16 %v3168
    %v3293 = vunpack.c.l.b16 %v3169
    %v3294 = vunpack.c.h.b16 %v3169
    %v3295 = vunpack.c.l.b16 %v3170
    %v3296 = vunpack.c.h.b16 %v3170
    %v3297 = vunpack.c.l.b16 %v3171
    %v3298 = vunpack.c.h.b16 %v3171
    %v3299 = vunpack.c.l.b16 %v3172
    %v3300 = vunpack.c.h.b16 %v3172
    %v3301 = vpack.c.b16 %v3239, %v3237
    %v3302 = vpack.c.b16 %v3240, %v3238
    %v3303 = vpack.c.b16 %v3243, %v3241
    %v3304 = vpack.c.b16 %v3244, %v3242
    %v3305 = vpack.c.b16 %v3247, %v3245
    %v3306 = vpack.c.b16 %v3248, %v3246
    %v3307 = vpack.c.b16 %v3251, %v3249
    %v3308 = vpack.c.b16 %v3252, %v3250
    %v3309 = vpack.c.b16 %v3255, %v3253
    %v3310 = vpack.c.b16 %v3256, %v3254
    %v3311 = vpack.c.b16 %v3259, %v3257
    %v3312 = vpack.c.b16 %v3260, %v3258
    %v3313 = vpack.c.b16 %v3263, %v3261
    %v3314 = vpack.c.b16 %v3264, %v3262
    %v3315 = vpack.c.b16 %v3267, %v3265
    %v3316 = vpack.c.b16 %v3268, %v3266
    %v3317 = vpack.c.b16 %v3271, %v3269
    %v3318 = vpack.c.b16 %v3272, %v3270
    %v3319 = vpack.c.b16 %v3275, %v3273
    %v3320 = vpack.c.b16 %v3276, %v3274
    %v3321 = vpack.c.b16 %v3279, %v3277
    %v3322 = vpack.c.b16 %v3280, %v3278
    %v3323 = vpack.c.b16 %v3283, %v3281
    %v3324 = vpack.c.b16 %v3284, %v3282
    %v3325 = vpack.c.b16 %v3287, %v3285
    %v3326 = vpack.c.b16 %v3288, %v3286
    %v3327 = vpack.c.b16 %v3291, %v3289
    %v3328 = vpack.c.b16 %v3292, %v3290
    %v3329 = vpack.c.b16 %v3295, %v3293
    %v3330 = vpack.c.b16 %v3296, %v3294
    %v3331 = vpack.c.b16 %v3299, %v3297
    %v3332 = vpack.c.b16 %v3300, %v3298
    %3365 = vmatpush.bf16.msra.mxu0 %v3315
    %3366 = vmatpush.bf16.msra.mxu0 %v3313
    %3367 = vmatpush.bf16.msra.mxu0 %v3311
    %3368 = vmatpush.bf16.msra.mxu0 %v3309
    %3369 = vmatpush.bf16.msra.mxu0 %v3307
    %3370 = vmatpush.bf16.msra.mxu0 %v3305
    %3371 = vmatpush.bf16.msra.mxu0 %v3303
    %3372 = vmatpush.bf16.msra.mxu0 %v3301
    %3373 = vmatmul.bf16.gmra.mxu0 %v3189
    %v3374 = vpop.f32.mrf.mxu0
    %v3375 = vadd.f32 0.0, %v3374
    %v3376 = vpop.f32.mrf.mxu0
    %v3377 = vadd.f32 0.0, %v3376
    %3378 = vmatmul.bf16.gmra.mxu0 %v3191
    %v3379 = vpop.f32.mrf.mxu0
    %v3380 = vadd.f32 0.0, %v3379
    %v3381 = vpop.f32.mrf.mxu0
    %v3382 = vadd.f32 0.0, %v3381
    %3383 = vmatmul.bf16.gmra.mxu0 %v3193
    %v3384 = vpop.f32.mrf.mxu0
    %v3385 = vadd.f32 0.0, %v3384
    %v3386 = vpop.f32.mrf.mxu0
    %v3387 = vadd.f32 0.0, %v3386
    %3388 = vmatmul.bf16.gmra.mxu0 %v3195
    %v3389 = vpop.f32.mrf.mxu0
    %v3390 = vadd.f32 0.0, %v3389
    %v3391 = vpop.f32.mrf.mxu0
    %v3392 = vadd.f32 0.0, %v3391
    %3393 = vdwg.mxu0
    %3394 = vmatpush.bf16.msra.mxu0 %v3331
    %3395 = vmatpush.bf16.msra.mxu0 %v3329
    %3396 = vmatpush.bf16.msra.mxu0 %v3327
    %3397 = vmatpush.bf16.msra.mxu0 %v3325
    %3398 = vmatpush.bf16.msra.mxu0 %v3323
    %3399 = vmatpush.bf16.msra.mxu0 %v3321
    %3400 = vmatpush.bf16.msra.mxu0 %v3319
    %3401 = vmatpush.bf16.msra.mxu0 %v3317
    %3402 = vmatmul.bf16.gmra.mxu0 %v3190
    %v3403 = vpop.f32.mrf.mxu0
    %v3404 = vadd.f32 %v3375, %v3403
    %v3405 = vpop.f32.mrf.mxu0
    %v3406 = vadd.f32 %v3377, %v3405
    %3407 = vmatmul.bf16.gmra.mxu0 %v3192
    %v3408 = vpop.f32.mrf.mxu0
    %v3409 = vadd.f32 %v3380, %v3408
    %v3410 = vpop.f32.mrf.mxu0
    %v3411 = vadd.f32 %v3382, %v3410
    %3412 = vmatmul.bf16.gmra.mxu0 %v3194
    %v3413 = vpop.f32.mrf.mxu0
    %v3414 = vadd.f32 %v3385, %v3413
    %v3415 = vpop.f32.mrf.mxu0
    %v3416 = vadd.f32 %v3387, %v3415
    %3417 = vmatmul.bf16.gmra.mxu0 %v3196
    %v3418 = vpop.f32.mrf.mxu0
    %v3419 = vadd.f32 %v3390, %v3418
    %v3420 = vpop.f32.mrf.mxu0
    %v3421 = vadd.f32 %v3392, %v3420
    %3422 = vdwg.mxu0
    %3423 = vmatpush.bf16.msra.mxu0 %v3316
    %3424 = vmatpush.bf16.msra.mxu0 %v3314
    %3425 = vmatpush.bf16.msra.mxu0 %v3312
    %3426 = vmatpush.bf16.msra.mxu0 %v3310
    %3427 = vmatpush.bf16.msra.mxu0 %v3308
    %3428 = vmatpush.bf16.msra.mxu0 %v3306
    %3429 = vmatpush.bf16.msra.mxu0 %v3304
    %3430 = vmatpush.bf16.msra.mxu0 %v3302
    %3431 = vmatmul.bf16.gmra.mxu0 %v3189
    %v3432 = vpop.f32.mrf.mxu0
    %v3433 = vadd.f32 0.0, %v3432
    %v3434 = vpop.f32.mrf.mxu0
    %v3435 = vadd.f32 0.0, %v3434
    %3436 = vmatmul.bf16.gmra.mxu0 %v3191
    %v3437 = vpop.f32.mrf.mxu0
    %v3438 = vadd.f32 0.0, %v3437
    %v3439 = vpop.f32.mrf.mxu0
    %v3440 = vadd.f32 0.0, %v3439
    %3441 = vmatmul.bf16.gmra.mxu0 %v3193
    %v3442 = vpop.f32.mrf.mxu0
    %v3443 = vadd.f32 0.0, %v3442
    %v3444 = vpop.f32.mrf.mxu0
    %v3445 = vadd.f32 0.0, %v3444
    %3446 = vmatmul.bf16.gmra.mxu0 %v3195
    %v3447 = vpop.f32.mrf.mxu0
    %v3448 = vadd.f32 0.0, %v3447
    %v3449 = vpop.f32.mrf.mxu0
    %v3450 = vadd.f32 0.0, %v3449
    %3451 = vdwg.mxu0
    %3452 = vmatpush.bf16.msra.mxu0 %v3332
    %3453 = vmatpush.bf16.msra.mxu0 %v3330
    %3454 = vmatpush.bf16.msra.mxu0 %v3328
    %3455 = vmatpush.bf16.msra.mxu0 %v3326
    %3456 = vmatpush.bf16.msra.mxu0 %v3324
    %3457 = vmatpush.bf16.msra.mxu0 %v3322
    %3458 = vmatpush.bf16.msra.mxu0 %v3320
    %3459 = vmatpush.bf16.msra.mxu0 %v3318
    %3460 = vmatmul.bf16.gmra.mxu0 %v3190
    %v3461 = vpop.f32.mrf.mxu0
    %v3462 = vadd.f32 %v3433, %v3461
    %v3463 = vpop.f32.mrf.mxu0
    %v3464 = vadd.f32 %v3435, %v3463
    %3465 = vmatmul.bf16.gmra.mxu0 %v3192
    %v3466 = vpop.f32.mrf.mxu0
    %v3467 = vadd.f32 %v3438, %v3466
    %v3468 = vpop.f32.mrf.mxu0
    %v3469 = vadd.f32 %v3440, %v3468
    %3470 = vmatmul.bf16.gmra.mxu0 %v3194
    %v3471 = vpop.f32.mrf.mxu0
    %v3472 = vadd.f32 %v3443, %v3471
    %v3473 = vpop.f32.mrf.mxu0
    %v3474 = vadd.f32 %v3445, %v3473
    %3475 = vmatmul.bf16.gmra.mxu0 %v3196
    %v3476 = vpop.f32.mrf.mxu0
    %v3477 = vadd.f32 %v3448, %v3476
    %v3478 = vpop.f32.mrf.mxu0
    %v3479 = vadd.f32 %v3450, %v3478
    %3480 = vdwg.mxu0
    %v3481 = vadd.f32 %v3124, %v3404
    %v3482 = vadd.f32 %v3125, %v3462
    %v3483 = vadd.f32 %v3126, %v3406
    %v3484 = vadd.f32 %v3127, %v3464
    %v3485 = vadd.f32 %v3128, %v3409
    %v3486 = vadd.f32 %v3129, %v3467
    %v3487 = vadd.f32 %v3130, %v3411
    %v3488 = vadd.f32 %v3131, %v3469
    %v3489 = vadd.f32 %v3132, %v3414
    %v3490 = vadd.f32 %v3133, %v3472
    %v3491 = vadd.f32 %v3134, %v3416
    %v3492 = vadd.f32 %v3135, %v3474
    %v3493 = vadd.f32 %v3136, %v3419
    %v3494 = vadd.f32 %v3137, %v3477
    %v3495 = vadd.f32 %v3138, %v3421
    %v3496 = vadd.f32 %v3139, %v3479
    %v3497 = vmul.f32 %v3481, %v689
    %v3498 = vmul.f32 %v3482, %v690
    %v3499 = vmul.f32 %v3483, %v689
    %v3500 = vmul.f32 %v3484, %v690
    %v3501 = vmul.f32 %v3485, %v689
    %v3502 = vmul.f32 %v3486, %v690
    %v3503 = vmul.f32 %v3487, %v689
    %v3504 = vmul.f32 %v3488, %v690
    %v3505 = vmul.f32 %v3489, %v689
    %v3506 = vmul.f32 %v3490, %v690
    %v3507 = vmul.f32 %v3491, %v689
    %v3508 = vmul.f32 %v3492, %v690
    %v3509 = vmul.f32 %v3493, %v689
    %v3510 = vmul.f32 %v3494, %v690
    %v3511 = vmul.f32 %v3495, %v689
    %v3512 = vmul.f32 %v3496, %v690
    %v3513 = vadd.f32 %v3497, %v710
    %v3514 = vadd.f32 %v3498, %v711
    %v3515 = vadd.f32 %v3499, %v710
    %v3516 = vadd.f32 %v3500, %v711
    %v3517 = vadd.f32 %v3501, %v710
    %v3518 = vadd.f32 %v3502, %v711
    %v3519 = vadd.f32 %v3503, %v710
    %v3520 = vadd.f32 %v3504, %v711
    %v3521 = vadd.f32 %v3505, %v710
    %v3522 = vadd.f32 %v3506, %v711
    %v3523 = vadd.f32 %v3507, %v710
    %v3524 = vadd.f32 %v3508, %v711
    %v3525 = vadd.f32 %v3509, %v710
    %v3526 = vadd.f32 %v3510, %v711
    %v3527 = vadd.f32 %v3511, %v710
    %v3528 = vadd.f32 %v3512, %v711
    %v3529 = vmax.f32 %v3513, 0.0
    %v3530 = vmax.f32 %v3514, 0.0
    %v3531 = vmax.f32 %v3515, 0.0
    %v3532 = vmax.f32 %v3516, 0.0
    %v3533 = vmax.f32 %v3517, 0.0
    %v3534 = vmax.f32 %v3518, 0.0
    %v3535 = vmax.f32 %v3519, 0.0
    %v3536 = vmax.f32 %v3520, 0.0
    %v3537 = vmax.f32 %v3521, 0.0
    %v3538 = vmax.f32 %v3522, 0.0
    %v3539 = vmax.f32 %v3523, 0.0
    %v3540 = vmax.f32 %v3524, 0.0
    %v3541 = vmax.f32 %v3525, 0.0
    %v3542 = vmax.f32 %v3526, 0.0
    %v3543 = vmax.f32 %v3527, 0.0
    %v3544 = vmax.f32 %v3528, 0.0
    %v3545 = vpack.c.bf16 %v3530, %v3529
    %v3546 = vpack.c.bf16 %v3532, %v3531
    %v3547 = vpack.c.bf16 %v3534, %v3533
    %v3548 = vpack.c.bf16 %v3536, %v3535
    %v3549 = vpack.c.bf16 %v3538, %v3537
    %v3550 = vpack.c.bf16 %v3540, %v3539
    %v3551 = vpack.c.bf16 %v3542, %v3541
    %v3552 = vpack.c.bf16 %v3544, %v3543
    %3553 = vst [vmem:[#allocation10 + $0x18] sm:$0xff] %v3545
    %3554 = vst [vmem:[#allocation10 + $0x38] sm:$0xff] %v3546
    %3555 = vst [vmem:[#allocation10 + $0x58] sm:$0xff] %v3547
    %3556 = vst [vmem:[#allocation10 + $0x78] sm:$0xff] %v3548
    %3557 = vst [vmem:[#allocation10 + $0x98] sm:$0xff] %v3549
    %3558 = vst [vmem:[#allocation10 + $0xb8] sm:$0xff] %v3550
    %3559 = vst [vmem:[#allocation10 + $0xd8] sm:$0xff] %v3551
    %3560 = vst [vmem:[#allocation10 + $0xf8] sm:$0xff] %v3552
    // Predicated region
    $region34: #{tpu_custom_call.1} parent=1 // pred_check
      _
    $region35: #{tpu_custom_call.1} parent=1 // pred_check_branch
      %3562 = sbr.rel (0) target = $region37
    $region36: #{tpu_custom_call.1} parent=1 // pred_region
      %3564 = vsyncadd [#allocation4], 0
      %s3565 = sshll.u32 [#allocation10], 4
      %s3566 = int_to_ptr.vmem [resolvable:$true] %s3565
      %s3567 = sshll.u32 %s4, 4
      %s3568 = int_to_ptr.hbm [resolvable:$true] %s3567
      %3573 = dma.vmem_to_hbm [thread:$0]  %s3566, 4096, %s3568, [#allocation4], 512, 512, 32
    $region37: #{tpu_custom_call.1} parent=1 // pred_fallthru
      _
    // Predicated region
    $region38: #{tpu_custom_call.1} parent=1 // pred_check
      _
    $region39: #{tpu_custom_call.1} parent=1 // pred_check_branch
      %3575 = sbr.rel (0) target = $region41
    $region40: #{tpu_custom_call.1} parent=1 // pred_region
      %3577 = dma.done [#allocation4], 4096
    $region41: #{tpu_custom_call.1} parent=1 // pred_fallthru
      _
    %3578 = vsyncpa [#allocation3], 1
    %3579 = vsyncpa [#allocation6], 1
    %3580 = vsyncpa [#allocation9], 1
    %3581 = vsyncpa [#allocation4], 1

</llo_original>
